<compile_context>
chip_gen: v5e
topology: v5e:2x2
jax: 0.10.0
libtpu: 0.0.40
codegen_flags: <defaults>
</compile_context>

<pallas_src>
import functools

import jax
import jax.numpy as jnp
from jax import lax
from jax.experimental import pallas as pl
from jax.experimental.pallas import tpu as pltpu


# ---------------------------------------------------------------------------
# Fused Pallas kernel: 2-layer bidirectional LSTM (bias=False) + fc_out, last pos.
# ---------------------------------------------------------------------------

def _doc_fused_kernel(x_ref, w1x_ref, whh_f1_ref, whh_b1_ref,
                      w2x_ref, whh_f2_ref, wfc_ref, out_ref, *, T, B, H):
    """Fused DOC forward.

    x_ref:      (T*B, I0)   time-major flattened input (row t*B + b)
    w1x_ref:    (I0, 8H)    [W_ih_f1^T | W_ih_b1^T]   (gate order i, f, g, o)
    whh_f1_ref: (H, 4H)     W_hh_f1^T
    whh_b1_ref: (H, 4H)     W_hh_b1^T
    w2x_ref:    (2H, 8H)    [W_ih_f2^T | W_ih_b2^T]
    whh_f2_ref: (H, 4H)     W_hh_f2^T
    wfc_ref:    (2H, L)     W_fc^T
    out_ref:    (B, L)      fc_out(lstm_output[:, -1, :])
    """
    f32 = jnp.float32
    H4 = 4 * H

    def cell(g_in, h, c, whh_t):
        # g_in: (B, 4H) precomputed input-projection gates for this timestep.
        if whh_t is None:          # zero-state first step: h @ Whh^T == 0
            g = g_in
        else:
            g = g_in + jnp.dot(h, whh_t, preferred_element_type=f32)
        i_g = jax.nn.sigmoid(g[:, 0 * H:1 * H])
        f_g = jax.nn.sigmoid(g[:, 1 * H:2 * H])
        g_g = jnp.tanh(g[:, 2 * H:3 * H])
        o_g = jax.nn.sigmoid(g[:, 3 * H:4 * H])
        c_new = f_g * c + i_g * g_g
        h_new = o_g * jnp.tanh(c_new)
        return h_new, c_new

    zeros = jnp.zeros((B, H), f32)

    # ---- Layer 1: hoisted input projection for BOTH directions at once ----------
    # (T*B, I0) @ (I0, 8H): forward gates in lanes [0, 4H), backward in [4H, 8H).
    g1 = jnp.dot(x_ref[...], w1x_ref[...], preferred_element_type=f32)
    g1 = g1.reshape(T, B, 8 * H)

    whh_f1 = whh_f1_ref[...]
    whh_b1 = whh_b1_ref[...]

    h_f, c_f = zeros, zeros
    h_b, c_b = zeros, zeros
    outs_f = [None] * T          # forward hidden, aligned to position t
    outs_b = [None] * T          # backward hidden, aligned to position t
    for t in range(T):           # fully unrolled (T static); directions interleaved
        s = T - 1 - t
        h_f, c_f = cell(g1[t][:, :H4], h_f, c_f, whh_f1)
        h_b, c_b = cell(g1[s][:, H4:], h_b, c_b, whh_b1)
        outs_f[t] = h_f
        outs_b[s] = h_b

    # Layer-1 outputs never leave the kernel: keep them as (T*B, H) values.
    y_f = jnp.concatenate(outs_f, axis=0)    # rows t*B + b
    y_b = jnp.concatenate(outs_b, axis=0)

    # ---- Layer 2: hoisted input projection -------------------------------------
    # Layer-2 input is [y_f | y_b] along features, so
    #   [y_f | y_b] @ W2x == y_f @ W2x[:H] + y_b @ W2x[H:]   (no in-kernel concat).
    w2x = w2x_ref[...]
    g2 = (jnp.dot(y_f, w2x[:H, :], preferred_element_type=f32)
          + jnp.dot(y_b, w2x[H:, :], preferred_element_type=f32))
    g2 = g2.reshape(T, B, 8 * H)

    whh_f2 = whh_f2_ref[...]
    h_f2, c_f2 = zeros, zeros
    for t in range(T):           # forward direction of layer 2, fully unrolled
        h_f2, c_f2 = cell(g2[t][:, :H4], h_f2, c_f2, whh_f2)

    # Backward direction of layer 2: output[:, -1, :] only uses its state at the
    # last position, which is its first step from a zero state -> one cell, no Whh.
    h_b2, _ = cell(g2[T - 1][:, H4:], zeros, zeros, None)

    # ---- fc_out on the last position: [h_f2 | h_b2] @ W_fc^T -------------------
    wfc = wfc_ref[...]
    out_ref[...] = (jnp.dot(h_f2, wfc[:H, :], preferred_element_type=f32)
                    + jnp.dot(h_b2, wfc[H:, :], preferred_element_type=f32))


# ---------------------------------------------------------------------------
# Wrapper
# ---------------------------------------------------------------------------

def _doc_fused_call(x_tm, prep, *, B, T):
    """x_tm: (T*B, I0) float32 time-major flattened embedded input."""
    I0 = x_tm.shape[1]
    H = prep["whh_f1_t"].shape[0]
    latent = prep["wfc_t"].shape[1]

    kernel = functools.partial(_doc_fused_kernel, T=T, B=B, H=H)
    return pl.pallas_call(
        kernel,
        out_shape=jax.ShapeDtypeStruct((B, latent), jnp.float32),
        in_specs=[
            pl.BlockSpec((T * B, I0), lambda: (0, 0)),
            pl.BlockSpec((I0, 8 * H), lambda: (0, 0)),
            pl.BlockSpec((H, 4 * H), lambda: (0, 0)),
            pl.BlockSpec((H, 4 * H), lambda: (0, 0)),
            pl.BlockSpec((2 * H, 8 * H), lambda: (0, 0)),
            pl.BlockSpec((H, 4 * H), lambda: (0, 0)),
            pl.BlockSpec((2 * H, latent), lambda: (0, 0)),
        ],
        out_specs=pl.BlockSpec((B, latent), lambda: (0, 0)),
        compiler_params=pltpu.CompilerParams(vmem_limit_bytes=32 * 1024 * 1024),
    )(x_tm, prep["w1x"], prep["whh_f1_t"], prep["whh_b1_t"],
      prep["w2x"], prep["whh_f2_t"], prep["wfc_t"])


def doc_forward(prep, x_cont, x_cat):
    """x_cont: (B, T, num_cont) float32 ; x_cat: (B, T, 2) int.  Returns (B, latent)."""
    B, T, _ = x_cont.shape
    x_dow = x_cat[:, :, 0].astype(jnp.int32)
    x_holiday = x_cat[:, :, 1].astype(jnp.int32)

    dow_embedded = prep["dow_embed"][x_dow]            # (B, T, E)  tiny gather; glue
    holiday_embedded = prep["holiday_embed"][x_holiday]

    x = jnp.concatenate([x_cont, dow_embedded, holiday_embedded],
                        axis=2).astype(jnp.float32)    # (B, T, I0)
    # layout: kernel is time-major; flatten to rows t*B + b once, outside the kernel.
    x_tm = jnp.transpose(x, (1, 0, 2)).reshape(T * B, x.shape[-1])
    return _doc_fused_call(x_tm, prep, B=B, T=T)


def prepare_params(params):
    """One-time (outside jit) fusion/transposition of weights into kernel layout."""
    assert len(params["lstm"]) == 2, "fused kernel is specialized to num_layers=2"
    w_ih_f1, w_hh_f1, w_ih_b1, w_hh_b1 = params["lstm"][0]
    w_ih_f2, w_hh_f2, w_ih_b2, w_hh_b2 = params["lstm"][1]
    prep = {
        "dow_embed": params["dow_embed"],
        "holiday_embed": params["holiday_embed"],
        "w1x": jnp.concatenate([w_ih_f1.T, w_ih_b1.T], axis=1),   # (I0, 8H)
        "whh_f1_t": w_hh_f1.T,                                    # (H, 4H)
        "whh_b1_t": w_hh_b1.T,                                    # (H, 4H)
        "w2x": jnp.concatenate([w_ih_f2.T, w_ih_b2.T], axis=1),   # (2H, 8H)
        "whh_f2_t": w_hh_f2.T,                                    # (H, 4H)
        # w_hh_b2 is unused: layer-2 backward state at the last position is its
        # first step from a zero state, so h @ W_hh_b2^T contributes nothing.
        "wfc_t": params["fc_out"].T,                              # (2H, latent)
    }
    return jax.tree_util.tree_map(lambda a: a.astype(jnp.float32), prep)


# ---------------------------------------------------------------------------
# Pure-JAX reference (general bidirectional LSTM, for correctness check)
# ---------------------------------------------------------------------------

def _lstm_dir_ref(x_tm, w_ih, w_hh):
    H = w_hh.shape[1]

    def step(carry, x_t):
        h, c = carry
        gates = x_t @ w_ih.T + h @ w_hh.T
        i_g = jax.nn.sigmoid(gates[:, 0 * H:1 * H])
        f_g = jax.nn.sigmoid(gates[:, 1 * H:2 * H])
        g_g = jnp.tanh(gates[:, 2 * H:3 * H])
        o_g = jax.nn.sigmoid(gates[:, 3 * H:4 * H])
        c = f_g * c + i_g * g_g
        h = o_g * jnp.tanh(c)
        return (h, c), h

    B = x_tm.shape[1]
    h0 = jnp.zeros((B, H), jnp.float32)
    c0 = jnp.zeros((B, H), jnp.float32)
    _, hs = lax.scan(step, (h0, c0), x_tm)
    return hs


def doc_forward_ref(params, x_cont, x_cat):
    x_dow = x_cat[:, :, 0].astype(jnp.int32)
    x_holiday = x_cat[:, :, 1].astype(jnp.int32)
    x = jnp.concatenate([x_cont,
                         params["dow_embed"][x_dow],
                         params["holiday_embed"][x_holiday]], axis=2)
    seq = jnp.transpose(x, (1, 0, 2)).astype(jnp.float32)
    for (w_ih_f, w_hh_f, w_ih_b, w_hh_b) in params["lstm"]:
        h_fwd = _lstm_dir_ref(seq, w_ih_f, w_hh_f)
        h_bwd = _lstm_dir_ref(seq[::-1], w_ih_b, w_hh_b)[::-1]
        seq = jnp.concatenate([h_fwd, h_bwd], axis=-1)
    return seq[-1] @ params["fc_out"].T


# ---------------------------------------------------------------------------
# Deterministic parameter construction (matches nn.Module __init__ shapes)
# ---------------------------------------------------------------------------

def make_params(key, num_cont_var=4, embedding_dim=2, hidden_size=32,
                latent_dim=32, num_layers=2, bidirectional=True):
    assert bidirectional
    H = hidden_size
    keys = iter(jax.random.split(key, 4 + 4 * num_layers))
    k = 1.0 / jnp.sqrt(H)

    params = {
        "dow_embed": jax.random.normal(next(keys), (7, embedding_dim), jnp.float32),
        "holiday_embed": jax.random.normal(next(keys), (2, embedding_dim), jnp.float32),
    }

    lstm = []
    in_size = 2 * embedding_dim + num_cont_var
    for layer in range(num_layers):
        layer_in = in_size if layer == 0 else 2 * H
        w_ih_f = jax.random.uniform(next(keys), (4 * H, layer_in), jnp.float32, -k, k)
        w_hh_f = jax.random.uniform(next(keys), (4 * H, H), jnp.float32, -k, k)
        w_ih_b = jax.random.uniform(next(keys), (4 * H, layer_in), jnp.float32, -k, k)
        w_hh_b = jax.random.uniform(next(keys), (4 * H, H), jnp.float32, -k, k)
        lstm.append((w_ih_f, w_hh_f, w_ih_b, w_hh_b))
    params["lstm"] = lstm

    params["fc_out"] = jax.random.uniform(next(keys), (latent_dim, 2 * H),
                                          jnp.float32, -k, k)
    return params


# ---------------------------------------------------------------------------
# Main
# ---------------------------------------------------------------------------

if __name__ == "__main__":
    B, T = 2, 8
    num_cont_var, embedding_dim = 4, 2
    hidden_size, latent_dim, num_layers = 32, 32, 2

    key = jax.random.PRNGKey(0)
    k_cont, k_dow, k_hol, k_params = jax.random.split(key, 4)

    x_cont = jax.random.normal(k_cont, (B, T, num_cont_var), jnp.float32)
    x_dow = jax.random.randint(k_dow, (B, T, 1), 0, 7, jnp.int32)
    x_hol = jax.random.randint(k_hol, (B, T, 1), 0, 2, jnp.int32)
    x_cat = jnp.concatenate([x_dow, x_hol], axis=2)           # (B, T, 2)

    params = make_params(k_params, num_cont_var, embedding_dim,
                         hidden_size, latent_dim, num_layers, True)
    prep = prepare_params(params)     # one-time weight fusion/transpose (outside jit)

    fwd = jax.jit(doc_forward)
    out = jax.block_until_ready(fwd(prep, x_cont, x_cat))
    assert out.shape == (B, latent_dim), out.shape

    ref = doc_forward_ref(params, x_cont, x_cat)
    assert jnp.allclose(out, ref, atol=2e-5, rtol=2e-5), \
        f"max abs diff {jnp.max(jnp.abs(out - ref))}"

    print("KERNEL_OK")
</pallas_src>

<mosaic_0001>
module attributes {stable_mosaic.version = 11 : i64} {
  func.func @_doc_fused_kernel(%arg0: memref<16x8xf32, #tpu.memory_space<vmem>>, %arg1: memref<8x256xf32, #tpu.memory_space<vmem>>, %arg2: memref<32x128xf32, #tpu.memory_space<vmem>>, %arg3: memref<32x128xf32, #tpu.memory_space<vmem>>, %arg4: memref<64x256xf32, #tpu.memory_space<vmem>>, %arg5: memref<32x128xf32, #tpu.memory_space<vmem>>, %arg6: memref<64x32xf32, #tpu.memory_space<vmem>>, %arg7: memref<2x32xf32, #tpu.memory_space<vmem>>) attributes {dimension_semantics = [], scalar_prefetch = 0 : i64, scratch_operands = 0 : i64, tpu.core_type = #tpu.core_type<tc>} {
    %cst = arith.constant 0.000000e+00 : f32
    %0 = vector.broadcast %cst : f32 to vector<2x32xf32>
    %c0 = arith.constant 0 : index
    %c0_0 = arith.constant 0 : index
    %1 = vector.load %arg0[%c0, %c0_0] : memref<16x8xf32, #tpu.memory_space<vmem>>, vector<16x8xf32>
    %c0_1 = arith.constant 0 : index
    %c0_2 = arith.constant 0 : index
    %2 = vector.load %arg1[%c0_1, %c0_2] : memref<8x256xf32, #tpu.memory_space<vmem>>, vector<8x256xf32>
    %cst_3 = arith.constant dense<0.000000e+00> : vector<16x256xf32>
    %3 = tpu.matmul %1, %2, %cst_3 {dimension_numbers = #tpu.dot_dimension_numbers<[1], [0], [0], [1], [0, 0, 1, 1], [], []>} : vector<16x8xf32>, vector<8x256xf32>, vector<16x256xf32> -> vector<16x256xf32>
    %4 = vector.shape_cast %3 : vector<16x256xf32> to vector<8x2x256xf32>
    %c0_4 = arith.constant 0 : index
    %c0_5 = arith.constant 0 : index
    %5 = vector.load %arg2[%c0_4, %c0_5] : memref<32x128xf32, #tpu.memory_space<vmem>>, vector<32x128xf32>
    %c0_6 = arith.constant 0 : index
    %c0_7 = arith.constant 0 : index
    %6 = vector.load %arg3[%c0_6, %c0_7] : memref<32x128xf32, #tpu.memory_space<vmem>>, vector<32x128xf32>
    %7 = vector.extract_strided_slice %4 {offsets = [0, 0, 0], sizes = [1, 2, 256], strides = [1, 1, 1]} : vector<8x2x256xf32> to vector<1x2x256xf32>
    %8 = vector.shape_cast %7 : vector<1x2x256xf32> to vector<2x256xf32>
    %9 = vector.extract_strided_slice %8 {offsets = [0, 0], sizes = [2, 128], strides = [1, 1]} : vector<2x256xf32> to vector<2x128xf32>
    %cst_8 = arith.constant dense<0.000000e+00> : vector<2x128xf32>
    %10 = tpu.matmul %0, %5, %cst_8 {dimension_numbers = #tpu.dot_dimension_numbers<[1], [0], [0], [1], [0, 0, 1, 1], [], []>} : vector<2x32xf32>, vector<32x128xf32>, vector<2x128xf32> -> vector<2x128xf32>
    %11 = arith.addf %9, %10 : vector<2x128xf32>
    %12 = vector.extract_strided_slice %11 {offsets = [0, 0], sizes = [2, 32], strides = [1, 1]} : vector<2x128xf32> to vector<2x32xf32>
    %13 = arith.negf %12 : vector<2x32xf32>
    %14 = math.exp %13 : vector<2x32xf32>
    %cst_9 = arith.constant 1.000000e+00 : f32
    %15 = vector.broadcast %cst_9 : f32 to vector<2x32xf32>
    %16 = arith.addf %15, %14 : vector<2x32xf32>
    %17 = arith.divf %15, %16 : vector<2x32xf32>
    %18 = vector.extract_strided_slice %11 {offsets = [0, 32], sizes = [2, 32], strides = [1, 1]} : vector<2x128xf32> to vector<2x32xf32>
    %19 = arith.negf %18 : vector<2x32xf32>
    %20 = math.exp %19 : vector<2x32xf32>
    %cst_10 = arith.constant 1.000000e+00 : f32
    %21 = vector.broadcast %cst_10 : f32 to vector<2x32xf32>
    %22 = arith.addf %21, %20 : vector<2x32xf32>
    %23 = arith.divf %21, %22 : vector<2x32xf32>
    %24 = vector.extract_strided_slice %11 {offsets = [0, 64], sizes = [2, 32], strides = [1, 1]} : vector<2x128xf32> to vector<2x32xf32>
    %25 = math.tanh %24 : vector<2x32xf32>
    %26 = vector.extract_strided_slice %11 {offsets = [0, 96], sizes = [2, 32], strides = [1, 1]} : vector<2x128xf32> to vector<2x32xf32>
    %27 = arith.negf %26 : vector<2x32xf32>
    %28 = math.exp %27 : vector<2x32xf32>
    %cst_11 = arith.constant 1.000000e+00 : f32
    %29 = vector.broadcast %cst_11 : f32 to vector<2x32xf32>
    %30 = arith.addf %29, %28 : vector<2x32xf32>
    %31 = arith.divf %29, %30 : vector<2x32xf32>
    %32 = arith.mulf %23, %0 : vector<2x32xf32>
    %33 = arith.mulf %17, %25 : vector<2x32xf32>
    %34 = arith.addf %32, %33 : vector<2x32xf32>
    %35 = math.tanh %34 : vector<2x32xf32>
    %36 = arith.mulf %31, %35 : vector<2x32xf32>
    %37 = vector.extract_strided_slice %4 {offsets = [7, 0, 0], sizes = [1, 2, 256], strides = [1, 1, 1]} : vector<8x2x256xf32> to vector<1x2x256xf32>
    %38 = vector.shape_cast %37 : vector<1x2x256xf32> to vector<2x256xf32>
    %39 = vector.extract_strided_slice %38 {offsets = [0, 128], sizes = [2, 128], strides = [1, 1]} : vector<2x256xf32> to vector<2x128xf32>
    %cst_12 = arith.constant dense<0.000000e+00> : vector<2x128xf32>
    %40 = tpu.matmul %0, %6, %cst_12 {dimension_numbers = #tpu.dot_dimension_numbers<[1], [0], [0], [1], [0, 0, 1, 1], [], []>} : vector<2x32xf32>, vector<32x128xf32>, vector<2x128xf32> -> vector<2x128xf32>
    %41 = arith.addf %39, %40 : vector<2x128xf32>
    %42 = vector.extract_strided_slice %41 {offsets = [0, 0], sizes = [2, 32], strides = [1, 1]} : vector<2x128xf32> to vector<2x32xf32>
    %43 = arith.negf %42 : vector<2x32xf32>
    %44 = math.exp %43 : vector<2x32xf32>
    %cst_13 = arith.constant 1.000000e+00 : f32
    %45 = vector.broadcast %cst_13 : f32 to vector<2x32xf32>
    %46 = arith.addf %45, %44 : vector<2x32xf32>
    %47 = arith.divf %45, %46 : vector<2x32xf32>
    %48 = vector.extract_strided_slice %41 {offsets = [0, 32], sizes = [2, 32], strides = [1, 1]} : vector<2x128xf32> to vector<2x32xf32>
    %49 = arith.negf %48 : vector<2x32xf32>
    %50 = math.exp %49 : vector<2x32xf32>
    %cst_14 = arith.constant 1.000000e+00 : f32
    %51 = vector.broadcast %cst_14 : f32 to vector<2x32xf32>
    %52 = arith.addf %51, %50 : vector<2x32xf32>
    %53 = arith.divf %51, %52 : vector<2x32xf32>
    %54 = vector.extract_strided_slice %41 {offsets = [0, 64], sizes = [2, 32], strides = [1, 1]} : vector<2x128xf32> to vector<2x32xf32>
    %55 = math.tanh %54 : vector<2x32xf32>
    %56 = vector.extract_strided_slice %41 {offsets = [0, 96], sizes = [2, 32], strides = [1, 1]} : vector<2x128xf32> to vector<2x32xf32>
    %57 = arith.negf %56 : vector<2x32xf32>
    %58 = math.exp %57 : vector<2x32xf32>
    %cst_15 = arith.constant 1.000000e+00 : f32
    %59 = vector.broadcast %cst_15 : f32 to vector<2x32xf32>
    %60 = arith.addf %59, %58 : vector<2x32xf32>
    %61 = arith.divf %59, %60 : vector<2x32xf32>
    %62 = arith.mulf %53, %0 : vector<2x32xf32>
    %63 = arith.mulf %47, %55 : vector<2x32xf32>
    %64 = arith.addf %62, %63 : vector<2x32xf32>
    %65 = math.tanh %64 : vector<2x32xf32>
    %66 = arith.mulf %61, %65 : vector<2x32xf32>
    %67 = vector.extract_strided_slice %4 {offsets = [1, 0, 0], sizes = [1, 2, 256], strides = [1, 1, 1]} : vector<8x2x256xf32> to vector<1x2x256xf32>
    %68 = vector.shape_cast %67 : vector<1x2x256xf32> to vector<2x256xf32>
    %69 = vector.extract_strided_slice %68 {offsets = [0, 0], sizes = [2, 128], strides = [1, 1]} : vector<2x256xf32> to vector<2x128xf32>
    %cst_16 = arith.constant dense<0.000000e+00> : vector<2x128xf32>
    %70 = tpu.matmul %36, %5, %cst_16 {dimension_numbers = #tpu.dot_dimension_numbers<[1], [0], [0], [1], [0, 0, 1, 1], [], []>} : vector<2x32xf32>, vector<32x128xf32>, vector<2x128xf32> -> vector<2x128xf32>
    %71 = arith.addf %69, %70 : vector<2x128xf32>
    %72 = vector.extract_strided_slice %71 {offsets = [0, 0], sizes = [2, 32], strides = [1, 1]} : vector<2x128xf32> to vector<2x32xf32>
    %73 = arith.negf %72 : vector<2x32xf32>
    %74 = math.exp %73 : vector<2x32xf32>
    %cst_17 = arith.constant 1.000000e+00 : f32
    %75 = vector.broadcast %cst_17 : f32 to vector<2x32xf32>
    %76 = arith.addf %75, %74 : vector<2x32xf32>
    %77 = arith.divf %75, %76 : vector<2x32xf32>
    %78 = vector.extract_strided_slice %71 {offsets = [0, 32], sizes = [2, 32], strides = [1, 1]} : vector<2x128xf32> to vector<2x32xf32>
    %79 = arith.negf %78 : vector<2x32xf32>
    %80 = math.exp %79 : vector<2x32xf32>
    %cst_18 = arith.constant 1.000000e+00 : f32
    %81 = vector.broadcast %cst_18 : f32 to vector<2x32xf32>
    %82 = arith.addf %81, %80 : vector<2x32xf32>
    %83 = arith.divf %81, %82 : vector<2x32xf32>
    %84 = vector.extract_strided_slice %71 {offsets = [0, 64], sizes = [2, 32], strides = [1, 1]} : vector<2x128xf32> to vector<2x32xf32>
    %85 = math.tanh %84 : vector<2x32xf32>
    %86 = vector.extract_strided_slice %71 {offsets = [0, 96], sizes = [2, 32], strides = [1, 1]} : vector<2x128xf32> to vector<2x32xf32>
    %87 = arith.negf %86 : vector<2x32xf32>
    %88 = math.exp %87 : vector<2x32xf32>
    %cst_19 = arith.constant 1.000000e+00 : f32
    %89 = vector.broadcast %cst_19 : f32 to vector<2x32xf32>
    %90 = arith.addf %89, %88 : vector<2x32xf32>
    %91 = arith.divf %89, %90 : vector<2x32xf32>
    %92 = arith.mulf %83, %34 : vector<2x32xf32>
    %93 = arith.mulf %77, %85 : vector<2x32xf32>
    %94 = arith.addf %92, %93 : vector<2x32xf32>
    %95 = math.tanh %94 : vector<2x32xf32>
    %96 = arith.mulf %91, %95 : vector<2x32xf32>
    %97 = vector.extract_strided_slice %4 {offsets = [6, 0, 0], sizes = [1, 2, 256], strides = [1, 1, 1]} : vector<8x2x256xf32> to vector<1x2x256xf32>
    %98 = vector.shape_cast %97 : vector<1x2x256xf32> to vector<2x256xf32>
    %99 = vector.extract_strided_slice %98 {offsets = [0, 128], sizes = [2, 128], strides = [1, 1]} : vector<2x256xf32> to vector<2x128xf32>
    %cst_20 = arith.constant dense<0.000000e+00> : vector<2x128xf32>
    %100 = tpu.matmul %66, %6, %cst_20 {dimension_numbers = #tpu.dot_dimension_numbers<[1], [0], [0], [1], [0, 0, 1, 1], [], []>} : vector<2x32xf32>, vector<32x128xf32>, vector<2x128xf32> -> vector<2x128xf32>
    %101 = arith.addf %99, %100 : vector<2x128xf32>
    %102 = vector.extract_strided_slice %101 {offsets = [0, 0], sizes = [2, 32], strides = [1, 1]} : vector<2x128xf32> to vector<2x32xf32>
    %103 = arith.negf %102 : vector<2x32xf32>
    %104 = math.exp %103 : vector<2x32xf32>
    %cst_21 = arith.constant 1.000000e+00 : f32
    %105 = vector.broadcast %cst_21 : f32 to vector<2x32xf32>
    %106 = arith.addf %105, %104 : vector<2x32xf32>
    %107 = arith.divf %105, %106 : vector<2x32xf32>
    %108 = vector.extract_strided_slice %101 {offsets = [0, 32], sizes = [2, 32], strides = [1, 1]} : vector<2x128xf32> to vector<2x32xf32>
    %109 = arith.negf %108 : vector<2x32xf32>
    %110 = math.exp %109 : vector<2x32xf32>
    %cst_22 = arith.constant 1.000000e+00 : f32
    %111 = vector.broadcast %cst_22 : f32 to vector<2x32xf32>
    %112 = arith.addf %111, %110 : vector<2x32xf32>
    %113 = arith.divf %111, %112 : vector<2x32xf32>
    %114 = vector.extract_strided_slice %101 {offsets = [0, 64], sizes = [2, 32], strides = [1, 1]} : vector<2x128xf32> to vector<2x32xf32>
    %115 = math.tanh %114 : vector<2x32xf32>
    %116 = vector.extract_strided_slice %101 {offsets = [0, 96], sizes = [2, 32], strides = [1, 1]} : vector<2x128xf32> to vector<2x32xf32>
    %117 = arith.negf %116 : vector<2x32xf32>
    %118 = math.exp %117 : vector<2x32xf32>
    %cst_23 = arith.constant 1.000000e+00 : f32
    %119 = vector.broadcast %cst_23 : f32 to vector<2x32xf32>
    %120 = arith.addf %119, %118 : vector<2x32xf32>
    %121 = arith.divf %119, %120 : vector<2x32xf32>
    %122 = arith.mulf %113, %64 : vector<2x32xf32>
    %123 = arith.mulf %107, %115 : vector<2x32xf32>
    %124 = arith.addf %122, %123 : vector<2x32xf32>
    %125 = math.tanh %124 : vector<2x32xf32>
    %126 = arith.mulf %121, %125 : vector<2x32xf32>
    %127 = vector.extract_strided_slice %4 {offsets = [2, 0, 0], sizes = [1, 2, 256], strides = [1, 1, 1]} : vector<8x2x256xf32> to vector<1x2x256xf32>
    %128 = vector.shape_cast %127 : vector<1x2x256xf32> to vector<2x256xf32>
    %129 = vector.extract_strided_slice %128 {offsets = [0, 0], sizes = [2, 128], strides = [1, 1]} : vector<2x256xf32> to vector<2x128xf32>
    %cst_24 = arith.constant dense<0.000000e+00> : vector<2x128xf32>
    %130 = tpu.matmul %96, %5, %cst_24 {dimension_numbers = #tpu.dot_dimension_numbers<[1], [0], [0], [1], [0, 0, 1, 1], [], []>} : vector<2x32xf32>, vector<32x128xf32>, vector<2x128xf32> -> vector<2x128xf32>
    %131 = arith.addf %129, %130 : vector<2x128xf32>
    %132 = vector.extract_strided_slice %131 {offsets = [0, 0], sizes = [2, 32], strides = [1, 1]} : vector<2x128xf32> to vector<2x32xf32>
    %133 = arith.negf %132 : vector<2x32xf32>
    %134 = math.exp %133 : vector<2x32xf32>
    %cst_25 = arith.constant 1.000000e+00 : f32
    %135 = vector.broadcast %cst_25 : f32 to vector<2x32xf32>
    %136 = arith.addf %135, %134 : vector<2x32xf32>
    %137 = arith.divf %135, %136 : vector<2x32xf32>
    %138 = vector.extract_strided_slice %131 {offsets = [0, 32], sizes = [2, 32], strides = [1, 1]} : vector<2x128xf32> to vector<2x32xf32>
    %139 = arith.negf %138 : vector<2x32xf32>
    %140 = math.exp %139 : vector<2x32xf32>
    %cst_26 = arith.constant 1.000000e+00 : f32
    %141 = vector.broadcast %cst_26 : f32 to vector<2x32xf32>
    %142 = arith.addf %141, %140 : vector<2x32xf32>
    %143 = arith.divf %141, %142 : vector<2x32xf32>
    %144 = vector.extract_strided_slice %131 {offsets = [0, 64], sizes = [2, 32], strides = [1, 1]} : vector<2x128xf32> to vector<2x32xf32>
    %145 = math.tanh %144 : vector<2x32xf32>
    %146 = vector.extract_strided_slice %131 {offsets = [0, 96], sizes = [2, 32], strides = [1, 1]} : vector<2x128xf32> to vector<2x32xf32>
    %147 = arith.negf %146 : vector<2x32xf32>
    %148 = math.exp %147 : vector<2x32xf32>
    %cst_27 = arith.constant 1.000000e+00 : f32
    %149 = vector.broadcast %cst_27 : f32 to vector<2x32xf32>
    %150 = arith.addf %149, %148 : vector<2x32xf32>
    %151 = arith.divf %149, %150 : vector<2x32xf32>
    %152 = arith.mulf %143, %94 : vector<2x32xf32>
    %153 = arith.mulf %137, %145 : vector<2x32xf32>
    %154 = arith.addf %152, %153 : vector<2x32xf32>
    %155 = math.tanh %154 : vector<2x32xf32>
    %156 = arith.mulf %151, %155 : vector<2x32xf32>
    %157 = vector.extract_strided_slice %4 {offsets = [5, 0, 0], sizes = [1, 2, 256], strides = [1, 1, 1]} : vector<8x2x256xf32> to vector<1x2x256xf32>
    %158 = vector.shape_cast %157 : vector<1x2x256xf32> to vector<2x256xf32>
    %159 = vector.extract_strided_slice %158 {offsets = [0, 128], sizes = [2, 128], strides = [1, 1]} : vector<2x256xf32> to vector<2x128xf32>
    %cst_28 = arith.constant dense<0.000000e+00> : vector<2x128xf32>
    %160 = tpu.matmul %126, %6, %cst_28 {dimension_numbers = #tpu.dot_dimension_numbers<[1], [0], [0], [1], [0, 0, 1, 1], [], []>} : vector<2x32xf32>, vector<32x128xf32>, vector<2x128xf32> -> vector<2x128xf32>
    %161 = arith.addf %159, %160 : vector<2x128xf32>
    %162 = vector.extract_strided_slice %161 {offsets = [0, 0], sizes = [2, 32], strides = [1, 1]} : vector<2x128xf32> to vector<2x32xf32>
    %163 = arith.negf %162 : vector<2x32xf32>
    %164 = math.exp %163 : vector<2x32xf32>
    %cst_29 = arith.constant 1.000000e+00 : f32
    %165 = vector.broadcast %cst_29 : f32 to vector<2x32xf32>
    %166 = arith.addf %165, %164 : vector<2x32xf32>
    %167 = arith.divf %165, %166 : vector<2x32xf32>
    %168 = vector.extract_strided_slice %161 {offsets = [0, 32], sizes = [2, 32], strides = [1, 1]} : vector<2x128xf32> to vector<2x32xf32>
    %169 = arith.negf %168 : vector<2x32xf32>
    %170 = math.exp %169 : vector<2x32xf32>
    %cst_30 = arith.constant 1.000000e+00 : f32
    %171 = vector.broadcast %cst_30 : f32 to vector<2x32xf32>
    %172 = arith.addf %171, %170 : vector<2x32xf32>
    %173 = arith.divf %171, %172 : vector<2x32xf32>
    %174 = vector.extract_strided_slice %161 {offsets = [0, 64], sizes = [2, 32], strides = [1, 1]} : vector<2x128xf32> to vector<2x32xf32>
    %175 = math.tanh %174 : vector<2x32xf32>
    %176 = vector.extract_strided_slice %161 {offsets = [0, 96], sizes = [2, 32], strides = [1, 1]} : vector<2x128xf32> to vector<2x32xf32>
    %177 = arith.negf %176 : vector<2x32xf32>
    %178 = math.exp %177 : vector<2x32xf32>
    %cst_31 = arith.constant 1.000000e+00 : f32
    %179 = vector.broadcast %cst_31 : f32 to vector<2x32xf32>
    %180 = arith.addf %179, %178 : vector<2x32xf32>
    %181 = arith.divf %179, %180 : vector<2x32xf32>
    %182 = arith.mulf %173, %124 : vector<2x32xf32>
    %183 = arith.mulf %167, %175 : vector<2x32xf32>
    %184 = arith.addf %182, %183 : vector<2x32xf32>
    %185 = math.tanh %184 : vector<2x32xf32>
    %186 = arith.mulf %181, %185 : vector<2x32xf32>
    %187 = vector.extract_strided_slice %4 {offsets = [3, 0, 0], sizes = [1, 2, 256], strides = [1, 1, 1]} : vector<8x2x256xf32> to vector<1x2x256xf32>
    %188 = vector.shape_cast %187 : vector<1x2x256xf32> to vector<2x256xf32>
    %189 = vector.extract_strided_slice %188 {offsets = [0, 0], sizes = [2, 128], strides = [1, 1]} : vector<2x256xf32> to vector<2x128xf32>
    %cst_32 = arith.constant dense<0.000000e+00> : vector<2x128xf32>
    %190 = tpu.matmul %156, %5, %cst_32 {dimension_numbers = #tpu.dot_dimension_numbers<[1], [0], [0], [1], [0, 0, 1, 1], [], []>} : vector<2x32xf32>, vector<32x128xf32>, vector<2x128xf32> -> vector<2x128xf32>
    %191 = arith.addf %189, %190 : vector<2x128xf32>
    %192 = vector.extract_strided_slice %191 {offsets = [0, 0], sizes = [2, 32], strides = [1, 1]} : vector<2x128xf32> to vector<2x32xf32>
    %193 = arith.negf %192 : vector<2x32xf32>
    %194 = math.exp %193 : vector<2x32xf32>
    %cst_33 = arith.constant 1.000000e+00 : f32
    %195 = vector.broadcast %cst_33 : f32 to vector<2x32xf32>
    %196 = arith.addf %195, %194 : vector<2x32xf32>
    %197 = arith.divf %195, %196 : vector<2x32xf32>
    %198 = vector.extract_strided_slice %191 {offsets = [0, 32], sizes = [2, 32], strides = [1, 1]} : vector<2x128xf32> to vector<2x32xf32>
    %199 = arith.negf %198 : vector<2x32xf32>
    %200 = math.exp %199 : vector<2x32xf32>
    %cst_34 = arith.constant 1.000000e+00 : f32
    %201 = vector.broadcast %cst_34 : f32 to vector<2x32xf32>
    %202 = arith.addf %201, %200 : vector<2x32xf32>
    %203 = arith.divf %201, %202 : vector<2x32xf32>
    %204 = vector.extract_strided_slice %191 {offsets = [0, 64], sizes = [2, 32], strides = [1, 1]} : vector<2x128xf32> to vector<2x32xf32>
    %205 = math.tanh %204 : vector<2x32xf32>
    %206 = vector.extract_strided_slice %191 {offsets = [0, 96], sizes = [2, 32], strides = [1, 1]} : vector<2x128xf32> to vector<2x32xf32>
    %207 = arith.negf %206 : vector<2x32xf32>
    %208 = math.exp %207 : vector<2x32xf32>
    %cst_35 = arith.constant 1.000000e+00 : f32
    %209 = vector.broadcast %cst_35 : f32 to vector<2x32xf32>
    %210 = arith.addf %209, %208 : vector<2x32xf32>
    %211 = arith.divf %209, %210 : vector<2x32xf32>
    %212 = arith.mulf %203, %154 : vector<2x32xf32>
    %213 = arith.mulf %197, %205 : vector<2x32xf32>
    %214 = arith.addf %212, %213 : vector<2x32xf32>
    %215 = math.tanh %214 : vector<2x32xf32>
    %216 = arith.mulf %211, %215 : vector<2x32xf32>
    %217 = vector.extract_strided_slice %4 {offsets = [4, 0, 0], sizes = [1, 2, 256], strides = [1, 1, 1]} : vector<8x2x256xf32> to vector<1x2x256xf32>
    %218 = vector.shape_cast %217 : vector<1x2x256xf32> to vector<2x256xf32>
    %219 = vector.extract_strided_slice %218 {offsets = [0, 128], sizes = [2, 128], strides = [1, 1]} : vector<2x256xf32> to vector<2x128xf32>
    %cst_36 = arith.constant dense<0.000000e+00> : vector<2x128xf32>
    %220 = tpu.matmul %186, %6, %cst_36 {dimension_numbers = #tpu.dot_dimension_numbers<[1], [0], [0], [1], [0, 0, 1, 1], [], []>} : vector<2x32xf32>, vector<32x128xf32>, vector<2x128xf32> -> vector<2x128xf32>
    %221 = arith.addf %219, %220 : vector<2x128xf32>
    %222 = vector.extract_strided_slice %221 {offsets = [0, 0], sizes = [2, 32], strides = [1, 1]} : vector<2x128xf32> to vector<2x32xf32>
    %223 = arith.negf %222 : vector<2x32xf32>
    %224 = math.exp %223 : vector<2x32xf32>
    %cst_37 = arith.constant 1.000000e+00 : f32
    %225 = vector.broadcast %cst_37 : f32 to vector<2x32xf32>
    %226 = arith.addf %225, %224 : vector<2x32xf32>
    %227 = arith.divf %225, %226 : vector<2x32xf32>
    %228 = vector.extract_strided_slice %221 {offsets = [0, 32], sizes = [2, 32], strides = [1, 1]} : vector<2x128xf32> to vector<2x32xf32>
    %229 = arith.negf %228 : vector<2x32xf32>
    %230 = math.exp %229 : vector<2x32xf32>
    %cst_38 = arith.constant 1.000000e+00 : f32
    %231 = vector.broadcast %cst_38 : f32 to vector<2x32xf32>
    %232 = arith.addf %231, %230 : vector<2x32xf32>
    %233 = arith.divf %231, %232 : vector<2x32xf32>
    %234 = vector.extract_strided_slice %221 {offsets = [0, 64], sizes = [2, 32], strides = [1, 1]} : vector<2x128xf32> to vector<2x32xf32>
    %235 = math.tanh %234 : vector<2x32xf32>
    %236 = vector.extract_strided_slice %221 {offsets = [0, 96], sizes = [2, 32], strides = [1, 1]} : vector<2x128xf32> to vector<2x32xf32>
    %237 = arith.negf %236 : vector<2x32xf32>
    %238 = math.exp %237 : vector<2x32xf32>
    %cst_39 = arith.constant 1.000000e+00 : f32
    %239 = vector.broadcast %cst_39 : f32 to vector<2x32xf32>
    %240 = arith.addf %239, %238 : vector<2x32xf32>
    %241 = arith.divf %239, %240 : vector<2x32xf32>
    %242 = arith.mulf %233, %184 : vector<2x32xf32>
    %243 = arith.mulf %227, %235 : vector<2x32xf32>
    %244 = arith.addf %242, %243 : vector<2x32xf32>
    %245 = math.tanh %244 : vector<2x32xf32>
    %246 = arith.mulf %241, %245 : vector<2x32xf32>
    %247 = vector.extract_strided_slice %4 {offsets = [4, 0, 0], sizes = [1, 2, 256], strides = [1, 1, 1]} : vector<8x2x256xf32> to vector<1x2x256xf32>
    %248 = vector.shape_cast %247 : vector<1x2x256xf32> to vector<2x256xf32>
    %249 = vector.extract_strided_slice %248 {offsets = [0, 0], sizes = [2, 128], strides = [1, 1]} : vector<2x256xf32> to vector<2x128xf32>
    %cst_40 = arith.constant dense<0.000000e+00> : vector<2x128xf32>
    %250 = tpu.matmul %216, %5, %cst_40 {dimension_numbers = #tpu.dot_dimension_numbers<[1], [0], [0], [1], [0, 0, 1, 1], [], []>} : vector<2x32xf32>, vector<32x128xf32>, vector<2x128xf32> -> vector<2x128xf32>
    %251 = arith.addf %249, %250 : vector<2x128xf32>
    %252 = vector.extract_strided_slice %251 {offsets = [0, 0], sizes = [2, 32], strides = [1, 1]} : vector<2x128xf32> to vector<2x32xf32>
    %253 = arith.negf %252 : vector<2x32xf32>
    %254 = math.exp %253 : vector<2x32xf32>
    %cst_41 = arith.constant 1.000000e+00 : f32
    %255 = vector.broadcast %cst_41 : f32 to vector<2x32xf32>
    %256 = arith.addf %255, %254 : vector<2x32xf32>
    %257 = arith.divf %255, %256 : vector<2x32xf32>
    %258 = vector.extract_strided_slice %251 {offsets = [0, 32], sizes = [2, 32], strides = [1, 1]} : vector<2x128xf32> to vector<2x32xf32>
    %259 = arith.negf %258 : vector<2x32xf32>
    %260 = math.exp %259 : vector<2x32xf32>
    %cst_42 = arith.constant 1.000000e+00 : f32
    %261 = vector.broadcast %cst_42 : f32 to vector<2x32xf32>
    %262 = arith.addf %261, %260 : vector<2x32xf32>
    %263 = arith.divf %261, %262 : vector<2x32xf32>
    %264 = vector.extract_strided_slice %251 {offsets = [0, 64], sizes = [2, 32], strides = [1, 1]} : vector<2x128xf32> to vector<2x32xf32>
    %265 = math.tanh %264 : vector<2x32xf32>
    %266 = vector.extract_strided_slice %251 {offsets = [0, 96], sizes = [2, 32], strides = [1, 1]} : vector<2x128xf32> to vector<2x32xf32>
    %267 = arith.negf %266 : vector<2x32xf32>
    %268 = math.exp %267 : vector<2x32xf32>
    %cst_43 = arith.constant 1.000000e+00 : f32
    %269 = vector.broadcast %cst_43 : f32 to vector<2x32xf32>
    %270 = arith.addf %269, %268 : vector<2x32xf32>
    %271 = arith.divf %269, %270 : vector<2x32xf32>
    %272 = arith.mulf %263, %214 : vector<2x32xf32>
    %273 = arith.mulf %257, %265 : vector<2x32xf32>
    %274 = arith.addf %272, %273 : vector<2x32xf32>
    %275 = math.tanh %274 : vector<2x32xf32>
    %276 = arith.mulf %271, %275 : vector<2x32xf32>
    %277 = vector.extract_strided_slice %4 {offsets = [3, 0, 0], sizes = [1, 2, 256], strides = [1, 1, 1]} : vector<8x2x256xf32> to vector<1x2x256xf32>
    %278 = vector.shape_cast %277 : vector<1x2x256xf32> to vector<2x256xf32>
    %279 = vector.extract_strided_slice %278 {offsets = [0, 128], sizes = [2, 128], strides = [1, 1]} : vector<2x256xf32> to vector<2x128xf32>
    %cst_44 = arith.constant dense<0.000000e+00> : vector<2x128xf32>
    %280 = tpu.matmul %246, %6, %cst_44 {dimension_numbers = #tpu.dot_dimension_numbers<[1], [0], [0], [1], [0, 0, 1, 1], [], []>} : vector<2x32xf32>, vector<32x128xf32>, vector<2x128xf32> -> vector<2x128xf32>
    %281 = arith.addf %279, %280 : vector<2x128xf32>
    %282 = vector.extract_strided_slice %281 {offsets = [0, 0], sizes = [2, 32], strides = [1, 1]} : vector<2x128xf32> to vector<2x32xf32>
    %283 = arith.negf %282 : vector<2x32xf32>
    %284 = math.exp %283 : vector<2x32xf32>
    %cst_45 = arith.constant 1.000000e+00 : f32
    %285 = vector.broadcast %cst_45 : f32 to vector<2x32xf32>
    %286 = arith.addf %285, %284 : vector<2x32xf32>
    %287 = arith.divf %285, %286 : vector<2x32xf32>
    %288 = vector.extract_strided_slice %281 {offsets = [0, 32], sizes = [2, 32], strides = [1, 1]} : vector<2x128xf32> to vector<2x32xf32>
    %289 = arith.negf %288 : vector<2x32xf32>
    %290 = math.exp %289 : vector<2x32xf32>
    %cst_46 = arith.constant 1.000000e+00 : f32
    %291 = vector.broadcast %cst_46 : f32 to vector<2x32xf32>
    %292 = arith.addf %291, %290 : vector<2x32xf32>
    %293 = arith.divf %291, %292 : vector<2x32xf32>
    %294 = vector.extract_strided_slice %281 {offsets = [0, 64], sizes = [2, 32], strides = [1, 1]} : vector<2x128xf32> to vector<2x32xf32>
    %295 = math.tanh %294 : vector<2x32xf32>
    %296 = vector.extract_strided_slice %281 {offsets = [0, 96], sizes = [2, 32], strides = [1, 1]} : vector<2x128xf32> to vector<2x32xf32>
    %297 = arith.negf %296 : vector<2x32xf32>
    %298 = math.exp %297 : vector<2x32xf32>
    %cst_47 = arith.constant 1.000000e+00 : f32
    %299 = vector.broadcast %cst_47 : f32 to vector<2x32xf32>
    %300 = arith.addf %299, %298 : vector<2x32xf32>
    %301 = arith.divf %299, %300 : vector<2x32xf32>
    %302 = arith.mulf %293, %244 : vector<2x32xf32>
    %303 = arith.mulf %287, %295 : vector<2x32xf32>
    %304 = arith.addf %302, %303 : vector<2x32xf32>
    %305 = math.tanh %304 : vector<2x32xf32>
    %306 = arith.mulf %301, %305 : vector<2x32xf32>
    %307 = vector.extract_strided_slice %4 {offsets = [5, 0, 0], sizes = [1, 2, 256], strides = [1, 1, 1]} : vector<8x2x256xf32> to vector<1x2x256xf32>
    %308 = vector.shape_cast %307 : vector<1x2x256xf32> to vector<2x256xf32>
    %309 = vector.extract_strided_slice %308 {offsets = [0, 0], sizes = [2, 128], strides = [1, 1]} : vector<2x256xf32> to vector<2x128xf32>
    %cst_48 = arith.constant dense<0.000000e+00> : vector<2x128xf32>
    %310 = tpu.matmul %276, %5, %cst_48 {dimension_numbers = #tpu.dot_dimension_numbers<[1], [0], [0], [1], [0, 0, 1, 1], [], []>} : vector<2x32xf32>, vector<32x128xf32>, vector<2x128xf32> -> vector<2x128xf32>
    %311 = arith.addf %309, %310 : vector<2x128xf32>
    %312 = vector.extract_strided_slice %311 {offsets = [0, 0], sizes = [2, 32], strides = [1, 1]} : vector<2x128xf32> to vector<2x32xf32>
    %313 = arith.negf %312 : vector<2x32xf32>
    %314 = math.exp %313 : vector<2x32xf32>
    %cst_49 = arith.constant 1.000000e+00 : f32
    %315 = vector.broadcast %cst_49 : f32 to vector<2x32xf32>
    %316 = arith.addf %315, %314 : vector<2x32xf32>
    %317 = arith.divf %315, %316 : vector<2x32xf32>
    %318 = vector.extract_strided_slice %311 {offsets = [0, 32], sizes = [2, 32], strides = [1, 1]} : vector<2x128xf32> to vector<2x32xf32>
    %319 = arith.negf %318 : vector<2x32xf32>
    %320 = math.exp %319 : vector<2x32xf32>
    %cst_50 = arith.constant 1.000000e+00 : f32
    %321 = vector.broadcast %cst_50 : f32 to vector<2x32xf32>
    %322 = arith.addf %321, %320 : vector<2x32xf32>
    %323 = arith.divf %321, %322 : vector<2x32xf32>
    %324 = vector.extract_strided_slice %311 {offsets = [0, 64], sizes = [2, 32], strides = [1, 1]} : vector<2x128xf32> to vector<2x32xf32>
    %325 = math.tanh %324 : vector<2x32xf32>
    %326 = vector.extract_strided_slice %311 {offsets = [0, 96], sizes = [2, 32], strides = [1, 1]} : vector<2x128xf32> to vector<2x32xf32>
    %327 = arith.negf %326 : vector<2x32xf32>
    %328 = math.exp %327 : vector<2x32xf32>
    %cst_51 = arith.constant 1.000000e+00 : f32
    %329 = vector.broadcast %cst_51 : f32 to vector<2x32xf32>
    %330 = arith.addf %329, %328 : vector<2x32xf32>
    %331 = arith.divf %329, %330 : vector<2x32xf32>
    %332 = arith.mulf %323, %274 : vector<2x32xf32>
    %333 = arith.mulf %317, %325 : vector<2x32xf32>
    %334 = arith.addf %332, %333 : vector<2x32xf32>
    %335 = math.tanh %334 : vector<2x32xf32>
    %336 = arith.mulf %331, %335 : vector<2x32xf32>
    %337 = vector.extract_strided_slice %4 {offsets = [2, 0, 0], sizes = [1, 2, 256], strides = [1, 1, 1]} : vector<8x2x256xf32> to vector<1x2x256xf32>
    %338 = vector.shape_cast %337 : vector<1x2x256xf32> to vector<2x256xf32>
    %339 = vector.extract_strided_slice %338 {offsets = [0, 128], sizes = [2, 128], strides = [1, 1]} : vector<2x256xf32> to vector<2x128xf32>
    %cst_52 = arith.constant dense<0.000000e+00> : vector<2x128xf32>
    %340 = tpu.matmul %306, %6, %cst_52 {dimension_numbers = #tpu.dot_dimension_numbers<[1], [0], [0], [1], [0, 0, 1, 1], [], []>} : vector<2x32xf32>, vector<32x128xf32>, vector<2x128xf32> -> vector<2x128xf32>
    %341 = arith.addf %339, %340 : vector<2x128xf32>
    %342 = vector.extract_strided_slice %341 {offsets = [0, 0], sizes = [2, 32], strides = [1, 1]} : vector<2x128xf32> to vector<2x32xf32>
    %343 = arith.negf %342 : vector<2x32xf32>
    %344 = math.exp %343 : vector<2x32xf32>
    %cst_53 = arith.constant 1.000000e+00 : f32
    %345 = vector.broadcast %cst_53 : f32 to vector<2x32xf32>
    %346 = arith.addf %345, %344 : vector<2x32xf32>
    %347 = arith.divf %345, %346 : vector<2x32xf32>
    %348 = vector.extract_strided_slice %341 {offsets = [0, 32], sizes = [2, 32], strides = [1, 1]} : vector<2x128xf32> to vector<2x32xf32>
    %349 = arith.negf %348 : vector<2x32xf32>
    %350 = math.exp %349 : vector<2x32xf32>
    %cst_54 = arith.constant 1.000000e+00 : f32
    %351 = vector.broadcast %cst_54 : f32 to vector<2x32xf32>
    %352 = arith.addf %351, %350 : vector<2x32xf32>
    %353 = arith.divf %351, %352 : vector<2x32xf32>
    %354 = vector.extract_strided_slice %341 {offsets = [0, 64], sizes = [2, 32], strides = [1, 1]} : vector<2x128xf32> to vector<2x32xf32>
    %355 = math.tanh %354 : vector<2x32xf32>
    %356 = vector.extract_strided_slice %341 {offsets = [0, 96], sizes = [2, 32], strides = [1, 1]} : vector<2x128xf32> to vector<2x32xf32>
    %357 = arith.negf %356 : vector<2x32xf32>
    %358 = math.exp %357 : vector<2x32xf32>
    %cst_55 = arith.constant 1.000000e+00 : f32
    %359 = vector.broadcast %cst_55 : f32 to vector<2x32xf32>
    %360 = arith.addf %359, %358 : vector<2x32xf32>
    %361 = arith.divf %359, %360 : vector<2x32xf32>
    %362 = arith.mulf %353, %304 : vector<2x32xf32>
    %363 = arith.mulf %347, %355 : vector<2x32xf32>
    %364 = arith.addf %362, %363 : vector<2x32xf32>
    %365 = math.tanh %364 : vector<2x32xf32>
    %366 = arith.mulf %361, %365 : vector<2x32xf32>
    %367 = vector.extract_strided_slice %4 {offsets = [6, 0, 0], sizes = [1, 2, 256], strides = [1, 1, 1]} : vector<8x2x256xf32> to vector<1x2x256xf32>
    %368 = vector.shape_cast %367 : vector<1x2x256xf32> to vector<2x256xf32>
    %369 = vector.extract_strided_slice %368 {offsets = [0, 0], sizes = [2, 128], strides = [1, 1]} : vector<2x256xf32> to vector<2x128xf32>
    %cst_56 = arith.constant dense<0.000000e+00> : vector<2x128xf32>
    %370 = tpu.matmul %336, %5, %cst_56 {dimension_numbers = #tpu.dot_dimension_numbers<[1], [0], [0], [1], [0, 0, 1, 1], [], []>} : vector<2x32xf32>, vector<32x128xf32>, vector<2x128xf32> -> vector<2x128xf32>
    %371 = arith.addf %369, %370 : vector<2x128xf32>
    %372 = vector.extract_strided_slice %371 {offsets = [0, 0], sizes = [2, 32], strides = [1, 1]} : vector<2x128xf32> to vector<2x32xf32>
    %373 = arith.negf %372 : vector<2x32xf32>
    %374 = math.exp %373 : vector<2x32xf32>
    %cst_57 = arith.constant 1.000000e+00 : f32
    %375 = vector.broadcast %cst_57 : f32 to vector<2x32xf32>
    %376 = arith.addf %375, %374 : vector<2x32xf32>
    %377 = arith.divf %375, %376 : vector<2x32xf32>
    %378 = vector.extract_strided_slice %371 {offsets = [0, 32], sizes = [2, 32], strides = [1, 1]} : vector<2x128xf32> to vector<2x32xf32>
    %379 = arith.negf %378 : vector<2x32xf32>
    %380 = math.exp %379 : vector<2x32xf32>
    %cst_58 = arith.constant 1.000000e+00 : f32
    %381 = vector.broadcast %cst_58 : f32 to vector<2x32xf32>
    %382 = arith.addf %381, %380 : vector<2x32xf32>
    %383 = arith.divf %381, %382 : vector<2x32xf32>
    %384 = vector.extract_strided_slice %371 {offsets = [0, 64], sizes = [2, 32], strides = [1, 1]} : vector<2x128xf32> to vector<2x32xf32>
    %385 = math.tanh %384 : vector<2x32xf32>
    %386 = vector.extract_strided_slice %371 {offsets = [0, 96], sizes = [2, 32], strides = [1, 1]} : vector<2x128xf32> to vector<2x32xf32>
    %387 = arith.negf %386 : vector<2x32xf32>
    %388 = math.exp %387 : vector<2x32xf32>
    %cst_59 = arith.constant 1.000000e+00 : f32
    %389 = vector.broadcast %cst_59 : f32 to vector<2x32xf32>
    %390 = arith.addf %389, %388 : vector<2x32xf32>
    %391 = arith.divf %389, %390 : vector<2x32xf32>
    %392 = arith.mulf %383, %334 : vector<2x32xf32>
    %393 = arith.mulf %377, %385 : vector<2x32xf32>
    %394 = arith.addf %392, %393 : vector<2x32xf32>
    %395 = math.tanh %394 : vector<2x32xf32>
    %396 = arith.mulf %391, %395 : vector<2x32xf32>
    %397 = vector.extract_strided_slice %4 {offsets = [1, 0, 0], sizes = [1, 2, 256], strides = [1, 1, 1]} : vector<8x2x256xf32> to vector<1x2x256xf32>
    %398 = vector.shape_cast %397 : vector<1x2x256xf32> to vector<2x256xf32>
    %399 = vector.extract_strided_slice %398 {offsets = [0, 128], sizes = [2, 128], strides = [1, 1]} : vector<2x256xf32> to vector<2x128xf32>
    %cst_60 = arith.constant dense<0.000000e+00> : vector<2x128xf32>
    %400 = tpu.matmul %366, %6, %cst_60 {dimension_numbers = #tpu.dot_dimension_numbers<[1], [0], [0], [1], [0, 0, 1, 1], [], []>} : vector<2x32xf32>, vector<32x128xf32>, vector<2x128xf32> -> vector<2x128xf32>
    %401 = arith.addf %399, %400 : vector<2x128xf32>
    %402 = vector.extract_strided_slice %401 {offsets = [0, 0], sizes = [2, 32], strides = [1, 1]} : vector<2x128xf32> to vector<2x32xf32>
    %403 = arith.negf %402 : vector<2x32xf32>
    %404 = math.exp %403 : vector<2x32xf32>
    %cst_61 = arith.constant 1.000000e+00 : f32
    %405 = vector.broadcast %cst_61 : f32 to vector<2x32xf32>
    %406 = arith.addf %405, %404 : vector<2x32xf32>
    %407 = arith.divf %405, %406 : vector<2x32xf32>
    %408 = vector.extract_strided_slice %401 {offsets = [0, 32], sizes = [2, 32], strides = [1, 1]} : vector<2x128xf32> to vector<2x32xf32>
    %409 = arith.negf %408 : vector<2x32xf32>
    %410 = math.exp %409 : vector<2x32xf32>
    %cst_62 = arith.constant 1.000000e+00 : f32
    %411 = vector.broadcast %cst_62 : f32 to vector<2x32xf32>
    %412 = arith.addf %411, %410 : vector<2x32xf32>
    %413 = arith.divf %411, %412 : vector<2x32xf32>
    %414 = vector.extract_strided_slice %401 {offsets = [0, 64], sizes = [2, 32], strides = [1, 1]} : vector<2x128xf32> to vector<2x32xf32>
    %415 = math.tanh %414 : vector<2x32xf32>
    %416 = vector.extract_strided_slice %401 {offsets = [0, 96], sizes = [2, 32], strides = [1, 1]} : vector<2x128xf32> to vector<2x32xf32>
    %417 = arith.negf %416 : vector<2x32xf32>
    %418 = math.exp %417 : vector<2x32xf32>
    %cst_63 = arith.constant 1.000000e+00 : f32
    %419 = vector.broadcast %cst_63 : f32 to vector<2x32xf32>
    %420 = arith.addf %419, %418 : vector<2x32xf32>
    %421 = arith.divf %419, %420 : vector<2x32xf32>
    %422 = arith.mulf %413, %364 : vector<2x32xf32>
    %423 = arith.mulf %407, %415 : vector<2x32xf32>
    %424 = arith.addf %422, %423 : vector<2x32xf32>
    %425 = math.tanh %424 : vector<2x32xf32>
    %426 = arith.mulf %421, %425 : vector<2x32xf32>
    %427 = vector.extract_strided_slice %4 {offsets = [7, 0, 0], sizes = [1, 2, 256], strides = [1, 1, 1]} : vector<8x2x256xf32> to vector<1x2x256xf32>
    %428 = vector.shape_cast %427 : vector<1x2x256xf32> to vector<2x256xf32>
    %429 = vector.extract_strided_slice %428 {offsets = [0, 0], sizes = [2, 128], strides = [1, 1]} : vector<2x256xf32> to vector<2x128xf32>
    %cst_64 = arith.constant dense<0.000000e+00> : vector<2x128xf32>
    %430 = tpu.matmul %396, %5, %cst_64 {dimension_numbers = #tpu.dot_dimension_numbers<[1], [0], [0], [1], [0, 0, 1, 1], [], []>} : vector<2x32xf32>, vector<32x128xf32>, vector<2x128xf32> -> vector<2x128xf32>
    %431 = arith.addf %429, %430 : vector<2x128xf32>
    %432 = vector.extract_strided_slice %431 {offsets = [0, 0], sizes = [2, 32], strides = [1, 1]} : vector<2x128xf32> to vector<2x32xf32>
    %433 = arith.negf %432 : vector<2x32xf32>
    %434 = math.exp %433 : vector<2x32xf32>
    %cst_65 = arith.constant 1.000000e+00 : f32
    %435 = vector.broadcast %cst_65 : f32 to vector<2x32xf32>
    %436 = arith.addf %435, %434 : vector<2x32xf32>
    %437 = arith.divf %435, %436 : vector<2x32xf32>
    %438 = vector.extract_strided_slice %431 {offsets = [0, 32], sizes = [2, 32], strides = [1, 1]} : vector<2x128xf32> to vector<2x32xf32>
    %439 = arith.negf %438 : vector<2x32xf32>
    %440 = math.exp %439 : vector<2x32xf32>
    %cst_66 = arith.constant 1.000000e+00 : f32
    %441 = vector.broadcast %cst_66 : f32 to vector<2x32xf32>
    %442 = arith.addf %441, %440 : vector<2x32xf32>
    %443 = arith.divf %441, %442 : vector<2x32xf32>
    %444 = vector.extract_strided_slice %431 {offsets = [0, 64], sizes = [2, 32], strides = [1, 1]} : vector<2x128xf32> to vector<2x32xf32>
    %445 = math.tanh %444 : vector<2x32xf32>
    %446 = vector.extract_strided_slice %431 {offsets = [0, 96], sizes = [2, 32], strides = [1, 1]} : vector<2x128xf32> to vector<2x32xf32>
    %447 = arith.negf %446 : vector<2x32xf32>
    %448 = math.exp %447 : vector<2x32xf32>
    %cst_67 = arith.constant 1.000000e+00 : f32
    %449 = vector.broadcast %cst_67 : f32 to vector<2x32xf32>
    %450 = arith.addf %449, %448 : vector<2x32xf32>
    %451 = arith.divf %449, %450 : vector<2x32xf32>
    %452 = arith.mulf %443, %394 : vector<2x32xf32>
    %453 = arith.mulf %437, %445 : vector<2x32xf32>
    %454 = arith.addf %452, %453 : vector<2x32xf32>
    %455 = math.tanh %454 : vector<2x32xf32>
    %456 = arith.mulf %451, %455 : vector<2x32xf32>
    %457 = vector.extract_strided_slice %4 {offsets = [0, 0, 0], sizes = [1, 2, 256], strides = [1, 1, 1]} : vector<8x2x256xf32> to vector<1x2x256xf32>
    %458 = vector.shape_cast %457 : vector<1x2x256xf32> to vector<2x256xf32>
    %459 = vector.extract_strided_slice %458 {offsets = [0, 128], sizes = [2, 128], strides = [1, 1]} : vector<2x256xf32> to vector<2x128xf32>
    %cst_68 = arith.constant dense<0.000000e+00> : vector<2x128xf32>
    %460 = tpu.matmul %426, %6, %cst_68 {dimension_numbers = #tpu.dot_dimension_numbers<[1], [0], [0], [1], [0, 0, 1, 1], [], []>} : vector<2x32xf32>, vector<32x128xf32>, vector<2x128xf32> -> vector<2x128xf32>
    %461 = arith.addf %459, %460 : vector<2x128xf32>
    %462 = vector.extract_strided_slice %461 {offsets = [0, 0], sizes = [2, 32], strides = [1, 1]} : vector<2x128xf32> to vector<2x32xf32>
    %463 = arith.negf %462 : vector<2x32xf32>
    %464 = math.exp %463 : vector<2x32xf32>
    %cst_69 = arith.constant 1.000000e+00 : f32
    %465 = vector.broadcast %cst_69 : f32 to vector<2x32xf32>
    %466 = arith.addf %465, %464 : vector<2x32xf32>
    %467 = arith.divf %465, %466 : vector<2x32xf32>
    %468 = vector.extract_strided_slice %461 {offsets = [0, 32], sizes = [2, 32], strides = [1, 1]} : vector<2x128xf32> to vector<2x32xf32>
    %469 = arith.negf %468 : vector<2x32xf32>
    %470 = math.exp %469 : vector<2x32xf32>
    %cst_70 = arith.constant 1.000000e+00 : f32
    %471 = vector.broadcast %cst_70 : f32 to vector<2x32xf32>
    %472 = arith.addf %471, %470 : vector<2x32xf32>
    %473 = arith.divf %471, %472 : vector<2x32xf32>
    %474 = vector.extract_strided_slice %461 {offsets = [0, 64], sizes = [2, 32], strides = [1, 1]} : vector<2x128xf32> to vector<2x32xf32>
    %475 = math.tanh %474 : vector<2x32xf32>
    %476 = vector.extract_strided_slice %461 {offsets = [0, 96], sizes = [2, 32], strides = [1, 1]} : vector<2x128xf32> to vector<2x32xf32>
    %477 = arith.negf %476 : vector<2x32xf32>
    %478 = math.exp %477 : vector<2x32xf32>
    %cst_71 = arith.constant 1.000000e+00 : f32
    %479 = vector.broadcast %cst_71 : f32 to vector<2x32xf32>
    %480 = arith.addf %479, %478 : vector<2x32xf32>
    %481 = arith.divf %479, %480 : vector<2x32xf32>
    %482 = arith.mulf %473, %424 : vector<2x32xf32>
    %483 = arith.mulf %467, %475 : vector<2x32xf32>
    %484 = arith.addf %482, %483 : vector<2x32xf32>
    %485 = math.tanh %484 : vector<2x32xf32>
    %486 = arith.mulf %481, %485 : vector<2x32xf32>
    %487 = tpu.concatenate %36, %96, %156, %216, %276, %336, %396, %456 in 0 : vector<2x32xf32>, vector<2x32xf32>, vector<2x32xf32>, vector<2x32xf32>, vector<2x32xf32>, vector<2x32xf32>, vector<2x32xf32>, vector<2x32xf32> -> vector<16x32xf32>
    %488 = tpu.concatenate %486, %426, %366, %306, %246, %186, %126, %66 in 0 : vector<2x32xf32>, vector<2x32xf32>, vector<2x32xf32>, vector<2x32xf32>, vector<2x32xf32>, vector<2x32xf32>, vector<2x32xf32>, vector<2x32xf32> -> vector<16x32xf32>
    %c0_72 = arith.constant 0 : index
    %c0_73 = arith.constant 0 : index
    %489 = vector.load %arg4[%c0_72, %c0_73] : memref<64x256xf32, #tpu.memory_space<vmem>>, vector<64x256xf32>
    %490 = vector.extract_strided_slice %489 {offsets = [0, 0], sizes = [32, 256], strides = [1, 1]} : vector<64x256xf32> to vector<32x256xf32>
    %cst_74 = arith.constant dense<0.000000e+00> : vector<16x256xf32>
    %491 = tpu.matmul %487, %490, %cst_74 {dimension_numbers = #tpu.dot_dimension_numbers<[1], [0], [0], [1], [0, 0, 1, 1], [], []>} : vector<16x32xf32>, vector<32x256xf32>, vector<16x256xf32> -> vector<16x256xf32>
    %492 = vector.extract_strided_slice %489 {offsets = [32, 0], sizes = [32, 256], strides = [1, 1]} : vector<64x256xf32> to vector<32x256xf32>
    %cst_75 = arith.constant dense<0.000000e+00> : vector<16x256xf32>
    %493 = tpu.matmul %488, %492, %cst_75 {dimension_numbers = #tpu.dot_dimension_numbers<[1], [0], [0], [1], [0, 0, 1, 1], [], []>} : vector<16x32xf32>, vector<32x256xf32>, vector<16x256xf32> -> vector<16x256xf32>
    %494 = arith.addf %491, %493 : vector<16x256xf32>
    %495 = vector.shape_cast %494 : vector<16x256xf32> to vector<8x2x256xf32>
    %c0_76 = arith.constant 0 : index
    %c0_77 = arith.constant 0 : index
    %496 = vector.load %arg5[%c0_76, %c0_77] : memref<32x128xf32, #tpu.memory_space<vmem>>, vector<32x128xf32>
    %497 = vector.extract_strided_slice %495 {offsets = [0, 0, 0], sizes = [1, 2, 256], strides = [1, 1, 1]} : vector<8x2x256xf32> to vector<1x2x256xf32>
    %498 = vector.shape_cast %497 : vector<1x2x256xf32> to vector<2x256xf32>
    %499 = vector.extract_strided_slice %498 {offsets = [0, 0], sizes = [2, 128], strides = [1, 1]} : vector<2x256xf32> to vector<2x128xf32>
    %cst_78 = arith.constant dense<0.000000e+00> : vector<2x128xf32>
    %500 = tpu.matmul %0, %496, %cst_78 {dimension_numbers = #tpu.dot_dimension_numbers<[1], [0], [0], [1], [0, 0, 1, 1], [], []>} : vector<2x32xf32>, vector<32x128xf32>, vector<2x128xf32> -> vector<2x128xf32>
    %501 = arith.addf %499, %500 : vector<2x128xf32>
    %502 = vector.extract_strided_slice %501 {offsets = [0, 0], sizes = [2, 32], strides = [1, 1]} : vector<2x128xf32> to vector<2x32xf32>
    %503 = arith.negf %502 : vector<2x32xf32>
    %504 = math.exp %503 : vector<2x32xf32>
    %cst_79 = arith.constant 1.000000e+00 : f32
    %505 = vector.broadcast %cst_79 : f32 to vector<2x32xf32>
    %506 = arith.addf %505, %504 : vector<2x32xf32>
    %507 = arith.divf %505, %506 : vector<2x32xf32>
    %508 = vector.extract_strided_slice %501 {offsets = [0, 32], sizes = [2, 32], strides = [1, 1]} : vector<2x128xf32> to vector<2x32xf32>
    %509 = arith.negf %508 : vector<2x32xf32>
    %510 = math.exp %509 : vector<2x32xf32>
    %cst_80 = arith.constant 1.000000e+00 : f32
    %511 = vector.broadcast %cst_80 : f32 to vector<2x32xf32>
    %512 = arith.addf %511, %510 : vector<2x32xf32>
    %513 = arith.divf %511, %512 : vector<2x32xf32>
    %514 = vector.extract_strided_slice %501 {offsets = [0, 64], sizes = [2, 32], strides = [1, 1]} : vector<2x128xf32> to vector<2x32xf32>
    %515 = math.tanh %514 : vector<2x32xf32>
    %516 = vector.extract_strided_slice %501 {offsets = [0, 96], sizes = [2, 32], strides = [1, 1]} : vector<2x128xf32> to vector<2x32xf32>
    %517 = arith.negf %516 : vector<2x32xf32>
    %518 = math.exp %517 : vector<2x32xf32>
    %cst_81 = arith.constant 1.000000e+00 : f32
    %519 = vector.broadcast %cst_81 : f32 to vector<2x32xf32>
    %520 = arith.addf %519, %518 : vector<2x32xf32>
    %521 = arith.divf %519, %520 : vector<2x32xf32>
    %522 = arith.mulf %513, %0 : vector<2x32xf32>
    %523 = arith.mulf %507, %515 : vector<2x32xf32>
    %524 = arith.addf %522, %523 : vector<2x32xf32>
    %525 = math.tanh %524 : vector<2x32xf32>
    %526 = arith.mulf %521, %525 : vector<2x32xf32>
    %527 = vector.extract_strided_slice %495 {offsets = [1, 0, 0], sizes = [1, 2, 256], strides = [1, 1, 1]} : vector<8x2x256xf32> to vector<1x2x256xf32>
    %528 = vector.shape_cast %527 : vector<1x2x256xf32> to vector<2x256xf32>
    %529 = vector.extract_strided_slice %528 {offsets = [0, 0], sizes = [2, 128], strides = [1, 1]} : vector<2x256xf32> to vector<2x128xf32>
    %cst_82 = arith.constant dense<0.000000e+00> : vector<2x128xf32>
    %530 = tpu.matmul %526, %496, %cst_82 {dimension_numbers = #tpu.dot_dimension_numbers<[1], [0], [0], [1], [0, 0, 1, 1], [], []>} : vector<2x32xf32>, vector<32x128xf32>, vector<2x128xf32> -> vector<2x128xf32>
    %531 = arith.addf %529, %530 : vector<2x128xf32>
    %532 = vector.extract_strided_slice %531 {offsets = [0, 0], sizes = [2, 32], strides = [1, 1]} : vector<2x128xf32> to vector<2x32xf32>
    %533 = arith.negf %532 : vector<2x32xf32>
    %534 = math.exp %533 : vector<2x32xf32>
    %cst_83 = arith.constant 1.000000e+00 : f32
    %535 = vector.broadcast %cst_83 : f32 to vector<2x32xf32>
    %536 = arith.addf %535, %534 : vector<2x32xf32>
    %537 = arith.divf %535, %536 : vector<2x32xf32>
    %538 = vector.extract_strided_slice %531 {offsets = [0, 32], sizes = [2, 32], strides = [1, 1]} : vector<2x128xf32> to vector<2x32xf32>
    %539 = arith.negf %538 : vector<2x32xf32>
    %540 = math.exp %539 : vector<2x32xf32>
    %cst_84 = arith.constant 1.000000e+00 : f32
    %541 = vector.broadcast %cst_84 : f32 to vector<2x32xf32>
    %542 = arith.addf %541, %540 : vector<2x32xf32>
    %543 = arith.divf %541, %542 : vector<2x32xf32>
    %544 = vector.extract_strided_slice %531 {offsets = [0, 64], sizes = [2, 32], strides = [1, 1]} : vector<2x128xf32> to vector<2x32xf32>
    %545 = math.tanh %544 : vector<2x32xf32>
    %546 = vector.extract_strided_slice %531 {offsets = [0, 96], sizes = [2, 32], strides = [1, 1]} : vector<2x128xf32> to vector<2x32xf32>
    %547 = arith.negf %546 : vector<2x32xf32>
    %548 = math.exp %547 : vector<2x32xf32>
    %cst_85 = arith.constant 1.000000e+00 : f32
    %549 = vector.broadcast %cst_85 : f32 to vector<2x32xf32>
    %550 = arith.addf %549, %548 : vector<2x32xf32>
    %551 = arith.divf %549, %550 : vector<2x32xf32>
    %552 = arith.mulf %543, %524 : vector<2x32xf32>
    %553 = arith.mulf %537, %545 : vector<2x32xf32>
    %554 = arith.addf %552, %553 : vector<2x32xf32>
    %555 = math.tanh %554 : vector<2x32xf32>
    %556 = arith.mulf %551, %555 : vector<2x32xf32>
    %557 = vector.extract_strided_slice %495 {offsets = [2, 0, 0], sizes = [1, 2, 256], strides = [1, 1, 1]} : vector<8x2x256xf32> to vector<1x2x256xf32>
    %558 = vector.shape_cast %557 : vector<1x2x256xf32> to vector<2x256xf32>
    %559 = vector.extract_strided_slice %558 {offsets = [0, 0], sizes = [2, 128], strides = [1, 1]} : vector<2x256xf32> to vector<2x128xf32>
    %cst_86 = arith.constant dense<0.000000e+00> : vector<2x128xf32>
    %560 = tpu.matmul %556, %496, %cst_86 {dimension_numbers = #tpu.dot_dimension_numbers<[1], [0], [0], [1], [0, 0, 1, 1], [], []>} : vector<2x32xf32>, vector<32x128xf32>, vector<2x128xf32> -> vector<2x128xf32>
    %561 = arith.addf %559, %560 : vector<2x128xf32>
    %562 = vector.extract_strided_slice %561 {offsets = [0, 0], sizes = [2, 32], strides = [1, 1]} : vector<2x128xf32> to vector<2x32xf32>
    %563 = arith.negf %562 : vector<2x32xf32>
    %564 = math.exp %563 : vector<2x32xf32>
    %cst_87 = arith.constant 1.000000e+00 : f32
    %565 = vector.broadcast %cst_87 : f32 to vector<2x32xf32>
    %566 = arith.addf %565, %564 : vector<2x32xf32>
    %567 = arith.divf %565, %566 : vector<2x32xf32>
    %568 = vector.extract_strided_slice %561 {offsets = [0, 32], sizes = [2, 32], strides = [1, 1]} : vector<2x128xf32> to vector<2x32xf32>
    %569 = arith.negf %568 : vector<2x32xf32>
    %570 = math.exp %569 : vector<2x32xf32>
    %cst_88 = arith.constant 1.000000e+00 : f32
    %571 = vector.broadcast %cst_88 : f32 to vector<2x32xf32>
    %572 = arith.addf %571, %570 : vector<2x32xf32>
    %573 = arith.divf %571, %572 : vector<2x32xf32>
    %574 = vector.extract_strided_slice %561 {offsets = [0, 64], sizes = [2, 32], strides = [1, 1]} : vector<2x128xf32> to vector<2x32xf32>
    %575 = math.tanh %574 : vector<2x32xf32>
    %576 = vector.extract_strided_slice %561 {offsets = [0, 96], sizes = [2, 32], strides = [1, 1]} : vector<2x128xf32> to vector<2x32xf32>
    %577 = arith.negf %576 : vector<2x32xf32>
    %578 = math.exp %577 : vector<2x32xf32>
    %cst_89 = arith.constant 1.000000e+00 : f32
    %579 = vector.broadcast %cst_89 : f32 to vector<2x32xf32>
    %580 = arith.addf %579, %578 : vector<2x32xf32>
    %581 = arith.divf %579, %580 : vector<2x32xf32>
    %582 = arith.mulf %573, %554 : vector<2x32xf32>
    %583 = arith.mulf %567, %575 : vector<2x32xf32>
    %584 = arith.addf %582, %583 : vector<2x32xf32>
    %585 = math.tanh %584 : vector<2x32xf32>
    %586 = arith.mulf %581, %585 : vector<2x32xf32>
    %587 = vector.extract_strided_slice %495 {offsets = [3, 0, 0], sizes = [1, 2, 256], strides = [1, 1, 1]} : vector<8x2x256xf32> to vector<1x2x256xf32>
    %588 = vector.shape_cast %587 : vector<1x2x256xf32> to vector<2x256xf32>
    %589 = vector.extract_strided_slice %588 {offsets = [0, 0], sizes = [2, 128], strides = [1, 1]} : vector<2x256xf32> to vector<2x128xf32>
    %cst_90 = arith.constant dense<0.000000e+00> : vector<2x128xf32>
    %590 = tpu.matmul %586, %496, %cst_90 {dimension_numbers = #tpu.dot_dimension_numbers<[1], [0], [0], [1], [0, 0, 1, 1], [], []>} : vector<2x32xf32>, vector<32x128xf32>, vector<2x128xf32> -> vector<2x128xf32>
    %591 = arith.addf %589, %590 : vector<2x128xf32>
    %592 = vector.extract_strided_slice %591 {offsets = [0, 0], sizes = [2, 32], strides = [1, 1]} : vector<2x128xf32> to vector<2x32xf32>
    %593 = arith.negf %592 : vector<2x32xf32>
    %594 = math.exp %593 : vector<2x32xf32>
    %cst_91 = arith.constant 1.000000e+00 : f32
    %595 = vector.broadcast %cst_91 : f32 to vector<2x32xf32>
    %596 = arith.addf %595, %594 : vector<2x32xf32>
    %597 = arith.divf %595, %596 : vector<2x32xf32>
    %598 = vector.extract_strided_slice %591 {offsets = [0, 32], sizes = [2, 32], strides = [1, 1]} : vector<2x128xf32> to vector<2x32xf32>
    %599 = arith.negf %598 : vector<2x32xf32>
    %600 = math.exp %599 : vector<2x32xf32>
    %cst_92 = arith.constant 1.000000e+00 : f32
    %601 = vector.broadcast %cst_92 : f32 to vector<2x32xf32>
    %602 = arith.addf %601, %600 : vector<2x32xf32>
    %603 = arith.divf %601, %602 : vector<2x32xf32>
    %604 = vector.extract_strided_slice %591 {offsets = [0, 64], sizes = [2, 32], strides = [1, 1]} : vector<2x128xf32> to vector<2x32xf32>
    %605 = math.tanh %604 : vector<2x32xf32>
    %606 = vector.extract_strided_slice %591 {offsets = [0, 96], sizes = [2, 32], strides = [1, 1]} : vector<2x128xf32> to vector<2x32xf32>
    %607 = arith.negf %606 : vector<2x32xf32>
    %608 = math.exp %607 : vector<2x32xf32>
    %cst_93 = arith.constant 1.000000e+00 : f32
    %609 = vector.broadcast %cst_93 : f32 to vector<2x32xf32>
    %610 = arith.addf %609, %608 : vector<2x32xf32>
    %611 = arith.divf %609, %610 : vector<2x32xf32>
    %612 = arith.mulf %603, %584 : vector<2x32xf32>
    %613 = arith.mulf %597, %605 : vector<2x32xf32>
    %614 = arith.addf %612, %613 : vector<2x32xf32>
    %615 = math.tanh %614 : vector<2x32xf32>
    %616 = arith.mulf %611, %615 : vector<2x32xf32>
    %617 = vector.extract_strided_slice %495 {offsets = [4, 0, 0], sizes = [1, 2, 256], strides = [1, 1, 1]} : vector<8x2x256xf32> to vector<1x2x256xf32>
    %618 = vector.shape_cast %617 : vector<1x2x256xf32> to vector<2x256xf32>
    %619 = vector.extract_strided_slice %618 {offsets = [0, 0], sizes = [2, 128], strides = [1, 1]} : vector<2x256xf32> to vector<2x128xf32>
    %cst_94 = arith.constant dense<0.000000e+00> : vector<2x128xf32>
    %620 = tpu.matmul %616, %496, %cst_94 {dimension_numbers = #tpu.dot_dimension_numbers<[1], [0], [0], [1], [0, 0, 1, 1], [], []>} : vector<2x32xf32>, vector<32x128xf32>, vector<2x128xf32> -> vector<2x128xf32>
    %621 = arith.addf %619, %620 : vector<2x128xf32>
    %622 = vector.extract_strided_slice %621 {offsets = [0, 0], sizes = [2, 32], strides = [1, 1]} : vector<2x128xf32> to vector<2x32xf32>
    %623 = arith.negf %622 : vector<2x32xf32>
    %624 = math.exp %623 : vector<2x32xf32>
    %cst_95 = arith.constant 1.000000e+00 : f32
    %625 = vector.broadcast %cst_95 : f32 to vector<2x32xf32>
    %626 = arith.addf %625, %624 : vector<2x32xf32>
    %627 = arith.divf %625, %626 : vector<2x32xf32>
    %628 = vector.extract_strided_slice %621 {offsets = [0, 32], sizes = [2, 32], strides = [1, 1]} : vector<2x128xf32> to vector<2x32xf32>
    %629 = arith.negf %628 : vector<2x32xf32>
    %630 = math.exp %629 : vector<2x32xf32>
    %cst_96 = arith.constant 1.000000e+00 : f32
    %631 = vector.broadcast %cst_96 : f32 to vector<2x32xf32>
    %632 = arith.addf %631, %630 : vector<2x32xf32>
    %633 = arith.divf %631, %632 : vector<2x32xf32>
    %634 = vector.extract_strided_slice %621 {offsets = [0, 64], sizes = [2, 32], strides = [1, 1]} : vector<2x128xf32> to vector<2x32xf32>
    %635 = math.tanh %634 : vector<2x32xf32>
    %636 = vector.extract_strided_slice %621 {offsets = [0, 96], sizes = [2, 32], strides = [1, 1]} : vector<2x128xf32> to vector<2x32xf32>
    %637 = arith.negf %636 : vector<2x32xf32>
    %638 = math.exp %637 : vector<2x32xf32>
    %cst_97 = arith.constant 1.000000e+00 : f32
    %639 = vector.broadcast %cst_97 : f32 to vector<2x32xf32>
    %640 = arith.addf %639, %638 : vector<2x32xf32>
    %641 = arith.divf %639, %640 : vector<2x32xf32>
    %642 = arith.mulf %633, %614 : vector<2x32xf32>
    %643 = arith.mulf %627, %635 : vector<2x32xf32>
    %644 = arith.addf %642, %643 : vector<2x32xf32>
    %645 = math.tanh %644 : vector<2x32xf32>
    %646 = arith.mulf %641, %645 : vector<2x32xf32>
    %647 = vector.extract_strided_slice %495 {offsets = [5, 0, 0], sizes = [1, 2, 256], strides = [1, 1, 1]} : vector<8x2x256xf32> to vector<1x2x256xf32>
    %648 = vector.shape_cast %647 : vector<1x2x256xf32> to vector<2x256xf32>
    %649 = vector.extract_strided_slice %648 {offsets = [0, 0], sizes = [2, 128], strides = [1, 1]} : vector<2x256xf32> to vector<2x128xf32>
    %cst_98 = arith.constant dense<0.000000e+00> : vector<2x128xf32>
    %650 = tpu.matmul %646, %496, %cst_98 {dimension_numbers = #tpu.dot_dimension_numbers<[1], [0], [0], [1], [0, 0, 1, 1], [], []>} : vector<2x32xf32>, vector<32x128xf32>, vector<2x128xf32> -> vector<2x128xf32>
    %651 = arith.addf %649, %650 : vector<2x128xf32>
    %652 = vector.extract_strided_slice %651 {offsets = [0, 0], sizes = [2, 32], strides = [1, 1]} : vector<2x128xf32> to vector<2x32xf32>
    %653 = arith.negf %652 : vector<2x32xf32>
    %654 = math.exp %653 : vector<2x32xf32>
    %cst_99 = arith.constant 1.000000e+00 : f32
    %655 = vector.broadcast %cst_99 : f32 to vector<2x32xf32>
    %656 = arith.addf %655, %654 : vector<2x32xf32>
    %657 = arith.divf %655, %656 : vector<2x32xf32>
    %658 = vector.extract_strided_slice %651 {offsets = [0, 32], sizes = [2, 32], strides = [1, 1]} : vector<2x128xf32> to vector<2x32xf32>
    %659 = arith.negf %658 : vector<2x32xf32>
    %660 = math.exp %659 : vector<2x32xf32>
    %cst_100 = arith.constant 1.000000e+00 : f32
    %661 = vector.broadcast %cst_100 : f32 to vector<2x32xf32>
    %662 = arith.addf %661, %660 : vector<2x32xf32>
    %663 = arith.divf %661, %662 : vector<2x32xf32>
    %664 = vector.extract_strided_slice %651 {offsets = [0, 64], sizes = [2, 32], strides = [1, 1]} : vector<2x128xf32> to vector<2x32xf32>
    %665 = math.tanh %664 : vector<2x32xf32>
    %666 = vector.extract_strided_slice %651 {offsets = [0, 96], sizes = [2, 32], strides = [1, 1]} : vector<2x128xf32> to vector<2x32xf32>
    %667 = arith.negf %666 : vector<2x32xf32>
    %668 = math.exp %667 : vector<2x32xf32>
    %cst_101 = arith.constant 1.000000e+00 : f32
    %669 = vector.broadcast %cst_101 : f32 to vector<2x32xf32>
    %670 = arith.addf %669, %668 : vector<2x32xf32>
    %671 = arith.divf %669, %670 : vector<2x32xf32>
    %672 = arith.mulf %663, %644 : vector<2x32xf32>
    %673 = arith.mulf %657, %665 : vector<2x32xf32>
    %674 = arith.addf %672, %673 : vector<2x32xf32>
    %675 = math.tanh %674 : vector<2x32xf32>
    %676 = arith.mulf %671, %675 : vector<2x32xf32>
    %677 = vector.extract_strided_slice %495 {offsets = [6, 0, 0], sizes = [1, 2, 256], strides = [1, 1, 1]} : vector<8x2x256xf32> to vector<1x2x256xf32>
    %678 = vector.shape_cast %677 : vector<1x2x256xf32> to vector<2x256xf32>
    %679 = vector.extract_strided_slice %678 {offsets = [0, 0], sizes = [2, 128], strides = [1, 1]} : vector<2x256xf32> to vector<2x128xf32>
    %cst_102 = arith.constant dense<0.000000e+00> : vector<2x128xf32>
    %680 = tpu.matmul %676, %496, %cst_102 {dimension_numbers = #tpu.dot_dimension_numbers<[1], [0], [0], [1], [0, 0, 1, 1], [], []>} : vector<2x32xf32>, vector<32x128xf32>, vector<2x128xf32> -> vector<2x128xf32>
    %681 = arith.addf %679, %680 : vector<2x128xf32>
    %682 = vector.extract_strided_slice %681 {offsets = [0, 0], sizes = [2, 32], strides = [1, 1]} : vector<2x128xf32> to vector<2x32xf32>
    %683 = arith.negf %682 : vector<2x32xf32>
    %684 = math.exp %683 : vector<2x32xf32>
    %cst_103 = arith.constant 1.000000e+00 : f32
    %685 = vector.broadcast %cst_103 : f32 to vector<2x32xf32>
    %686 = arith.addf %685, %684 : vector<2x32xf32>
    %687 = arith.divf %685, %686 : vector<2x32xf32>
    %688 = vector.extract_strided_slice %681 {offsets = [0, 32], sizes = [2, 32], strides = [1, 1]} : vector<2x128xf32> to vector<2x32xf32>
    %689 = arith.negf %688 : vector<2x32xf32>
    %690 = math.exp %689 : vector<2x32xf32>
    %cst_104 = arith.constant 1.000000e+00 : f32
    %691 = vector.broadcast %cst_104 : f32 to vector<2x32xf32>
    %692 = arith.addf %691, %690 : vector<2x32xf32>
    %693 = arith.divf %691, %692 : vector<2x32xf32>
    %694 = vector.extract_strided_slice %681 {offsets = [0, 64], sizes = [2, 32], strides = [1, 1]} : vector<2x128xf32> to vector<2x32xf32>
    %695 = math.tanh %694 : vector<2x32xf32>
    %696 = vector.extract_strided_slice %681 {offsets = [0, 96], sizes = [2, 32], strides = [1, 1]} : vector<2x128xf32> to vector<2x32xf32>
    %697 = arith.negf %696 : vector<2x32xf32>
    %698 = math.exp %697 : vector<2x32xf32>
    %cst_105 = arith.constant 1.000000e+00 : f32
    %699 = vector.broadcast %cst_105 : f32 to vector<2x32xf32>
    %700 = arith.addf %699, %698 : vector<2x32xf32>
    %701 = arith.divf %699, %700 : vector<2x32xf32>
    %702 = arith.mulf %693, %674 : vector<2x32xf32>
    %703 = arith.mulf %687, %695 : vector<2x32xf32>
    %704 = arith.addf %702, %703 : vector<2x32xf32>
    %705 = math.tanh %704 : vector<2x32xf32>
    %706 = arith.mulf %701, %705 : vector<2x32xf32>
    %707 = vector.extract_strided_slice %495 {offsets = [7, 0, 0], sizes = [1, 2, 256], strides = [1, 1, 1]} : vector<8x2x256xf32> to vector<1x2x256xf32>
    %708 = vector.shape_cast %707 : vector<1x2x256xf32> to vector<2x256xf32>
    %709 = vector.extract_strided_slice %708 {offsets = [0, 0], sizes = [2, 128], strides = [1, 1]} : vector<2x256xf32> to vector<2x128xf32>
    %cst_106 = arith.constant dense<0.000000e+00> : vector<2x128xf32>
    %710 = tpu.matmul %706, %496, %cst_106 {dimension_numbers = #tpu.dot_dimension_numbers<[1], [0], [0], [1], [0, 0, 1, 1], [], []>} : vector<2x32xf32>, vector<32x128xf32>, vector<2x128xf32> -> vector<2x128xf32>
    %711 = arith.addf %709, %710 : vector<2x128xf32>
    %712 = vector.extract_strided_slice %711 {offsets = [0, 0], sizes = [2, 32], strides = [1, 1]} : vector<2x128xf32> to vector<2x32xf32>
    %713 = arith.negf %712 : vector<2x32xf32>
    %714 = math.exp %713 : vector<2x32xf32>
    %cst_107 = arith.constant 1.000000e+00 : f32
    %715 = vector.broadcast %cst_107 : f32 to vector<2x32xf32>
    %716 = arith.addf %715, %714 : vector<2x32xf32>
    %717 = arith.divf %715, %716 : vector<2x32xf32>
    %718 = vector.extract_strided_slice %711 {offsets = [0, 32], sizes = [2, 32], strides = [1, 1]} : vector<2x128xf32> to vector<2x32xf32>
    %719 = arith.negf %718 : vector<2x32xf32>
    %720 = math.exp %719 : vector<2x32xf32>
    %cst_108 = arith.constant 1.000000e+00 : f32
    %721 = vector.broadcast %cst_108 : f32 to vector<2x32xf32>
    %722 = arith.addf %721, %720 : vector<2x32xf32>
    %723 = arith.divf %721, %722 : vector<2x32xf32>
    %724 = vector.extract_strided_slice %711 {offsets = [0, 64], sizes = [2, 32], strides = [1, 1]} : vector<2x128xf32> to vector<2x32xf32>
    %725 = math.tanh %724 : vector<2x32xf32>
    %726 = vector.extract_strided_slice %711 {offsets = [0, 96], sizes = [2, 32], strides = [1, 1]} : vector<2x128xf32> to vector<2x32xf32>
    %727 = arith.negf %726 : vector<2x32xf32>
    %728 = math.exp %727 : vector<2x32xf32>
    %cst_109 = arith.constant 1.000000e+00 : f32
    %729 = vector.broadcast %cst_109 : f32 to vector<2x32xf32>
    %730 = arith.addf %729, %728 : vector<2x32xf32>
    %731 = arith.divf %729, %730 : vector<2x32xf32>
    %732 = arith.mulf %723, %704 : vector<2x32xf32>
    %733 = arith.mulf %717, %725 : vector<2x32xf32>
    %734 = arith.addf %732, %733 : vector<2x32xf32>
    %735 = math.tanh %734 : vector<2x32xf32>
    %736 = arith.mulf %731, %735 : vector<2x32xf32>
    %737 = vector.extract_strided_slice %495 {offsets = [7, 0, 0], sizes = [1, 2, 256], strides = [1, 1, 1]} : vector<8x2x256xf32> to vector<1x2x256xf32>
    %738 = vector.shape_cast %737 : vector<1x2x256xf32> to vector<2x256xf32>
    %739 = vector.extract_strided_slice %738 {offsets = [0, 128], sizes = [2, 128], strides = [1, 1]} : vector<2x256xf32> to vector<2x128xf32>
    %740 = vector.extract_strided_slice %739 {offsets = [0, 0], sizes = [2, 32], strides = [1, 1]} : vector<2x128xf32> to vector<2x32xf32>
    %741 = arith.negf %740 : vector<2x32xf32>
    %742 = math.exp %741 : vector<2x32xf32>
    %cst_110 = arith.constant 1.000000e+00 : f32
    %743 = vector.broadcast %cst_110 : f32 to vector<2x32xf32>
    %744 = arith.addf %743, %742 : vector<2x32xf32>
    %745 = arith.divf %743, %744 : vector<2x32xf32>
    %746 = vector.extract_strided_slice %739 {offsets = [0, 32], sizes = [2, 32], strides = [1, 1]} : vector<2x128xf32> to vector<2x32xf32>
    %747 = arith.negf %746 : vector<2x32xf32>
    %748 = math.exp %747 : vector<2x32xf32>
    %cst_111 = arith.constant 1.000000e+00 : f32
    %749 = vector.broadcast %cst_111 : f32 to vector<2x32xf32>
    %750 = arith.addf %749, %748 : vector<2x32xf32>
    %751 = arith.divf %749, %750 : vector<2x32xf32>
    %752 = vector.extract_strided_slice %739 {offsets = [0, 64], sizes = [2, 32], strides = [1, 1]} : vector<2x128xf32> to vector<2x32xf32>
    %753 = math.tanh %752 : vector<2x32xf32>
    %754 = vector.extract_strided_slice %739 {offsets = [0, 96], sizes = [2, 32], strides = [1, 1]} : vector<2x128xf32> to vector<2x32xf32>
    %755 = arith.negf %754 : vector<2x32xf32>
    %756 = math.exp %755 : vector<2x32xf32>
    %cst_112 = arith.constant 1.000000e+00 : f32
    %757 = vector.broadcast %cst_112 : f32 to vector<2x32xf32>
    %758 = arith.addf %757, %756 : vector<2x32xf32>
    %759 = arith.divf %757, %758 : vector<2x32xf32>
    %760 = arith.mulf %751, %0 : vector<2x32xf32>
    %761 = arith.mulf %745, %753 : vector<2x32xf32>
    %762 = arith.addf %760, %761 : vector<2x32xf32>
    %763 = math.tanh %762 : vector<2x32xf32>
    %764 = arith.mulf %759, %763 : vector<2x32xf32>
    %c0_113 = arith.constant 0 : index
    %c0_114 = arith.constant 0 : index
    %765 = vector.load %arg6[%c0_113, %c0_114] : memref<64x32xf32, #tpu.memory_space<vmem>>, vector<64x32xf32>
    %766 = vector.extract_strided_slice %765 {offsets = [0, 0], sizes = [32, 32], strides = [1, 1]} : vector<64x32xf32> to vector<32x32xf32>
    %cst_115 = arith.constant dense<0.000000e+00> : vector<2x32xf32>
    %767 = tpu.matmul %736, %766, %cst_115 {dimension_numbers = #tpu.dot_dimension_numbers<[1], [0], [0], [1], [0, 0, 1, 1], [], []>} : vector<2x32xf32>, vector<32x32xf32>, vector<2x32xf32> -> vector<2x32xf32>
    %768 = vector.extract_strided_slice %765 {offsets = [32, 0], sizes = [32, 32], strides = [1, 1]} : vector<64x32xf32> to vector<32x32xf32>
    %cst_116 = arith.constant dense<0.000000e+00> : vector<2x32xf32>
    %769 = tpu.matmul %764, %768, %cst_116 {dimension_numbers = #tpu.dot_dimension_numbers<[1], [0], [0], [1], [0, 0, 1, 1], [], []>} : vector<2x32xf32>, vector<32x32xf32>, vector<2x32xf32> -> vector<2x32xf32>
    %770 = arith.addf %767, %769 : vector<2x32xf32>
    %c0_117 = arith.constant 0 : index
    %c0_118 = arith.constant 0 : index
    %771 = vector.load %arg7[%c0_117, %c0_118] : memref<2x32xf32, #tpu.memory_space<vmem>>, vector<2x32xf32>
    tpu.vector_store %arg7[%c0_117, %c0_118], %770 {strides = array<i32>} : memref<2x32xf32, #tpu.memory_space<vmem>>, vector<2x32xf32>,
    return
  }
}

</mosaic_0001>

<llo_original>
// kernel: doc_forward.1
$region0: #{doc_forward.1}
  #allocation0 [shape = 'u32[]', space=smem, size = 0x4, offset = 0x4, fixed_abs, tag = 'smem constant byte address 0x4 - core index']
  #allocation1 [shape = 'u32[72,128]{1,0:T(1,128)}', space=vmem, size = 0x9000, scoped, tag = 'internal scratch']
  %s0 = inlined_call_operand.vmem [shape: f32[16,8], index: 0, kind: input, shape index: {}]
  %s1 = inlined_call_operand.vmem [shape: f32[8,256], index: 1, kind: input, shape index: {}]
  %s2 = inlined_call_operand.vmem [shape: f32[32,128], index: 2, kind: input, shape index: {}]
  %s3 = inlined_call_operand.vmem [shape: f32[32,128], index: 3, kind: input, shape index: {}]
  %s4 = inlined_call_operand.vmem [shape: f32[64,256], index: 4, kind: input, shape index: {}]
  %s5 = inlined_call_operand.vmem [shape: f32[32,128], index: 5, kind: input, shape index: {}]
  %s6 = inlined_call_operand.vmem [shape: f32[64,32], index: 6, kind: input, shape index: {}]
  %s7 = inlined_call_operand.hbm [shape: f32[2,32], index: 7, kind: output, shape index: {}]
  %s8 = sld [smem:[#allocation0]]
  $region38: #{doc_forward.1} parent=0
    _
  %s10 = ssub.s32 1, %s8
  %s11 = scalar_select 0, %s10, %s8
  $region1: #{doc_forward.1} parent=0
    #allocation2 [shape = 'u8[1024]{0}', space=vmem, size = 0x400, scoped, tag = 'output window, operand 0, single buffered']
    #allocation3 [shape = 's32[1]{0}', space=sflag, size = 0x4, scoped, tag = 'scoped memory for doc_forward.1']
    %12 = vsyncpa [#allocation3], 0
    // Predicated region
    $region2: #{doc_forward.1} parent=1 // pred_check
      _
    $region3: #{doc_forward.1} parent=1 // pred_check_branch
      %14 = sbr.rel (0) target = $region5
    $region4: #{doc_forward.1} parent=1 // pred_region
      _
    $region5: #{doc_forward.1} parent=1 // pred_fallthru
      _
    // Predicated region
    $region6: #{doc_forward.1} parent=1 // pred_check
      _
    $region7: #{doc_forward.1} parent=1 // pred_check_branch
      %16 = sbr.rel (0) target = $region9
    $region8: #{doc_forward.1} parent=1 // pred_region
      _
    $region9: #{doc_forward.1} parent=1 // pred_fallthru
      _
    // Predicated region
    $region10: #{doc_forward.1} parent=1 // pred_check
      _
    $region11: #{doc_forward.1} parent=1 // pred_check_branch
      %18 = sbr.rel (0) target = $region13
    $region12: #{doc_forward.1} parent=1 // pred_region
      _
    $region13: #{doc_forward.1} parent=1 // pred_fallthru
      _
    // Predicated region
    $region14: #{doc_forward.1} parent=1 // pred_check
      _
    $region15: #{doc_forward.1} parent=1 // pred_check_branch
      %20 = sbr.rel (0) target = $region17
    $region16: #{doc_forward.1} parent=1 // pred_region
      _
    $region17: #{doc_forward.1} parent=1 // pred_fallthru
      _
    // Predicated region
    $region18: #{doc_forward.1} parent=1 // pred_check
      _
    $region19: #{doc_forward.1} parent=1 // pred_check_branch
      %22 = sbr.rel (0) target = $region21
    $region20: #{doc_forward.1} parent=1 // pred_region
      _
    $region21: #{doc_forward.1} parent=1 // pred_fallthru
      _
    // Predicated region
    $region22: #{doc_forward.1} parent=1 // pred_check
      _
    $region23: #{doc_forward.1} parent=1 // pred_check_branch
      %24 = sbr.rel (0) target = $region25
    $region24: #{doc_forward.1} parent=1 // pred_region
      _
    $region25: #{doc_forward.1} parent=1 // pred_fallthru
      _
    // Predicated region
    $region26: #{doc_forward.1} parent=1 // pred_check
      _
    $region27: #{doc_forward.1} parent=1 // pred_check_branch
      %26 = sbr.rel (0) target = $region29
    $region28: #{doc_forward.1} parent=1 // pred_region
      _
    $region29: #{doc_forward.1} parent=1 // pred_fallthru
      _
    %v27 = vld [vmem:[%s0] sm:$0xff]
    %v28 = vld [vmem:[%s0 + $0x8] sm:$0xff]
    %v29 = vld [vmem:[%s1] sm:$0xff]
    %v30 = vld [vmem:[%s1 + $0x8] sm:$0xff]
    %vm31 = vcmask 64512
    %v33 = vsel %vm31, %v27, 0
    %v36 = vsel %vm31, %v28, 0
    %38 = vmatpush.msra.mxu0 0.0
    %39 = vmatpush.msra.mxu0 0.0
    %40 = vmatpush.msra.mxu0 0.0
    %41 = vmatpush.msra.mxu0 0.0
    %42 = vmatpush.msra.mxu0 0.0
    %43 = vmatpush.msra.mxu0 0.0
    %44 = vmatpush.msra.mxu0 0.0
    %45 = vmatpush.msra.mxu0 0.0
    %46 = vmatpush.msra.mxu0 0.0
    %47 = vmatpush.msra.mxu0 0.0
    %48 = vmatpush.msra.mxu0 0.0
    %49 = vmatpush.msra.mxu0 0.0
    %50 = vmatpush.msra.mxu0 0.0
    %51 = vmatpush.msra.mxu0 0.0
    %52 = vmatpush.msra.mxu0 0.0
    %53 = vmatpush.msra.mxu0 %v29
    %54 = vmatmul.f32.gmra.mxu0 %v33
    %v55 = vpop.f32.mrf.mxu0
    %v56 = vadd.f32 0.0, %v55
    %57 = vmatmul.f32.gmra.mxu0 %v36
    %v58 = vpop.f32.mrf.mxu0
    %v59 = vadd.f32 0.0, %v58
    %60 = vdwg.mxu0
    %61 = vmatpush.msra.mxu0 0.0
    %62 = vmatpush.msra.mxu0 0.0
    %63 = vmatpush.msra.mxu0 0.0
    %64 = vmatpush.msra.mxu0 0.0
    %65 = vmatpush.msra.mxu0 0.0
    %66 = vmatpush.msra.mxu0 0.0
    %67 = vmatpush.msra.mxu0 0.0
    %68 = vmatpush.msra.mxu0 0.0
    %69 = vmatpush.msra.mxu0 0.0
    %70 = vmatpush.msra.mxu0 0.0
    %71 = vmatpush.msra.mxu0 0.0
    %72 = vmatpush.msra.mxu0 0.0
    %73 = vmatpush.msra.mxu0 0.0
    %74 = vmatpush.msra.mxu0 0.0
    %75 = vmatpush.msra.mxu0 0.0
    %76 = vmatpush.msra.mxu0 %v30
    %77 = vmatmul.f32.gmra.mxu0 %v33
    %v78 = vpop.f32.mrf.mxu0
    %v79 = vadd.f32 0.0, %v78
    %80 = vmatmul.f32.gmra.mxu0 %v36
    %v81 = vpop.f32.mrf.mxu0
    %v82 = vadd.f32 0.0, %v81
    %83 = vdwg.mxu0
    %v88 = vrot.slane %v79, 6
    %v89 = vrot.slane %v82, 6
    %vm90 = vcmask 1041408
    %v91 = vsel %vm90, %v56, %v88
    %vm92 = vcmask 1043458
    %v93 = vsel %vm92, %v56, %v88
    %v94 = vrot.slane %v93, 2
    %vm95 = vcmask 1045508
    %v96 = vsel %vm95, %v56, %v88
    %v97 = vrot.slane %v96, 4
    %vm98 = vcmask 1045504
    %v99 = vsel %vm98, %v88, %v56
    %v100 = vrot.slane %v99, 6
    %v101 = vsel %vm90, %v59, %v89
    %v102 = vsel %vm92, %v59, %v89
    %v103 = vrot.slane %v102, 2
    %v104 = vsel %vm95, %v59, %v89
    %v105 = vrot.slane %v104, 4
    %v106 = vsel %vm98, %v89, %v59
    %v107 = vrot.slane %v106, 6
    %v116 = vld [vmem:[%s2] sm:$0xff]
    %v117 = vld [vmem:[%s2 + $0x8] sm:$0xff]
    %v118 = vld [vmem:[%s2 + $0x10] sm:$0xff]
    %v119 = vld [vmem:[%s2 + $0x18] sm:$0xff]
    %v120 = vld [vmem:[%s3] sm:$0xff]
    %v121 = vld [vmem:[%s3 + $0x8] sm:$0xff]
    %v122 = vld [vmem:[%s3 + $0x10] sm:$0xff]
    %v123 = vld [vmem:[%s3 + $0x18] sm:$0xff]
    %vm124 = vcmask 261120
    %v126 = vsel %vm124, 0.0, 0
    %128 = vmatpush.msra.mxu0 0.0
    %129 = vmatpush.msra.mxu0 0.0
    %130 = vmatpush.msra.mxu0 0.0
    %131 = vmatpush.msra.mxu0 0.0
    %132 = vmatpush.msra.mxu0 0.0
    %133 = vmatpush.msra.mxu0 0.0
    %134 = vmatpush.msra.mxu0 0.0
    %135 = vmatpush.msra.mxu0 0.0
    %136 = vmatpush.msra.mxu0 0.0
    %137 = vmatpush.msra.mxu0 0.0
    %138 = vmatpush.msra.mxu0 0.0
    %139 = vmatpush.msra.mxu0 0.0
    %140 = vmatpush.msra.mxu0 %v119
    %141 = vmatpush.msra.mxu0 %v118
    %142 = vmatpush.msra.mxu0 %v117
    %143 = vmatpush.msra.mxu0 %v116
    %144 = vmatmul.f32.gmra.mxu0 %v126
    %v145 = vpop.f32.mrf.mxu0
    %v146 = vadd.f32 0.0, %v145
    %147 = vdwg.mxu0
    %v148 = vadd.f32 %v91, %v146
    %v149 = vxor.u32 %v148, 2147483648
    %v150 = vmul.f32 %v149, 1.442695
    %v151 = vpow.pop %v150
    %v152 = vadd.f32 %v151, 1.0
    %v153 = vrcp.pop %v152
    %v154 = vmul.f32 %v152, %v153
    %v155 = vsub.f32 1.0, %v154
    %v156 = vmul.f32 %v153, %v155
    %v157 = vadd.f32 %v153, %v156
    %vm158 = vweird.f32 %v152
    %vm159 = vweird.f32 %v153
    %vm160 = vmor %vm158, %vm159
    %v161 = vsel %vm160, %v153, %v157
    %v162 = vand.u32 2147483647, %v152
    %vm163 = vcmp.eq.f32.partialorder %v162, 8.507059e+37
    %v164 = vand.u32 %v152, 2147483648
    %v165 = vor.u32 1.1754944e-38, %v164
    %v166 = vsel %vm163, %v165, %v161
    %v167 = vmul.f32 1.0, %v166
    %v168 = vtanh.pop %v148
    %v169 = vmul.f32 %v167, 0.0
    %171 = vrot.lane.b32.xlu0 %v168, 64
    %v172 = vpop.permute.xlu0 %171
    %v174 = vmul.f32 %v167, %v172
    %176 = vrot.lane.b32.xlu0 %v174, 32
    %v177 = vpop.permute.xlu0 %176
    %v179 = vadd.f32 %v169, %v177
    %v180 = vtanh.pop %v179
    %182 = vrot.lane.b32.xlu0 %v180, 64
    %v183 = vpop.permute.xlu0 %182
    %v185 = vmul.f32 %v167, %v183
    %186 = vmatpush.msra.mxu0 0.0
    %187 = vmatpush.msra.mxu0 0.0
    %188 = vmatpush.msra.mxu0 0.0
    %189 = vmatpush.msra.mxu0 0.0
    %190 = vmatpush.msra.mxu0 0.0
    %191 = vmatpush.msra.mxu0 0.0
    %192 = vmatpush.msra.mxu0 0.0
    %193 = vmatpush.msra.mxu0 0.0
    %194 = vmatpush.msra.mxu0 0.0
    %195 = vmatpush.msra.mxu0 0.0
    %196 = vmatpush.msra.mxu0 0.0
    %197 = vmatpush.msra.mxu0 0.0
    %198 = vmatpush.msra.mxu0 %v123
    %199 = vmatpush.msra.mxu0 %v122
    %200 = vmatpush.msra.mxu0 %v121
    %201 = vmatpush.msra.mxu0 %v120
    %202 = vmatmul.f32.gmra.mxu0 %v126
    %v203 = vpop.f32.mrf.mxu0
    %v204 = vadd.f32 0.0, %v203
    %205 = vdwg.mxu0
    %v206 = vrot.slane %v107, 2
    %v208 = vadd.f32 %v206, %v204
    %v209 = vxor.u32 %v208, 2147483648
    %v210 = vmul.f32 %v209, 1.442695
    %v211 = vpow.pop %v210
    %v212 = vadd.f32 %v211, 1.0
    %v213 = vrcp.pop %v212
    %v214 = vmul.f32 %v212, %v213
    %v215 = vsub.f32 1.0, %v214
    %v216 = vmul.f32 %v213, %v215
    %v217 = vadd.f32 %v213, %v216
    %vm218 = vweird.f32 %v212
    %vm219 = vweird.f32 %v213
    %vm220 = vmor %vm218, %vm219
    %v221 = vsel %vm220, %v213, %v217
    %v222 = vand.u32 2147483647, %v212
    %vm223 = vcmp.eq.f32.partialorder %v222, 8.507059e+37
    %v224 = vand.u32 %v212, 2147483648
    %v225 = vor.u32 1.1754944e-38, %v224
    %v226 = vsel %vm223, %v225, %v221
    %v227 = vmul.f32 1.0, %v226
    %v228 = vtanh.pop %v208
    %v229 = vmul.f32 %v227, 0.0
    %231 = vrot.lane.b32.xlu0 %v228, 64
    %v232 = vpop.permute.xlu0 %231
    %v234 = vmul.f32 %v227, %v232
    %236 = vrot.lane.b32.xlu0 %v234, 32
    %v237 = vpop.permute.xlu0 %236
    %v239 = vadd.f32 %v229, %v237
    %v240 = vtanh.pop %v239
    %242 = vrot.lane.b32.xlu0 %v240, 64
    %v243 = vpop.permute.xlu0 %242
    %v245 = vmul.f32 %v227, %v243
    %247 = vst [vmem:[#allocation1] ss:$4 sm:$0xff] %v185
    %v248 = vld.sshfl [vmem:[#allocation1] sm:$0xff pattern:$0x73625140]
    %249 = vrot.lane.b32.xlu0 %v248, 32
    %v250 = vpop.permute.xlu0 %249
    %v251 = vsel %vm124, %v250, 0
    %253 = vmatpush.msra.mxu0 0.0
    %254 = vmatpush.msra.mxu0 0.0
    %255 = vmatpush.msra.mxu0 0.0
    %256 = vmatpush.msra.mxu0 0.0
    %257 = vmatpush.msra.mxu0 0.0
    %258 = vmatpush.msra.mxu0 0.0
    %259 = vmatpush.msra.mxu0 0.0
    %260 = vmatpush.msra.mxu0 0.0
    %261 = vmatpush.msra.mxu0 0.0
    %262 = vmatpush.msra.mxu0 0.0
    %263 = vmatpush.msra.mxu0 0.0
    %264 = vmatpush.msra.mxu0 0.0
    %265 = vmatpush.msra.mxu0 %v119
    %266 = vmatpush.msra.mxu0 %v118
    %267 = vmatpush.msra.mxu0 %v117
    %268 = vmatpush.msra.mxu0 %v116
    %269 = vmatmul.f32.gmra.mxu0 %v251
    %v270 = vpop.f32.mrf.mxu0
    %v271 = vadd.f32 0.0, %v270
    %272 = vdwg.mxu0
    %v273 = vadd.f32 %v94, %v271
    %v274 = vxor.u32 %v273, 2147483648
    %v275 = vmul.f32 %v274, 1.442695
    %v276 = vpow.pop %v275
    %v277 = vadd.f32 %v276, 1.0
    %v278 = vrcp.pop %v277
    %v279 = vmul.f32 %v277, %v278
    %v280 = vsub.f32 1.0, %v279
    %v281 = vmul.f32 %v278, %v280
    %v282 = vadd.f32 %v278, %v281
    %vm283 = vweird.f32 %v277
    %vm284 = vweird.f32 %v278
    %vm285 = vmor %vm283, %vm284
    %v286 = vsel %vm285, %v278, %v282
    %v287 = vand.u32 2147483647, %v277
    %vm288 = vcmp.eq.f32.partialorder %v287, 8.507059e+37
    %v289 = vand.u32 %v277, 2147483648
    %v290 = vor.u32 1.1754944e-38, %v289
    %v291 = vsel %vm288, %v290, %v286
    %v292 = vmul.f32 1.0, %v291
    %v293 = vtanh.pop %v273
    %v294 = vmul.f32 %v292, %v179
    %296 = vrot.lane.b32.xlu0 %v293, 64
    %v297 = vpop.permute.xlu0 %296
    %v299 = vmul.f32 %v292, %v297
    %301 = vrot.lane.b32.xlu0 %v299, 32
    %v302 = vpop.permute.xlu0 %301
    %v304 = vadd.f32 %v294, %v302
    %v305 = vtanh.pop %v304
    %307 = vrot.lane.b32.xlu0 %v305, 64
    %v308 = vpop.permute.xlu0 %307
    %v310 = vmul.f32 %v292, %v308
    %312 = vst [vmem:[#allocation1] ss:$4 sm:$0xff] %v245
    %v313 = vld.sshfl [vmem:[#allocation1] sm:$0xff pattern:$0x73625140]
    %314 = vrot.lane.b32.xlu0 %v313, 32
    %v315 = vpop.permute.xlu0 %314
    %v316 = vsel %vm124, %v315, 0
    %318 = vmatpush.msra.mxu0 0.0
    %319 = vmatpush.msra.mxu0 0.0
    %320 = vmatpush.msra.mxu0 0.0
    %321 = vmatpush.msra.mxu0 0.0
    %322 = vmatpush.msra.mxu0 0.0
    %323 = vmatpush.msra.mxu0 0.0
    %324 = vmatpush.msra.mxu0 0.0
    %325 = vmatpush.msra.mxu0 0.0
    %326 = vmatpush.msra.mxu0 0.0
    %327 = vmatpush.msra.mxu0 0.0
    %328 = vmatpush.msra.mxu0 0.0
    %329 = vmatpush.msra.mxu0 0.0
    %330 = vmatpush.msra.mxu0 %v123
    %331 = vmatpush.msra.mxu0 %v122
    %332 = vmatpush.msra.mxu0 %v121
    %333 = vmatpush.msra.mxu0 %v120
    %334 = vmatmul.f32.gmra.mxu0 %v316
    %v335 = vpop.f32.mrf.mxu0
    %v336 = vadd.f32 0.0, %v335
    %337 = vdwg.mxu0
    %v338 = vrot.slane %v105, 2
    %v340 = vadd.f32 %v338, %v336
    %v341 = vxor.u32 %v340, 2147483648
    %v342 = vmul.f32 %v341, 1.442695
    %v343 = vpow.pop %v342
    %v344 = vadd.f32 %v343, 1.0
    %v345 = vrcp.pop %v344
    %v346 = vmul.f32 %v344, %v345
    %v347 = vsub.f32 1.0, %v346
    %v348 = vmul.f32 %v345, %v347
    %v349 = vadd.f32 %v345, %v348
    %vm350 = vweird.f32 %v344
    %vm351 = vweird.f32 %v345
    %vm352 = vmor %vm350, %vm351
    %v353 = vsel %vm352, %v345, %v349
    %v354 = vand.u32 2147483647, %v344
    %vm355 = vcmp.eq.f32.partialorder %v354, 8.507059e+37
    %v356 = vand.u32 %v344, 2147483648
    %v357 = vor.u32 1.1754944e-38, %v356
    %v358 = vsel %vm355, %v357, %v353
    %v359 = vmul.f32 1.0, %v358
    %v360 = vtanh.pop %v340
    %v361 = vmul.f32 %v359, %v239
    %363 = vrot.lane.b32.xlu0 %v360, 64
    %v364 = vpop.permute.xlu0 %363
    %v366 = vmul.f32 %v359, %v364
    %368 = vrot.lane.b32.xlu0 %v366, 32
    %v369 = vpop.permute.xlu0 %368
    %v371 = vadd.f32 %v361, %v369
    %v372 = vtanh.pop %v371
    %374 = vrot.lane.b32.xlu0 %v372, 64
    %v375 = vpop.permute.xlu0 %374
    %v377 = vmul.f32 %v359, %v375
    %379 = vst [vmem:[#allocation1] ss:$4 sm:$0xff] %v310
    %v380 = vld.sshfl [vmem:[#allocation1] sm:$0xff pattern:$0x73625140]
    %381 = vrot.lane.b32.xlu0 %v380, 32
    %v382 = vpop.permute.xlu0 %381
    %v383 = vsel %vm124, %v382, 0
    %385 = vmatpush.msra.mxu0 0.0
    %386 = vmatpush.msra.mxu0 0.0
    %387 = vmatpush.msra.mxu0 0.0
    %388 = vmatpush.msra.mxu0 0.0
    %389 = vmatpush.msra.mxu0 0.0
    %390 = vmatpush.msra.mxu0 0.0
    %391 = vmatpush.msra.mxu0 0.0
    %392 = vmatpush.msra.mxu0 0.0
    %393 = vmatpush.msra.mxu0 0.0
    %394 = vmatpush.msra.mxu0 0.0
    %395 = vmatpush.msra.mxu0 0.0
    %396 = vmatpush.msra.mxu0 0.0
    %397 = vmatpush.msra.mxu0 %v119
    %398 = vmatpush.msra.mxu0 %v118
    %399 = vmatpush.msra.mxu0 %v117
    %400 = vmatpush.msra.mxu0 %v116
    %401 = vmatmul.f32.gmra.mxu0 %v383
    %v402 = vpop.f32.mrf.mxu0
    %v403 = vadd.f32 0.0, %v402
    %404 = vdwg.mxu0
    %v405 = vadd.f32 %v97, %v403
    %v406 = vxor.u32 %v405, 2147483648
    %v407 = vmul.f32 %v406, 1.442695
    %v408 = vpow.pop %v407
    %v409 = vadd.f32 %v408, 1.0
    %v410 = vrcp.pop %v409
    %v411 = vmul.f32 %v409, %v410
    %v412 = vsub.f32 1.0, %v411
    %v413 = vmul.f32 %v410, %v412
    %v414 = vadd.f32 %v410, %v413
    %vm415 = vweird.f32 %v409
    %vm416 = vweird.f32 %v410
    %vm417 = vmor %vm415, %vm416
    %v418 = vsel %vm417, %v410, %v414
    %v419 = vand.u32 2147483647, %v409
    %vm420 = vcmp.eq.f32.partialorder %v419, 8.507059e+37
    %v421 = vand.u32 %v409, 2147483648
    %v422 = vor.u32 1.1754944e-38, %v421
    %v423 = vsel %vm420, %v422, %v418
    %v424 = vmul.f32 1.0, %v423
    %v425 = vtanh.pop %v405
    %v426 = vmul.f32 %v424, %v304
    %428 = vrot.lane.b32.xlu0 %v425, 64
    %v429 = vpop.permute.xlu0 %428
    %v431 = vmul.f32 %v424, %v429
    %433 = vrot.lane.b32.xlu0 %v431, 32
    %v434 = vpop.permute.xlu0 %433
    %v436 = vadd.f32 %v426, %v434
    %v437 = vtanh.pop %v436
    %439 = vrot.lane.b32.xlu0 %v437, 64
    %v440 = vpop.permute.xlu0 %439
    %v442 = vmul.f32 %v424, %v440
    %444 = vst [vmem:[#allocation1] ss:$4 sm:$0xff] %v377
    %v445 = vld.sshfl [vmem:[#allocation1] sm:$0xff pattern:$0x73625140]
    %446 = vrot.lane.b32.xlu0 %v445, 32
    %v447 = vpop.permute.xlu0 %446
    %v448 = vsel %vm124, %v447, 0
    %450 = vmatpush.msra.mxu0 0.0
    %451 = vmatpush.msra.mxu0 0.0
    %452 = vmatpush.msra.mxu0 0.0
    %453 = vmatpush.msra.mxu0 0.0
    %454 = vmatpush.msra.mxu0 0.0
    %455 = vmatpush.msra.mxu0 0.0
    %456 = vmatpush.msra.mxu0 0.0
    %457 = vmatpush.msra.mxu0 0.0
    %458 = vmatpush.msra.mxu0 0.0
    %459 = vmatpush.msra.mxu0 0.0
    %460 = vmatpush.msra.mxu0 0.0
    %461 = vmatpush.msra.mxu0 0.0
    %462 = vmatpush.msra.mxu0 %v123
    %463 = vmatpush.msra.mxu0 %v122
    %464 = vmatpush.msra.mxu0 %v121
    %465 = vmatpush.msra.mxu0 %v120
    %466 = vmatmul.f32.gmra.mxu0 %v448
    %v467 = vpop.f32.mrf.mxu0
    %v468 = vadd.f32 0.0, %v467
    %469 = vdwg.mxu0
    %v470 = vrot.slane %v103, 2
    %v472 = vadd.f32 %v470, %v468
    %v473 = vxor.u32 %v472, 2147483648
    %v474 = vmul.f32 %v473, 1.442695
    %v475 = vpow.pop %v474
    %v476 = vadd.f32 %v475, 1.0
    %v477 = vrcp.pop %v476
    %v478 = vmul.f32 %v476, %v477
    %v479 = vsub.f32 1.0, %v478
    %v480 = vmul.f32 %v477, %v479
    %v481 = vadd.f32 %v477, %v480
    %vm482 = vweird.f32 %v476
    %vm483 = vweird.f32 %v477
    %vm484 = vmor %vm482, %vm483
    %v485 = vsel %vm484, %v477, %v481
    %v486 = vand.u32 2147483647, %v476
    %vm487 = vcmp.eq.f32.partialorder %v486, 8.507059e+37
    %v488 = vand.u32 %v476, 2147483648
    %v489 = vor.u32 1.1754944e-38, %v488
    %v490 = vsel %vm487, %v489, %v485
    %v491 = vmul.f32 1.0, %v490
    %v492 = vtanh.pop %v472
    %v493 = vmul.f32 %v491, %v371
    %495 = vrot.lane.b32.xlu0 %v492, 64
    %v496 = vpop.permute.xlu0 %495
    %v498 = vmul.f32 %v491, %v496
    %500 = vrot.lane.b32.xlu0 %v498, 32
    %v501 = vpop.permute.xlu0 %500
    %v503 = vadd.f32 %v493, %v501
    %v504 = vtanh.pop %v503
    %506 = vrot.lane.b32.xlu0 %v504, 64
    %v507 = vpop.permute.xlu0 %506
    %v509 = vmul.f32 %v491, %v507
    %511 = vst [vmem:[#allocation1] ss:$4 sm:$0xff] %v442
    %v512 = vld.sshfl [vmem:[#allocation1] sm:$0xff pattern:$0x73625140]
    %513 = vrot.lane.b32.xlu0 %v512, 32
    %v514 = vpop.permute.xlu0 %513
    %v515 = vsel %vm124, %v514, 0
    %517 = vmatpush.msra.mxu0 0.0
    %518 = vmatpush.msra.mxu0 0.0
    %519 = vmatpush.msra.mxu0 0.0
    %520 = vmatpush.msra.mxu0 0.0
    %521 = vmatpush.msra.mxu0 0.0
    %522 = vmatpush.msra.mxu0 0.0
    %523 = vmatpush.msra.mxu0 0.0
    %524 = vmatpush.msra.mxu0 0.0
    %525 = vmatpush.msra.mxu0 0.0
    %526 = vmatpush.msra.mxu0 0.0
    %527 = vmatpush.msra.mxu0 0.0
    %528 = vmatpush.msra.mxu0 0.0
    %529 = vmatpush.msra.mxu0 %v119
    %530 = vmatpush.msra.mxu0 %v118
    %531 = vmatpush.msra.mxu0 %v117
    %532 = vmatpush.msra.mxu0 %v116
    %533 = vmatmul.f32.gmra.mxu0 %v515
    %v534 = vpop.f32.mrf.mxu0
    %v535 = vadd.f32 0.0, %v534
    %536 = vdwg.mxu0
    %v537 = vadd.f32 %v100, %v535
    %v538 = vxor.u32 %v537, 2147483648
    %v539 = vmul.f32 %v538, 1.442695
    %v540 = vpow.pop %v539
    %v541 = vadd.f32 %v540, 1.0
    %v542 = vrcp.pop %v541
    %v543 = vmul.f32 %v541, %v542
    %v544 = vsub.f32 1.0, %v543
    %v545 = vmul.f32 %v542, %v544
    %v546 = vadd.f32 %v542, %v545
    %vm547 = vweird.f32 %v541
    %vm548 = vweird.f32 %v542
    %vm549 = vmor %vm547, %vm548
    %v550 = vsel %vm549, %v542, %v546
    %v551 = vand.u32 2147483647, %v541
    %vm552 = vcmp.eq.f32.partialorder %v551, 8.507059e+37
    %v553 = vand.u32 %v541, 2147483648
    %v554 = vor.u32 1.1754944e-38, %v553
    %v555 = vsel %vm552, %v554, %v550
    %v556 = vmul.f32 1.0, %v555
    %v557 = vtanh.pop %v537
    %v558 = vmul.f32 %v556, %v436
    %560 = vrot.lane.b32.xlu0 %v557, 64
    %v561 = vpop.permute.xlu0 %560
    %v563 = vmul.f32 %v556, %v561
    %565 = vrot.lane.b32.xlu0 %v563, 32
    %v566 = vpop.permute.xlu0 %565
    %v568 = vadd.f32 %v558, %v566
    %v569 = vtanh.pop %v568
    %571 = vrot.lane.b32.xlu0 %v569, 64
    %v572 = vpop.permute.xlu0 %571
    %v574 = vmul.f32 %v556, %v572
    %576 = vst [vmem:[#allocation1] ss:$4 sm:$0xff] %v509
    %v577 = vld.sshfl [vmem:[#allocation1] sm:$0xff pattern:$0x73625140]
    %578 = vrot.lane.b32.xlu0 %v577, 32
    %v579 = vpop.permute.xlu0 %578
    %v580 = vsel %vm124, %v579, 0
    %582 = vmatpush.msra.mxu0 0.0
    %583 = vmatpush.msra.mxu0 0.0
    %584 = vmatpush.msra.mxu0 0.0
    %585 = vmatpush.msra.mxu0 0.0
    %586 = vmatpush.msra.mxu0 0.0
    %587 = vmatpush.msra.mxu0 0.0
    %588 = vmatpush.msra.mxu0 0.0
    %589 = vmatpush.msra.mxu0 0.0
    %590 = vmatpush.msra.mxu0 0.0
    %591 = vmatpush.msra.mxu0 0.0
    %592 = vmatpush.msra.mxu0 0.0
    %593 = vmatpush.msra.mxu0 0.0
    %594 = vmatpush.msra.mxu0 %v123
    %595 = vmatpush.msra.mxu0 %v122
    %596 = vmatpush.msra.mxu0 %v121
    %597 = vmatpush.msra.mxu0 %v120
    %598 = vmatmul.f32.gmra.mxu0 %v580
    %v599 = vpop.f32.mrf.mxu0
    %v600 = vadd.f32 0.0, %v599
    %601 = vdwg.mxu0
    %v602 = vrot.slane %v101, 2
    %v604 = vadd.f32 %v602, %v600
    %v605 = vxor.u32 %v604, 2147483648
    %v606 = vmul.f32 %v605, 1.442695
    %v607 = vpow.pop %v606
    %v608 = vadd.f32 %v607, 1.0
    %v609 = vrcp.pop %v608
    %v610 = vmul.f32 %v608, %v609
    %v611 = vsub.f32 1.0, %v610
    %v612 = vmul.f32 %v609, %v611
    %v613 = vadd.f32 %v609, %v612
    %vm614 = vweird.f32 %v608
    %vm615 = vweird.f32 %v609
    %vm616 = vmor %vm614, %vm615
    %v617 = vsel %vm616, %v609, %v613
    %v618 = vand.u32 2147483647, %v608
    %vm619 = vcmp.eq.f32.partialorder %v618, 8.507059e+37
    %v620 = vand.u32 %v608, 2147483648
    %v621 = vor.u32 1.1754944e-38, %v620
    %v622 = vsel %vm619, %v621, %v617
    %v623 = vmul.f32 1.0, %v622
    %v624 = vtanh.pop %v604
    %v625 = vmul.f32 %v623, %v503
    %627 = vrot.lane.b32.xlu0 %v624, 64
    %v628 = vpop.permute.xlu0 %627
    %v630 = vmul.f32 %v623, %v628
    %632 = vrot.lane.b32.xlu0 %v630, 32
    %v633 = vpop.permute.xlu0 %632
    %v635 = vadd.f32 %v625, %v633
    %v636 = vtanh.pop %v635
    %638 = vrot.lane.b32.xlu0 %v636, 64
    %v639 = vpop.permute.xlu0 %638
    %v641 = vmul.f32 %v623, %v639
    %643 = vst [vmem:[#allocation1] ss:$4 sm:$0xff] %v574
    %v644 = vld.sshfl [vmem:[#allocation1] sm:$0xff pattern:$0x73625140]
    %645 = vrot.lane.b32.xlu0 %v644, 32
    %v646 = vpop.permute.xlu0 %645
    %v647 = vsel %vm124, %v646, 0
    %649 = vmatpush.msra.mxu0 0.0
    %650 = vmatpush.msra.mxu0 0.0
    %651 = vmatpush.msra.mxu0 0.0
    %652 = vmatpush.msra.mxu0 0.0
    %653 = vmatpush.msra.mxu0 0.0
    %654 = vmatpush.msra.mxu0 0.0
    %655 = vmatpush.msra.mxu0 0.0
    %656 = vmatpush.msra.mxu0 0.0
    %657 = vmatpush.msra.mxu0 0.0
    %658 = vmatpush.msra.mxu0 0.0
    %659 = vmatpush.msra.mxu0 0.0
    %660 = vmatpush.msra.mxu0 0.0
    %661 = vmatpush.msra.mxu0 %v119
    %662 = vmatpush.msra.mxu0 %v118
    %663 = vmatpush.msra.mxu0 %v117
    %664 = vmatpush.msra.mxu0 %v116
    %665 = vmatmul.f32.gmra.mxu0 %v647
    %v666 = vpop.f32.mrf.mxu0
    %v667 = vadd.f32 0.0, %v666
    %668 = vdwg.mxu0
    %v669 = vadd.f32 %v101, %v667
    %v670 = vxor.u32 %v669, 2147483648
    %v671 = vmul.f32 %v670, 1.442695
    %v672 = vpow.pop %v671
    %v673 = vadd.f32 %v672, 1.0
    %v674 = vrcp.pop %v673
    %v675 = vmul.f32 %v673, %v674
    %v676 = vsub.f32 1.0, %v675
    %v677 = vmul.f32 %v674, %v676
    %v678 = vadd.f32 %v674, %v677
    %vm679 = vweird.f32 %v673
    %vm680 = vweird.f32 %v674
    %vm681 = vmor %vm679, %vm680
    %v682 = vsel %vm681, %v674, %v678
    %v683 = vand.u32 2147483647, %v673
    %vm684 = vcmp.eq.f32.partialorder %v683, 8.507059e+37
    %v685 = vand.u32 %v673, 2147483648
    %v686 = vor.u32 1.1754944e-38, %v685
    %v687 = vsel %vm684, %v686, %v682
    %v688 = vmul.f32 1.0, %v687
    %v689 = vtanh.pop %v669
    %v690 = vmul.f32 %v688, %v568
    %692 = vrot.lane.b32.xlu0 %v689, 64
    %v693 = vpop.permute.xlu0 %692
    %v695 = vmul.f32 %v688, %v693
    %697 = vrot.lane.b32.xlu0 %v695, 32
    %v698 = vpop.permute.xlu0 %697
    %v700 = vadd.f32 %v690, %v698
    %v701 = vtanh.pop %v700
    %703 = vrot.lane.b32.xlu0 %v701, 64
    %v704 = vpop.permute.xlu0 %703
    %v706 = vmul.f32 %v688, %v704
    %708 = vst [vmem:[#allocation1] ss:$4 sm:$0xff] %v641
    %v709 = vld.sshfl [vmem:[#allocation1] sm:$0xff pattern:$0x73625140]
    %710 = vrot.lane.b32.xlu0 %v709, 32
    %v711 = vpop.permute.xlu0 %710
    %v712 = vsel %vm124, %v711, 0
    %714 = vmatpush.msra.mxu0 0.0
    %715 = vmatpush.msra.mxu0 0.0
    %716 = vmatpush.msra.mxu0 0.0
    %717 = vmatpush.msra.mxu0 0.0
    %718 = vmatpush.msra.mxu0 0.0
    %719 = vmatpush.msra.mxu0 0.0
    %720 = vmatpush.msra.mxu0 0.0
    %721 = vmatpush.msra.mxu0 0.0
    %722 = vmatpush.msra.mxu0 0.0
    %723 = vmatpush.msra.mxu0 0.0
    %724 = vmatpush.msra.mxu0 0.0
    %725 = vmatpush.msra.mxu0 0.0
    %726 = vmatpush.msra.mxu0 %v123
    %727 = vmatpush.msra.mxu0 %v122
    %728 = vmatpush.msra.mxu0 %v121
    %729 = vmatpush.msra.mxu0 %v120
    %730 = vmatmul.f32.gmra.mxu0 %v712
    %v731 = vpop.f32.mrf.mxu0
    %v732 = vadd.f32 0.0, %v731
    %733 = vdwg.mxu0
    %v734 = vrot.slane %v100, 2
    %v736 = vadd.f32 %v734, %v732
    %v737 = vxor.u32 %v736, 2147483648
    %v738 = vmul.f32 %v737, 1.442695
    %v739 = vpow.pop %v738
    %v740 = vadd.f32 %v739, 1.0
    %v741 = vrcp.pop %v740
    %v742 = vmul.f32 %v740, %v741
    %v743 = vsub.f32 1.0, %v742
    %v744 = vmul.f32 %v741, %v743
    %v745 = vadd.f32 %v741, %v744
    %vm746 = vweird.f32 %v740
    %vm747 = vweird.f32 %v741
    %vm748 = vmor %vm746, %vm747
    %v749 = vsel %vm748, %v741, %v745
    %v750 = vand.u32 2147483647, %v740
    %vm751 = vcmp.eq.f32.partialorder %v750, 8.507059e+37
    %v752 = vand.u32 %v740, 2147483648
    %v753 = vor.u32 1.1754944e-38, %v752
    %v754 = vsel %vm751, %v753, %v749
    %v755 = vmul.f32 1.0, %v754
    %v756 = vtanh.pop %v736
    %v757 = vmul.f32 %v755, %v635
    %759 = vrot.lane.b32.xlu0 %v756, 64
    %v760 = vpop.permute.xlu0 %759
    %v762 = vmul.f32 %v755, %v760
    %764 = vrot.lane.b32.xlu0 %v762, 32
    %v765 = vpop.permute.xlu0 %764
    %v767 = vadd.f32 %v757, %v765
    %v768 = vtanh.pop %v767
    %770 = vrot.lane.b32.xlu0 %v768, 64
    %v771 = vpop.permute.xlu0 %770
    %v773 = vmul.f32 %v755, %v771
    %775 = vst [vmem:[#allocation1] ss:$4 sm:$0xff] %v706
    %v776 = vld.sshfl [vmem:[#allocation1] sm:$0xff pattern:$0x73625140]
    %777 = vrot.lane.b32.xlu0 %v776, 32
    %v778 = vpop.permute.xlu0 %777
    %v779 = vsel %vm124, %v778, 0
    %781 = vmatpush.msra.mxu0 0.0
    %782 = vmatpush.msra.mxu0 0.0
    %783 = vmatpush.msra.mxu0 0.0
    %784 = vmatpush.msra.mxu0 0.0
    %785 = vmatpush.msra.mxu0 0.0
    %786 = vmatpush.msra.mxu0 0.0
    %787 = vmatpush.msra.mxu0 0.0
    %788 = vmatpush.msra.mxu0 0.0
    %789 = vmatpush.msra.mxu0 0.0
    %790 = vmatpush.msra.mxu0 0.0
    %791 = vmatpush.msra.mxu0 0.0
    %792 = vmatpush.msra.mxu0 0.0
    %793 = vmatpush.msra.mxu0 %v119
    %794 = vmatpush.msra.mxu0 %v118
    %795 = vmatpush.msra.mxu0 %v117
    %796 = vmatpush.msra.mxu0 %v116
    %797 = vmatmul.f32.gmra.mxu0 %v779
    %v798 = vpop.f32.mrf.mxu0
    %v799 = vadd.f32 0.0, %v798
    %800 = vdwg.mxu0
    %v801 = vadd.f32 %v103, %v799
    %v802 = vxor.u32 %v801, 2147483648
    %v803 = vmul.f32 %v802, 1.442695
    %v804 = vpow.pop %v803
    %v805 = vadd.f32 %v804, 1.0
    %v806 = vrcp.pop %v805
    %v807 = vmul.f32 %v805, %v806
    %v808 = vsub.f32 1.0, %v807
    %v809 = vmul.f32 %v806, %v808
    %v810 = vadd.f32 %v806, %v809
    %vm811 = vweird.f32 %v805
    %vm812 = vweird.f32 %v806
    %vm813 = vmor %vm811, %vm812
    %v814 = vsel %vm813, %v806, %v810
    %v815 = vand.u32 2147483647, %v805
    %vm816 = vcmp.eq.f32.partialorder %v815, 8.507059e+37
    %v817 = vand.u32 %v805, 2147483648
    %v818 = vor.u32 1.1754944e-38, %v817
    %v819 = vsel %vm816, %v818, %v814
    %v820 = vmul.f32 1.0, %v819
    %v821 = vtanh.pop %v801
    %v822 = vmul.f32 %v820, %v700
    %824 = vrot.lane.b32.xlu0 %v821, 64
    %v825 = vpop.permute.xlu0 %824
    %v827 = vmul.f32 %v820, %v825
    %829 = vrot.lane.b32.xlu0 %v827, 32
    %v830 = vpop.permute.xlu0 %829
    %v832 = vadd.f32 %v822, %v830
    %v833 = vtanh.pop %v832
    %835 = vrot.lane.b32.xlu0 %v833, 64
    %v836 = vpop.permute.xlu0 %835
    %v838 = vmul.f32 %v820, %v836
    %840 = vst [vmem:[#allocation1] ss:$4 sm:$0xff] %v773
    %v841 = vld.sshfl [vmem:[#allocation1] sm:$0xff pattern:$0x73625140]
    %842 = vrot.lane.b32.xlu0 %v841, 32
    %v843 = vpop.permute.xlu0 %842
    %v844 = vsel %vm124, %v843, 0
    %846 = vmatpush.msra.mxu0 0.0
    %847 = vmatpush.msra.mxu0 0.0
    %848 = vmatpush.msra.mxu0 0.0
    %849 = vmatpush.msra.mxu0 0.0
    %850 = vmatpush.msra.mxu0 0.0
    %851 = vmatpush.msra.mxu0 0.0
    %852 = vmatpush.msra.mxu0 0.0
    %853 = vmatpush.msra.mxu0 0.0
    %854 = vmatpush.msra.mxu0 0.0
    %855 = vmatpush.msra.mxu0 0.0
    %856 = vmatpush.msra.mxu0 0.0
    %857 = vmatpush.msra.mxu0 0.0
    %858 = vmatpush.msra.mxu0 %v123
    %859 = vmatpush.msra.mxu0 %v122
    %860 = vmatpush.msra.mxu0 %v121
    %861 = vmatpush.msra.mxu0 %v120
    %862 = vmatmul.f32.gmra.mxu0 %v844
    %v863 = vpop.f32.mrf.mxu0
    %v864 = vadd.f32 0.0, %v863
    %865 = vdwg.mxu0
    %v866 = vrot.slane %v97, 2
    %v868 = vadd.f32 %v866, %v864
    %v869 = vxor.u32 %v868, 2147483648
    %v870 = vmul.f32 %v869, 1.442695
    %v871 = vpow.pop %v870
    %v872 = vadd.f32 %v871, 1.0
    %v873 = vrcp.pop %v872
    %v874 = vmul.f32 %v872, %v873
    %v875 = vsub.f32 1.0, %v874
    %v876 = vmul.f32 %v873, %v875
    %v877 = vadd.f32 %v873, %v876
    %vm878 = vweird.f32 %v872
    %vm879 = vweird.f32 %v873
    %vm880 = vmor %vm878, %vm879
    %v881 = vsel %vm880, %v873, %v877
    %v882 = vand.u32 2147483647, %v872
    %vm883 = vcmp.eq.f32.partialorder %v882, 8.507059e+37
    %v884 = vand.u32 %v872, 2147483648
    %v885 = vor.u32 1.1754944e-38, %v884
    %v886 = vsel %vm883, %v885, %v881
    %v887 = vmul.f32 1.0, %v886
    %v888 = vtanh.pop %v868
    %v889 = vmul.f32 %v887, %v767
    %891 = vrot.lane.b32.xlu0 %v888, 64
    %v892 = vpop.permute.xlu0 %891
    %v894 = vmul.f32 %v887, %v892
    %896 = vrot.lane.b32.xlu0 %v894, 32
    %v897 = vpop.permute.xlu0 %896
    %v899 = vadd.f32 %v889, %v897
    %v900 = vtanh.pop %v899
    %902 = vrot.lane.b32.xlu0 %v900, 64
    %v903 = vpop.permute.xlu0 %902
    %v905 = vmul.f32 %v887, %v903
    %907 = vst [vmem:[#allocation1] ss:$4 sm:$0xff] %v838
    %v908 = vld.sshfl [vmem:[#allocation1] sm:$0xff pattern:$0x73625140]
    %909 = vrot.lane.b32.xlu0 %v908, 32
    %v910 = vpop.permute.xlu0 %909
    %v911 = vsel %vm124, %v910, 0
    %913 = vmatpush.msra.mxu0 0.0
    %914 = vmatpush.msra.mxu0 0.0
    %915 = vmatpush.msra.mxu0 0.0
    %916 = vmatpush.msra.mxu0 0.0
    %917 = vmatpush.msra.mxu0 0.0
    %918 = vmatpush.msra.mxu0 0.0
    %919 = vmatpush.msra.mxu0 0.0
    %920 = vmatpush.msra.mxu0 0.0
    %921 = vmatpush.msra.mxu0 0.0
    %922 = vmatpush.msra.mxu0 0.0
    %923 = vmatpush.msra.mxu0 0.0
    %924 = vmatpush.msra.mxu0 0.0
    %925 = vmatpush.msra.mxu0 %v119
    %926 = vmatpush.msra.mxu0 %v118
    %927 = vmatpush.msra.mxu0 %v117
    %928 = vmatpush.msra.mxu0 %v116
    %929 = vmatmul.f32.gmra.mxu0 %v911
    %v930 = vpop.f32.mrf.mxu0
    %v931 = vadd.f32 0.0, %v930
    %932 = vdwg.mxu0
    %v933 = vadd.f32 %v105, %v931
    %v934 = vxor.u32 %v933, 2147483648
    %v935 = vmul.f32 %v934, 1.442695
    %v936 = vpow.pop %v935
    %v937 = vadd.f32 %v936, 1.0
    %v938 = vrcp.pop %v937
    %v939 = vmul.f32 %v937, %v938
    %v940 = vsub.f32 1.0, %v939
    %v941 = vmul.f32 %v938, %v940
    %v942 = vadd.f32 %v938, %v941
    %vm943 = vweird.f32 %v937
    %vm944 = vweird.f32 %v938
    %vm945 = vmor %vm943, %vm944
    %v946 = vsel %vm945, %v938, %v942
    %v947 = vand.u32 2147483647, %v937
    %vm948 = vcmp.eq.f32.partialorder %v947, 8.507059e+37
    %v949 = vand.u32 %v937, 2147483648
    %v950 = vor.u32 1.1754944e-38, %v949
    %v951 = vsel %vm948, %v950, %v946
    %v952 = vmul.f32 1.0, %v951
    %v953 = vtanh.pop %v933
    %v954 = vmul.f32 %v952, %v832
    %956 = vrot.lane.b32.xlu0 %v953, 64
    %v957 = vpop.permute.xlu0 %956
    %v959 = vmul.f32 %v952, %v957
    %961 = vrot.lane.b32.xlu0 %v959, 32
    %v962 = vpop.permute.xlu0 %961
    %v964 = vadd.f32 %v954, %v962
    %v965 = vtanh.pop %v964
    %967 = vrot.lane.b32.xlu0 %v965, 64
    %v968 = vpop.permute.xlu0 %967
    %v970 = vmul.f32 %v952, %v968
    %972 = vst [vmem:[#allocation1] ss:$4 sm:$0xff] %v905
    %v973 = vld.sshfl [vmem:[#allocation1] sm:$0xff pattern:$0x73625140]
    %974 = vrot.lane.b32.xlu0 %v973, 32
    %v975 = vpop.permute.xlu0 %974
    %v976 = vsel %vm124, %v975, 0
    %978 = vmatpush.msra.mxu0 0.0
    %979 = vmatpush.msra.mxu0 0.0
    %980 = vmatpush.msra.mxu0 0.0
    %981 = vmatpush.msra.mxu0 0.0
    %982 = vmatpush.msra.mxu0 0.0
    %983 = vmatpush.msra.mxu0 0.0
    %984 = vmatpush.msra.mxu0 0.0
    %985 = vmatpush.msra.mxu0 0.0
    %986 = vmatpush.msra.mxu0 0.0
    %987 = vmatpush.msra.mxu0 0.0
    %988 = vmatpush.msra.mxu0 0.0
    %989 = vmatpush.msra.mxu0 0.0
    %990 = vmatpush.msra.mxu0 %v123
    %991 = vmatpush.msra.mxu0 %v122
    %992 = vmatpush.msra.mxu0 %v121
    %993 = vmatpush.msra.mxu0 %v120
    %994 = vmatmul.f32.gmra.mxu0 %v976
    %v995 = vpop.f32.mrf.mxu0
    %v996 = vadd.f32 0.0, %v995
    %997 = vdwg.mxu0
    %v998 = vrot.slane %v94, 2
    %v1000 = vadd.f32 %v998, %v996
    %v1001 = vxor.u32 %v1000, 2147483648
    %v1002 = vmul.f32 %v1001, 1.442695
    %v1003 = vpow.pop %v1002
    %v1004 = vadd.f32 %v1003, 1.0
    %v1005 = vrcp.pop %v1004
    %v1006 = vmul.f32 %v1004, %v1005
    %v1007 = vsub.f32 1.0, %v1006
    %v1008 = vmul.f32 %v1005, %v1007
    %v1009 = vadd.f32 %v1005, %v1008
    %vm1010 = vweird.f32 %v1004
    %vm1011 = vweird.f32 %v1005
    %vm1012 = vmor %vm1010, %vm1011
    %v1013 = vsel %vm1012, %v1005, %v1009
    %v1014 = vand.u32 2147483647, %v1004
    %vm1015 = vcmp.eq.f32.partialorder %v1014, 8.507059e+37
    %v1016 = vand.u32 %v1004, 2147483648
    %v1017 = vor.u32 1.1754944e-38, %v1016
    %v1018 = vsel %vm1015, %v1017, %v1013
    %v1019 = vmul.f32 1.0, %v1018
    %v1020 = vtanh.pop %v1000
    %v1021 = vmul.f32 %v1019, %v899
    %1023 = vrot.lane.b32.xlu0 %v1020, 64
    %v1024 = vpop.permute.xlu0 %1023
    %v1026 = vmul.f32 %v1019, %v1024
    %1028 = vrot.lane.b32.xlu0 %v1026, 32
    %v1029 = vpop.permute.xlu0 %1028
    %v1031 = vadd.f32 %v1021, %v1029
    %v1032 = vtanh.pop %v1031
    %1034 = vrot.lane.b32.xlu0 %v1032, 64
    %v1035 = vpop.permute.xlu0 %1034
    %v1037 = vmul.f32 %v1019, %v1035
    %1039 = vst [vmem:[#allocation1] ss:$4 sm:$0xff] %v970
    %v1040 = vld.sshfl [vmem:[#allocation1] sm:$0xff pattern:$0x73625140]
    %1041 = vrot.lane.b32.xlu0 %v1040, 32
    %v1042 = vpop.permute.xlu0 %1041
    %v1043 = vsel %vm124, %v1042, 0
    %1045 = vmatpush.msra.mxu0 0.0
    %1046 = vmatpush.msra.mxu0 0.0
    %1047 = vmatpush.msra.mxu0 0.0
    %1048 = vmatpush.msra.mxu0 0.0
    %1049 = vmatpush.msra.mxu0 0.0
    %1050 = vmatpush.msra.mxu0 0.0
    %1051 = vmatpush.msra.mxu0 0.0
    %1052 = vmatpush.msra.mxu0 0.0
    %1053 = vmatpush.msra.mxu0 0.0
    %1054 = vmatpush.msra.mxu0 0.0
    %1055 = vmatpush.msra.mxu0 0.0
    %1056 = vmatpush.msra.mxu0 0.0
    %1057 = vmatpush.msra.mxu0 %v119
    %1058 = vmatpush.msra.mxu0 %v118
    %1059 = vmatpush.msra.mxu0 %v117
    %1060 = vmatpush.msra.mxu0 %v116
    %1061 = vmatmul.f32.gmra.mxu0 %v1043
    %v1062 = vpop.f32.mrf.mxu0
    %v1063 = vadd.f32 0.0, %v1062
    %1064 = vdwg.mxu0
    %v1065 = vadd.f32 %v107, %v1063
    %v1066 = vxor.u32 %v1065, 2147483648
    %v1067 = vmul.f32 %v1066, 1.442695
    %v1068 = vpow.pop %v1067
    %v1069 = vadd.f32 %v1068, 1.0
    %v1070 = vrcp.pop %v1069
    %v1071 = vmul.f32 %v1069, %v1070
    %v1072 = vsub.f32 1.0, %v1071
    %v1073 = vmul.f32 %v1070, %v1072
    %v1074 = vadd.f32 %v1070, %v1073
    %vm1075 = vweird.f32 %v1069
    %vm1076 = vweird.f32 %v1070
    %vm1077 = vmor %vm1075, %vm1076
    %v1078 = vsel %vm1077, %v1070, %v1074
    %v1079 = vand.u32 2147483647, %v1069
    %vm1080 = vcmp.eq.f32.partialorder %v1079, 8.507059e+37
    %v1081 = vand.u32 %v1069, 2147483648
    %v1082 = vor.u32 1.1754944e-38, %v1081
    %v1083 = vsel %vm1080, %v1082, %v1078
    %v1084 = vmul.f32 1.0, %v1083
    %v1085 = vtanh.pop %v1065
    %v1086 = vmul.f32 %v1084, %v964
    %1088 = vrot.lane.b32.xlu0 %v1085, 64
    %v1089 = vpop.permute.xlu0 %1088
    %v1091 = vmul.f32 %v1084, %v1089
    %1093 = vrot.lane.b32.xlu0 %v1091, 32
    %v1094 = vpop.permute.xlu0 %1093
    %v1096 = vadd.f32 %v1086, %v1094
    %v1097 = vtanh.pop %v1096
    %1099 = vrot.lane.b32.xlu0 %v1097, 64
    %v1100 = vpop.permute.xlu0 %1099
    %v1102 = vmul.f32 %v1084, %v1100
    %1104 = vst [vmem:[#allocation1] ss:$4 sm:$0xff] %v1037
    %v1105 = vld.sshfl [vmem:[#allocation1] sm:$0xff pattern:$0x73625140]
    %1106 = vrot.lane.b32.xlu0 %v1105, 32
    %v1107 = vpop.permute.xlu0 %1106
    %v1108 = vsel %vm124, %v1107, 0
    %1110 = vmatpush.msra.mxu0 0.0
    %1111 = vmatpush.msra.mxu0 0.0
    %1112 = vmatpush.msra.mxu0 0.0
    %1113 = vmatpush.msra.mxu0 0.0
    %1114 = vmatpush.msra.mxu0 0.0
    %1115 = vmatpush.msra.mxu0 0.0
    %1116 = vmatpush.msra.mxu0 0.0
    %1117 = vmatpush.msra.mxu0 0.0
    %1118 = vmatpush.msra.mxu0 0.0
    %1119 = vmatpush.msra.mxu0 0.0
    %1120 = vmatpush.msra.mxu0 0.0
    %1121 = vmatpush.msra.mxu0 0.0
    %1122 = vmatpush.msra.mxu0 %v123
    %1123 = vmatpush.msra.mxu0 %v122
    %1124 = vmatpush.msra.mxu0 %v121
    %1125 = vmatpush.msra.mxu0 %v120
    %1126 = vmatmul.f32.gmra.mxu0 %v1108
    %v1127 = vpop.f32.mrf.mxu0
    %v1128 = vadd.f32 0.0, %v1127
    %1129 = vdwg.mxu0
    %v1130 = vrot.slane %v91, 2
    %v1132 = vadd.f32 %v1130, %v1128
    %v1133 = vxor.u32 %v1132, 2147483648
    %v1134 = vmul.f32 %v1133, 1.442695
    %v1135 = vpow.pop %v1134
    %v1136 = vadd.f32 %v1135, 1.0
    %v1137 = vrcp.pop %v1136
    %v1138 = vmul.f32 %v1136, %v1137
    %v1139 = vsub.f32 1.0, %v1138
    %v1140 = vmul.f32 %v1137, %v1139
    %v1141 = vadd.f32 %v1137, %v1140
    %vm1142 = vweird.f32 %v1136
    %vm1143 = vweird.f32 %v1137
    %vm1144 = vmor %vm1142, %vm1143
    %v1145 = vsel %vm1144, %v1137, %v1141
    %v1146 = vand.u32 2147483647, %v1136
    %vm1147 = vcmp.eq.f32.partialorder %v1146, 8.507059e+37
    %v1148 = vand.u32 %v1136, 2147483648
    %v1149 = vor.u32 1.1754944e-38, %v1148
    %v1150 = vsel %vm1147, %v1149, %v1145
    %v1151 = vmul.f32 1.0, %v1150
    %v1152 = vtanh.pop %v1132
    %v1153 = vmul.f32 %v1151, %v1031
    %1155 = vrot.lane.b32.xlu0 %v1152, 64
    %v1156 = vpop.permute.xlu0 %1155
    %v1158 = vmul.f32 %v1151, %v1156
    %1160 = vrot.lane.b32.xlu0 %v1158, 32
    %v1161 = vpop.permute.xlu0 %1160
    %v1163 = vadd.f32 %v1153, %v1161
    %v1164 = vtanh.pop %v1163
    %1166 = vrot.lane.b32.xlu0 %v1164, 64
    %v1167 = vpop.permute.xlu0 %1166
    %v1169 = vmul.f32 %v1151, %v1167
    %s1170 = scalar_lea.vmem [#allocation1], 1
    %1171 = vst [vmem:[%s1170] ss:$4 sm:$0xff] %v310
    %v1172 = vld.sshfl [vmem:[#allocation1] sm:$0xff pattern:$0x73625140]
    %s1174 = scalar_lea.vmem [#allocation1], 2
    %1175 = vst [vmem:[%s1174] ss:$4 sm:$0xff] %v442
    %v1176 = vld.sshfl [vmem:[#allocation1] sm:$0xff pattern:$0x73625140]
    %s1178 = scalar_lea.vmem [#allocation1], 3
    %1179 = vst [vmem:[%s1178] ss:$4 sm:$0xff] %v574
    %v1180 = vld.sshfl [vmem:[#allocation1] sm:$0xff pattern:$0x73625140]
    %s1182 = scalar_lea.vmem [#allocation1], 1
    %1183 = vst [vmem:[%s1182] ss:$4 sm:$0xff] %v838
    %v1184 = vld.sshfl [vmem:[#allocation1] sm:$0xff pattern:$0x73625140]
    %s1186 = scalar_lea.vmem [#allocation1], 2
    %1187 = vst [vmem:[%s1186] ss:$4 sm:$0xff] %v970
    %v1188 = vld.sshfl [vmem:[#allocation1] sm:$0xff pattern:$0x73625140]
    %s1191 = scalar_lea.vmem [#allocation1], 3
    %1192 = vst [vmem:[%s1191] ss:$4 sm:$0xff] %v1102
    %v1193 = vld.sshfl [vmem:[#allocation1] sm:$0xff pattern:$0x73625140]
    %v1195 = vsel %vm90, %v185, %v1172
    %vm1196 = vcmask 1043456
    %v1197 = vsel %vm1196, %v1195, %v1176
    %v1198 = vsel %vm98, %v1197, %v1180
    %v1199 = vsel %vm90, %v706, %v1184
    %v1200 = vsel %vm1196, %v1199, %v1188
    %v1201 = vsel %vm98, %v1200, %v1193
    %s1202 = scalar_lea.vmem [#allocation1], 1
    %1203 = vst [vmem:[%s1202] ss:$4 sm:$0xff] %v1037
    %v1204 = vld.sshfl [vmem:[#allocation1] sm:$0xff pattern:$0x73625140]
    %s1206 = scalar_lea.vmem [#allocation1], 2
    %1207 = vst [vmem:[%s1206] ss:$4 sm:$0xff] %v905
    %v1208 = vld.sshfl [vmem:[#allocation1] sm:$0xff pattern:$0x73625140]
    %s1210 = scalar_lea.vmem [#allocation1], 3
    %1211 = vst [vmem:[%s1210] ss:$4 sm:$0xff] %v773
    %v1212 = vld.sshfl [vmem:[#allocation1] sm:$0xff pattern:$0x73625140]
    %s1214 = scalar_lea.vmem [#allocation1], 1
    %1215 = vst [vmem:[%s1214] ss:$4 sm:$0xff] %v509
    %v1216 = vld.sshfl [vmem:[#allocation1] sm:$0xff pattern:$0x73625140]
    %s1218 = scalar_lea.vmem [#allocation1], 2
    %1219 = vst [vmem:[%s1218] ss:$4 sm:$0xff] %v377
    %v1220 = vld.sshfl [vmem:[#allocation1] sm:$0xff pattern:$0x73625140]
    %s1222 = scalar_lea.vmem [#allocation1], 3
    %1223 = vst [vmem:[%s1222] ss:$4 sm:$0xff] %v245
    %v1224 = vld.sshfl [vmem:[#allocation1] sm:$0xff pattern:$0x73625140]
    %v1226 = vsel %vm90, %v1169, %v1204
    %v1227 = vsel %vm1196, %v1226, %v1208
    %v1228 = vsel %vm98, %v1227, %v1212
    %v1229 = vsel %vm90, %v641, %v1216
    %v1230 = vsel %vm1196, %v1229, %v1220
    %v1231 = vsel %vm98, %v1230, %v1224
    %v1232 = vld [vmem:[%s4] sm:$0xff]
    %v1233 = vld [vmem:[%s4 + $0x8] sm:$0xff]
    %v1234 = vld [vmem:[%s4 + $0x10] sm:$0xff]
    %v1235 = vld [vmem:[%s4 + $0x18] sm:$0xff]
    %v1236 = vld [vmem:[%s4 + $0x20] sm:$0xff]
    %v1237 = vld [vmem:[%s4 + $0x28] sm:$0xff]
    %v1238 = vld [vmem:[%s4 + $0x30] sm:$0xff]
    %v1239 = vld [vmem:[%s4 + $0x38] sm:$0xff]
    %v1240 = vld [vmem:[%s4 + $0x40] sm:$0xff]
    %v1241 = vld [vmem:[%s4 + $0x48] sm:$0xff]
    %v1242 = vld [vmem:[%s4 + $0x50] sm:$0xff]
    %v1243 = vld [vmem:[%s4 + $0x58] sm:$0xff]
    %v1244 = vld [vmem:[%s4 + $0x60] sm:$0xff]
    %v1245 = vld [vmem:[%s4 + $0x68] sm:$0xff]
    %v1246 = vld [vmem:[%s4 + $0x70] sm:$0xff]
    %v1247 = vld [vmem:[%s4 + $0x78] sm:$0xff]
    %1250 = vrot.lane.b32.xlu0 %v1228, 32
    %v1251 = vpop.permute.xlu0 %1250
    %1252 = vrot.lane.b32.xlu0 %v1231, 32
    %v1253 = vpop.permute.xlu0 %1252
    %v1254 = vsel %vm124, %v1251, 0
    %v1256 = vsel %vm124, %v1253, 0
    %1258 = vmatpush.msra.mxu0 0.0
    %1259 = vmatpush.msra.mxu0 0.0
    %1260 = vmatpush.msra.mxu0 0.0
    %1261 = vmatpush.msra.mxu0 0.0
    %1262 = vmatpush.msra.mxu0 0.0
    %1263 = vmatpush.msra.mxu0 0.0
    %1264 = vmatpush.msra.mxu0 0.0
    %1265 = vmatpush.msra.mxu0 0.0
    %1266 = vmatpush.msra.mxu0 0.0
    %1267 = vmatpush.msra.mxu0 0.0
    %1268 = vmatpush.msra.mxu0 0.0
    %1269 = vmatpush.msra.mxu0 0.0
    %1270 = vmatpush.msra.mxu0 %v1246
    %1271 = vmatpush.msra.mxu0 %v1244
    %1272 = vmatpush.msra.mxu0 %v1242
    %1273 = vmatpush.msra.mxu0 %v1240
    %1274 = vmatmul.f32.gmra.mxu0 %v1254
    %v1275 = vpop.f32.mrf.mxu0
    %v1276 = vadd.f32 0.0, %v1275
    %1277 = vmatmul.f32.gmra.mxu0 %v1256
    %v1278 = vpop.f32.mrf.mxu0
    %v1279 = vadd.f32 0.0, %v1278
    %1280 = vdwg.mxu0
    %1281 = vmatpush.msra.mxu0 0.0
    %1282 = vmatpush.msra.mxu0 0.0
    %1283 = vmatpush.msra.mxu0 0.0
    %1284 = vmatpush.msra.mxu0 0.0
    %1285 = vmatpush.msra.mxu0 0.0
    %1286 = vmatpush.msra.mxu0 0.0
    %1287 = vmatpush.msra.mxu0 0.0
    %1288 = vmatpush.msra.mxu0 0.0
    %1289 = vmatpush.msra.mxu0 0.0
    %1290 = vmatpush.msra.mxu0 0.0
    %1291 = vmatpush.msra.mxu0 0.0
    %1292 = vmatpush.msra.mxu0 0.0
    %1293 = vmatpush.msra.mxu0 %v1247
    %1294 = vmatpush.msra.mxu0 %v1245
    %1295 = vmatpush.msra.mxu0 %v1243
    %1296 = vmatpush.msra.mxu0 %v1241
    %1297 = vmatmul.f32.gmra.mxu0 %v1254
    %v1298 = vpop.f32.mrf.mxu0
    %v1299 = vadd.f32 0.0, %v1298
    %1300 = vmatmul.f32.gmra.mxu0 %v1256
    %v1301 = vpop.f32.mrf.mxu0
    %v1302 = vadd.f32 0.0, %v1301
    %1303 = vdwg.mxu0
    %1306 = vrot.lane.b32.xlu0 %v1198, 32
    %v1307 = vpop.permute.xlu0 %1306
    %1308 = vrot.lane.b32.xlu0 %v1201, 32
    %v1309 = vpop.permute.xlu0 %1308
    %v1310 = vsel %vm124, %v1307, 0
    %v1312 = vsel %vm124, %v1309, 0
    %1314 = vmatpush.msra.mxu0 0.0
    %1315 = vmatpush.msra.mxu0 0.0
    %1316 = vmatpush.msra.mxu0 0.0
    %1317 = vmatpush.msra.mxu0 0.0
    %1318 = vmatpush.msra.mxu0 0.0
    %1319 = vmatpush.msra.mxu0 0.0
    %1320 = vmatpush.msra.mxu0 0.0
    %1321 = vmatpush.msra.mxu0 0.0
    %1322 = vmatpush.msra.mxu0 0.0
    %1323 = vmatpush.msra.mxu0 0.0
    %1324 = vmatpush.msra.mxu0 0.0
    %1325 = vmatpush.msra.mxu0 0.0
    %1326 = vmatpush.msra.mxu0 %v1238
    %1327 = vmatpush.msra.mxu0 %v1236
    %1328 = vmatpush.msra.mxu0 %v1234
    %1329 = vmatpush.msra.mxu0 %v1232
    %1330 = vmatmul.f32.gmra.mxu0 %v1310
    %v1331 = vpop.f32.mrf.mxu0
    %v1332 = vadd.f32 %v1276, %v1331
    %1333 = vmatmul.f32.gmra.mxu0 %v1312
    %v1334 = vpop.f32.mrf.mxu0
    %v1335 = vadd.f32 %v1279, %v1334
    %1336 = vdwg.mxu0
    %1337 = vmatpush.msra.mxu0 0.0
    %1338 = vmatpush.msra.mxu0 0.0
    %1339 = vmatpush.msra.mxu0 0.0
    %1340 = vmatpush.msra.mxu0 0.0
    %1341 = vmatpush.msra.mxu0 0.0
    %1342 = vmatpush.msra.mxu0 0.0
    %1343 = vmatpush.msra.mxu0 0.0
    %1344 = vmatpush.msra.mxu0 0.0
    %1345 = vmatpush.msra.mxu0 0.0
    %1346 = vmatpush.msra.mxu0 0.0
    %1347 = vmatpush.msra.mxu0 0.0
    %1348 = vmatpush.msra.mxu0 0.0
    %1349 = vmatpush.msra.mxu0 %v1239
    %1350 = vmatpush.msra.mxu0 %v1237
    %1351 = vmatpush.msra.mxu0 %v1235
    %1352 = vmatpush.msra.mxu0 %v1233
    %1353 = vmatmul.f32.gmra.mxu0 %v1310
    %v1354 = vpop.f32.mrf.mxu0
    %v1355 = vadd.f32 %v1299, %v1354
    %1356 = vmatmul.f32.gmra.mxu0 %v1312
    %v1357 = vpop.f32.mrf.mxu0
    %v1358 = vadd.f32 %v1302, %v1357
    %1359 = vdwg.mxu0
    %v1364 = vrot.slane %v1355, 6
    %v1365 = vrot.slane %v1358, 6
    %v1366 = vsel %vm90, %v1332, %v1364
    %v1367 = vsel %vm92, %v1332, %v1364
    %v1368 = vrot.slane %v1367, 2
    %v1369 = vsel %vm95, %v1332, %v1364
    %v1370 = vrot.slane %v1369, 4
    %v1371 = vsel %vm98, %v1364, %v1332
    %v1372 = vrot.slane %v1371, 6
    %v1373 = vsel %vm90, %v1335, %v1365
    %v1374 = vsel %vm92, %v1335, %v1365
    %v1375 = vrot.slane %v1374, 2
    %v1376 = vsel %vm95, %v1335, %v1365
    %v1377 = vrot.slane %v1376, 4
    %v1378 = vsel %vm98, %v1365, %v1335
    %v1379 = vrot.slane %v1378, 6
    %v1388 = vld [vmem:[%s5] sm:$0xff]
    %v1389 = vld [vmem:[%s5 + $0x8] sm:$0xff]
    %v1390 = vld [vmem:[%s5 + $0x10] sm:$0xff]
    %v1391 = vld [vmem:[%s5 + $0x18] sm:$0xff]
    %1392 = vmatpush.msra.mxu0 0.0
    %1393 = vmatpush.msra.mxu0 0.0
    %1394 = vmatpush.msra.mxu0 0.0
    %1395 = vmatpush.msra.mxu0 0.0
    %1396 = vmatpush.msra.mxu0 0.0
    %1397 = vmatpush.msra.mxu0 0.0
    %1398 = vmatpush.msra.mxu0 0.0
    %1399 = vmatpush.msra.mxu0 0.0
    %1400 = vmatpush.msra.mxu0 0.0
    %1401 = vmatpush.msra.mxu0 0.0
    %1402 = vmatpush.msra.mxu0 0.0
    %1403 = vmatpush.msra.mxu0 0.0
    %1404 = vmatpush.msra.mxu0 %v1391
    %1405 = vmatpush.msra.mxu0 %v1390
    %1406 = vmatpush.msra.mxu0 %v1389
    %1407 = vmatpush.msra.mxu0 %v1388
    %1408 = vmatmul.f32.gmra.mxu0 %v126
    %v1409 = vpop.f32.mrf.mxu0
    %v1410 = vadd.f32 0.0, %v1409
    %1411 = vdwg.mxu0
    %v1412 = vadd.f32 %v1366, %v1410
    %v1413 = vxor.u32 %v1412, 2147483648
    %v1414 = vmul.f32 %v1413, 1.442695
    %v1415 = vpow.pop %v1414
    %v1416 = vadd.f32 %v1415, 1.0
    %v1417 = vrcp.pop %v1416
    %v1418 = vmul.f32 %v1416, %v1417
    %v1419 = vsub.f32 1.0, %v1418
    %v1420 = vmul.f32 %v1417, %v1419
    %v1421 = vadd.f32 %v1417, %v1420
    %vm1422 = vweird.f32 %v1416
    %vm1423 = vweird.f32 %v1417
    %vm1424 = vmor %vm1422, %vm1423
    %v1425 = vsel %vm1424, %v1417, %v1421
    %v1426 = vand.u32 2147483647, %v1416
    %vm1427 = vcmp.eq.f32.partialorder %v1426, 8.507059e+37
    %v1428 = vand.u32 %v1416, 2147483648
    %v1429 = vor.u32 1.1754944e-38, %v1428
    %v1430 = vsel %vm1427, %v1429, %v1425
    %v1431 = vmul.f32 1.0, %v1430
    %v1432 = vtanh.pop %v1412
    %v1433 = vmul.f32 %v1431, 0.0
    %1435 = vrot.lane.b32.xlu0 %v1432, 64
    %v1436 = vpop.permute.xlu0 %1435
    %v1438 = vmul.f32 %v1431, %v1436
    %1440 = vrot.lane.b32.xlu0 %v1438, 32
    %v1441 = vpop.permute.xlu0 %1440
    %v1443 = vadd.f32 %v1433, %v1441
    %v1444 = vtanh.pop %v1443
    %1446 = vrot.lane.b32.xlu0 %v1444, 64
    %v1447 = vpop.permute.xlu0 %1446
    %v1449 = vmul.f32 %v1431, %v1447
    %1451 = vst [vmem:[#allocation1] ss:$4 sm:$0xff] %v1449
    %v1452 = vld.sshfl [vmem:[#allocation1] sm:$0xff pattern:$0x73625140]
    %1453 = vrot.lane.b32.xlu0 %v1452, 32
    %v1454 = vpop.permute.xlu0 %1453
    %v1455 = vsel %vm124, %v1454, 0
    %1457 = vmatpush.msra.mxu0 0.0
    %1458 = vmatpush.msra.mxu0 0.0
    %1459 = vmatpush.msra.mxu0 0.0
    %1460 = vmatpush.msra.mxu0 0.0
    %1461 = vmatpush.msra.mxu0 0.0
    %1462 = vmatpush.msra.mxu0 0.0
    %1463 = vmatpush.msra.mxu0 0.0
    %1464 = vmatpush.msra.mxu0 0.0
    %1465 = vmatpush.msra.mxu0 0.0
    %1466 = vmatpush.msra.mxu0 0.0
    %1467 = vmatpush.msra.mxu0 0.0
    %1468 = vmatpush.msra.mxu0 0.0
    %1469 = vmatpush.msra.mxu0 %v1391
    %1470 = vmatpush.msra.mxu0 %v1390
    %1471 = vmatpush.msra.mxu0 %v1389
    %1472 = vmatpush.msra.mxu0 %v1388
    %1473 = vmatmul.f32.gmra.mxu0 %v1455
    %v1474 = vpop.f32.mrf.mxu0
    %v1475 = vadd.f32 0.0, %v1474
    %1476 = vdwg.mxu0
    %v1477 = vadd.f32 %v1368, %v1475
    %v1478 = vxor.u32 %v1477, 2147483648
    %v1479 = vmul.f32 %v1478, 1.442695
    %v1480 = vpow.pop %v1479
    %v1481 = vadd.f32 %v1480, 1.0
    %v1482 = vrcp.pop %v1481
    %v1483 = vmul.f32 %v1481, %v1482
    %v1484 = vsub.f32 1.0, %v1483
    %v1485 = vmul.f32 %v1482, %v1484
    %v1486 = vadd.f32 %v1482, %v1485
    %vm1487 = vweird.f32 %v1481
    %vm1488 = vweird.f32 %v1482
    %vm1489 = vmor %vm1487, %vm1488
    %v1490 = vsel %vm1489, %v1482, %v1486
    %v1491 = vand.u32 2147483647, %v1481
    %vm1492 = vcmp.eq.f32.partialorder %v1491, 8.507059e+37
    %v1493 = vand.u32 %v1481, 2147483648
    %v1494 = vor.u32 1.1754944e-38, %v1493
    %v1495 = vsel %vm1492, %v1494, %v1490
    %v1496 = vmul.f32 1.0, %v1495
    %v1497 = vtanh.pop %v1477
    %v1498 = vmul.f32 %v1496, %v1443
    %1500 = vrot.lane.b32.xlu0 %v1497, 64
    %v1501 = vpop.permute.xlu0 %1500
    %v1503 = vmul.f32 %v1496, %v1501
    %1505 = vrot.lane.b32.xlu0 %v1503, 32
    %v1506 = vpop.permute.xlu0 %1505
    %v1508 = vadd.f32 %v1498, %v1506
    %v1509 = vtanh.pop %v1508
    %1511 = vrot.lane.b32.xlu0 %v1509, 64
    %v1512 = vpop.permute.xlu0 %1511
    %v1514 = vmul.f32 %v1496, %v1512
    %1516 = vst [vmem:[#allocation1] ss:$4 sm:$0xff] %v1514
    %v1517 = vld.sshfl [vmem:[#allocation1] sm:$0xff pattern:$0x73625140]
    %1518 = vrot.lane.b32.xlu0 %v1517, 32
    %v1519 = vpop.permute.xlu0 %1518
    %v1520 = vsel %vm124, %v1519, 0
    %1522 = vmatpush.msra.mxu0 0.0
    %1523 = vmatpush.msra.mxu0 0.0
    %1524 = vmatpush.msra.mxu0 0.0
    %1525 = vmatpush.msra.mxu0 0.0
    %1526 = vmatpush.msra.mxu0 0.0
    %1527 = vmatpush.msra.mxu0 0.0
    %1528 = vmatpush.msra.mxu0 0.0
    %1529 = vmatpush.msra.mxu0 0.0
    %1530 = vmatpush.msra.mxu0 0.0
    %1531 = vmatpush.msra.mxu0 0.0
    %1532 = vmatpush.msra.mxu0 0.0
    %1533 = vmatpush.msra.mxu0 0.0
    %1534 = vmatpush.msra.mxu0 %v1391
    %1535 = vmatpush.msra.mxu0 %v1390
    %1536 = vmatpush.msra.mxu0 %v1389
    %1537 = vmatpush.msra.mxu0 %v1388
    %1538 = vmatmul.f32.gmra.mxu0 %v1520
    %v1539 = vpop.f32.mrf.mxu0
    %v1540 = vadd.f32 0.0, %v1539
    %1541 = vdwg.mxu0
    %v1542 = vadd.f32 %v1370, %v1540
    %v1543 = vxor.u32 %v1542, 2147483648
    %v1544 = vmul.f32 %v1543, 1.442695
    %v1545 = vpow.pop %v1544
    %v1546 = vadd.f32 %v1545, 1.0
    %v1547 = vrcp.pop %v1546
    %v1548 = vmul.f32 %v1546, %v1547
    %v1549 = vsub.f32 1.0, %v1548
    %v1550 = vmul.f32 %v1547, %v1549
    %v1551 = vadd.f32 %v1547, %v1550
    %vm1552 = vweird.f32 %v1546
    %vm1553 = vweird.f32 %v1547
    %vm1554 = vmor %vm1552, %vm1553
    %v1555 = vsel %vm1554, %v1547, %v1551
    %v1556 = vand.u32 2147483647, %v1546
    %vm1557 = vcmp.eq.f32.partialorder %v1556, 8.507059e+37
    %v1558 = vand.u32 %v1546, 2147483648
    %v1559 = vor.u32 1.1754944e-38, %v1558
    %v1560 = vsel %vm1557, %v1559, %v1555
    %v1561 = vmul.f32 1.0, %v1560
    %v1562 = vtanh.pop %v1542
    %v1563 = vmul.f32 %v1561, %v1508
    %1565 = vrot.lane.b32.xlu0 %v1562, 64
    %v1566 = vpop.permute.xlu0 %1565
    %v1568 = vmul.f32 %v1561, %v1566
    %1570 = vrot.lane.b32.xlu0 %v1568, 32
    %v1571 = vpop.permute.xlu0 %1570
    %v1573 = vadd.f32 %v1563, %v1571
    %v1574 = vtanh.pop %v1573
    %1576 = vrot.lane.b32.xlu0 %v1574, 64
    %v1577 = vpop.permute.xlu0 %1576
    %v1579 = vmul.f32 %v1561, %v1577
    %1581 = vst [vmem:[#allocation1] ss:$4 sm:$0xff] %v1579
    %v1582 = vld.sshfl [vmem:[#allocation1] sm:$0xff pattern:$0x73625140]
    %1583 = vrot.lane.b32.xlu0 %v1582, 32
    %v1584 = vpop.permute.xlu0 %1583
    %v1585 = vsel %vm124, %v1584, 0
    %1587 = vmatpush.msra.mxu0 0.0
    %1588 = vmatpush.msra.mxu0 0.0
    %1589 = vmatpush.msra.mxu0 0.0
    %1590 = vmatpush.msra.mxu0 0.0
    %1591 = vmatpush.msra.mxu0 0.0
    %1592 = vmatpush.msra.mxu0 0.0
    %1593 = vmatpush.msra.mxu0 0.0
    %1594 = vmatpush.msra.mxu0 0.0
    %1595 = vmatpush.msra.mxu0 0.0
    %1596 = vmatpush.msra.mxu0 0.0
    %1597 = vmatpush.msra.mxu0 0.0
    %1598 = vmatpush.msra.mxu0 0.0
    %1599 = vmatpush.msra.mxu0 %v1391
    %1600 = vmatpush.msra.mxu0 %v1390
    %1601 = vmatpush.msra.mxu0 %v1389
    %1602 = vmatpush.msra.mxu0 %v1388
    %1603 = vmatmul.f32.gmra.mxu0 %v1585
    %v1604 = vpop.f32.mrf.mxu0
    %v1605 = vadd.f32 0.0, %v1604
    %1606 = vdwg.mxu0
    %v1607 = vadd.f32 %v1372, %v1605
    %v1608 = vxor.u32 %v1607, 2147483648
    %v1609 = vmul.f32 %v1608, 1.442695
    %v1610 = vpow.pop %v1609
    %v1611 = vadd.f32 %v1610, 1.0
    %v1612 = vrcp.pop %v1611
    %v1613 = vmul.f32 %v1611, %v1612
    %v1614 = vsub.f32 1.0, %v1613
    %v1615 = vmul.f32 %v1612, %v1614
    %v1616 = vadd.f32 %v1612, %v1615
    %vm1617 = vweird.f32 %v1611
    %vm1618 = vweird.f32 %v1612
    %vm1619 = vmor %vm1617, %vm1618
    %v1620 = vsel %vm1619, %v1612, %v1616
    %v1621 = vand.u32 2147483647, %v1611
    %vm1622 = vcmp.eq.f32.partialorder %v1621, 8.507059e+37
    %v1623 = vand.u32 %v1611, 2147483648
    %v1624 = vor.u32 1.1754944e-38, %v1623
    %v1625 = vsel %vm1622, %v1624, %v1620
    %v1626 = vmul.f32 1.0, %v1625
    %v1627 = vtanh.pop %v1607
    %v1628 = vmul.f32 %v1626, %v1573
    %1630 = vrot.lane.b32.xlu0 %v1627, 64
    %v1631 = vpop.permute.xlu0 %1630
    %v1633 = vmul.f32 %v1626, %v1631
    %1635 = vrot.lane.b32.xlu0 %v1633, 32
    %v1636 = vpop.permute.xlu0 %1635
    %v1638 = vadd.f32 %v1628, %v1636
    %v1639 = vtanh.pop %v1638
    %1641 = vrot.lane.b32.xlu0 %v1639, 64
    %v1642 = vpop.permute.xlu0 %1641
    %v1644 = vmul.f32 %v1626, %v1642
    %1646 = vst [vmem:[#allocation1] ss:$4 sm:$0xff] %v1644
    %v1647 = vld.sshfl [vmem:[#allocation1] sm:$0xff pattern:$0x73625140]
    %1648 = vrot.lane.b32.xlu0 %v1647, 32
    %v1649 = vpop.permute.xlu0 %1648
    %v1650 = vsel %vm124, %v1649, 0
    %1652 = vmatpush.msra.mxu0 0.0
    %1653 = vmatpush.msra.mxu0 0.0
    %1654 = vmatpush.msra.mxu0 0.0
    %1655 = vmatpush.msra.mxu0 0.0
    %1656 = vmatpush.msra.mxu0 0.0
    %1657 = vmatpush.msra.mxu0 0.0
    %1658 = vmatpush.msra.mxu0 0.0
    %1659 = vmatpush.msra.mxu0 0.0
    %1660 = vmatpush.msra.mxu0 0.0
    %1661 = vmatpush.msra.mxu0 0.0
    %1662 = vmatpush.msra.mxu0 0.0
    %1663 = vmatpush.msra.mxu0 0.0
    %1664 = vmatpush.msra.mxu0 %v1391
    %1665 = vmatpush.msra.mxu0 %v1390
    %1666 = vmatpush.msra.mxu0 %v1389
    %1667 = vmatpush.msra.mxu0 %v1388
    %1668 = vmatmul.f32.gmra.mxu0 %v1650
    %v1669 = vpop.f32.mrf.mxu0
    %v1670 = vadd.f32 0.0, %v1669
    %1671 = vdwg.mxu0
    %v1672 = vadd.f32 %v1373, %v1670
    %v1673 = vxor.u32 %v1672, 2147483648
    %v1674 = vmul.f32 %v1673, 1.442695
    %v1675 = vpow.pop %v1674
    %v1676 = vadd.f32 %v1675, 1.0
    %v1677 = vrcp.pop %v1676
    %v1678 = vmul.f32 %v1676, %v1677
    %v1679 = vsub.f32 1.0, %v1678
    %v1680 = vmul.f32 %v1677, %v1679
    %v1681 = vadd.f32 %v1677, %v1680
    %vm1682 = vweird.f32 %v1676
    %vm1683 = vweird.f32 %v1677
    %vm1684 = vmor %vm1682, %vm1683
    %v1685 = vsel %vm1684, %v1677, %v1681
    %v1686 = vand.u32 2147483647, %v1676
    %vm1687 = vcmp.eq.f32.partialorder %v1686, 8.507059e+37
    %v1688 = vand.u32 %v1676, 2147483648
    %v1689 = vor.u32 1.1754944e-38, %v1688
    %v1690 = vsel %vm1687, %v1689, %v1685
    %v1691 = vmul.f32 1.0, %v1690
    %v1692 = vtanh.pop %v1672
    %v1693 = vmul.f32 %v1691, %v1638
    %1695 = vrot.lane.b32.xlu0 %v1692, 64
    %v1696 = vpop.permute.xlu0 %1695
    %v1698 = vmul.f32 %v1691, %v1696
    %1700 = vrot.lane.b32.xlu0 %v1698, 32
    %v1701 = vpop.permute.xlu0 %1700
    %v1703 = vadd.f32 %v1693, %v1701
    %v1704 = vtanh.pop %v1703
    %1706 = vrot.lane.b32.xlu0 %v1704, 64
    %v1707 = vpop.permute.xlu0 %1706
    %v1709 = vmul.f32 %v1691, %v1707
    %1711 = vst [vmem:[#allocation1] ss:$4 sm:$0xff] %v1709
    %v1712 = vld.sshfl [vmem:[#allocation1] sm:$0xff pattern:$0x73625140]
    %1713 = vrot.lane.b32.xlu0 %v1712, 32
    %v1714 = vpop.permute.xlu0 %1713
    %v1715 = vsel %vm124, %v1714, 0
    %1717 = vmatpush.msra.mxu0 0.0
    %1718 = vmatpush.msra.mxu0 0.0
    %1719 = vmatpush.msra.mxu0 0.0
    %1720 = vmatpush.msra.mxu0 0.0
    %1721 = vmatpush.msra.mxu0 0.0
    %1722 = vmatpush.msra.mxu0 0.0
    %1723 = vmatpush.msra.mxu0 0.0
    %1724 = vmatpush.msra.mxu0 0.0
    %1725 = vmatpush.msra.mxu0 0.0
    %1726 = vmatpush.msra.mxu0 0.0
    %1727 = vmatpush.msra.mxu0 0.0
    %1728 = vmatpush.msra.mxu0 0.0
    %1729 = vmatpush.msra.mxu0 %v1391
    %1730 = vmatpush.msra.mxu0 %v1390
    %1731 = vmatpush.msra.mxu0 %v1389
    %1732 = vmatpush.msra.mxu0 %v1388
    %1733 = vmatmul.f32.gmra.mxu0 %v1715
    %v1734 = vpop.f32.mrf.mxu0
    %v1735 = vadd.f32 0.0, %v1734
    %1736 = vdwg.mxu0
    %v1737 = vadd.f32 %v1375, %v1735
    %v1738 = vxor.u32 %v1737, 2147483648
    %v1739 = vmul.f32 %v1738, 1.442695
    %v1740 = vpow.pop %v1739
    %v1741 = vadd.f32 %v1740, 1.0
    %v1742 = vrcp.pop %v1741
    %v1743 = vmul.f32 %v1741, %v1742
    %v1744 = vsub.f32 1.0, %v1743
    %v1745 = vmul.f32 %v1742, %v1744
    %v1746 = vadd.f32 %v1742, %v1745
    %vm1747 = vweird.f32 %v1741
    %vm1748 = vweird.f32 %v1742
    %vm1749 = vmor %vm1747, %vm1748
    %v1750 = vsel %vm1749, %v1742, %v1746
    %v1751 = vand.u32 2147483647, %v1741
    %vm1752 = vcmp.eq.f32.partialorder %v1751, 8.507059e+37
    %v1753 = vand.u32 %v1741, 2147483648
    %v1754 = vor.u32 1.1754944e-38, %v1753
    %v1755 = vsel %vm1752, %v1754, %v1750
    %v1756 = vmul.f32 1.0, %v1755
    %v1757 = vtanh.pop %v1737
    %v1758 = vmul.f32 %v1756, %v1703
    %1760 = vrot.lane.b32.xlu0 %v1757, 64
    %v1761 = vpop.permute.xlu0 %1760
    %v1763 = vmul.f32 %v1756, %v1761
    %1765 = vrot.lane.b32.xlu0 %v1763, 32
    %v1766 = vpop.permute.xlu0 %1765
    %v1768 = vadd.f32 %v1758, %v1766
    %v1769 = vtanh.pop %v1768
    %1771 = vrot.lane.b32.xlu0 %v1769, 64
    %v1772 = vpop.permute.xlu0 %1771
    %v1774 = vmul.f32 %v1756, %v1772
    %1776 = vst [vmem:[#allocation1] ss:$4 sm:$0xff] %v1774
    %v1777 = vld.sshfl [vmem:[#allocation1] sm:$0xff pattern:$0x73625140]
    %1778 = vrot.lane.b32.xlu0 %v1777, 32
    %v1779 = vpop.permute.xlu0 %1778
    %v1780 = vsel %vm124, %v1779, 0
    %1782 = vmatpush.msra.mxu0 0.0
    %1783 = vmatpush.msra.mxu0 0.0
    %1784 = vmatpush.msra.mxu0 0.0
    %1785 = vmatpush.msra.mxu0 0.0
    %1786 = vmatpush.msra.mxu0 0.0
    %1787 = vmatpush.msra.mxu0 0.0
    %1788 = vmatpush.msra.mxu0 0.0
    %1789 = vmatpush.msra.mxu0 0.0
    %1790 = vmatpush.msra.mxu0 0.0
    %1791 = vmatpush.msra.mxu0 0.0
    %1792 = vmatpush.msra.mxu0 0.0
    %1793 = vmatpush.msra.mxu0 0.0
    %1794 = vmatpush.msra.mxu0 %v1391
    %1795 = vmatpush.msra.mxu0 %v1390
    %1796 = vmatpush.msra.mxu0 %v1389
    %1797 = vmatpush.msra.mxu0 %v1388
    %1798 = vmatmul.f32.gmra.mxu0 %v1780
    %v1799 = vpop.f32.mrf.mxu0
    %v1800 = vadd.f32 0.0, %v1799
    %1801 = vdwg.mxu0
    %v1802 = vadd.f32 %v1377, %v1800
    %v1803 = vxor.u32 %v1802, 2147483648
    %v1804 = vmul.f32 %v1803, 1.442695
    %v1805 = vpow.pop %v1804
    %v1806 = vadd.f32 %v1805, 1.0
    %v1807 = vrcp.pop %v1806
    %v1808 = vmul.f32 %v1806, %v1807
    %v1809 = vsub.f32 1.0, %v1808
    %v1810 = vmul.f32 %v1807, %v1809
    %v1811 = vadd.f32 %v1807, %v1810
    %vm1812 = vweird.f32 %v1806
    %vm1813 = vweird.f32 %v1807
    %vm1814 = vmor %vm1812, %vm1813
    %v1815 = vsel %vm1814, %v1807, %v1811
    %v1816 = vand.u32 2147483647, %v1806
    %vm1817 = vcmp.eq.f32.partialorder %v1816, 8.507059e+37
    %v1818 = vand.u32 %v1806, 2147483648
    %v1819 = vor.u32 1.1754944e-38, %v1818
    %v1820 = vsel %vm1817, %v1819, %v1815
    %v1821 = vmul.f32 1.0, %v1820
    %v1822 = vtanh.pop %v1802
    %v1823 = vmul.f32 %v1821, %v1768
    %1825 = vrot.lane.b32.xlu0 %v1822, 64
    %v1826 = vpop.permute.xlu0 %1825
    %v1828 = vmul.f32 %v1821, %v1826
    %1830 = vrot.lane.b32.xlu0 %v1828, 32
    %v1831 = vpop.permute.xlu0 %1830
    %v1833 = vadd.f32 %v1823, %v1831
    %v1834 = vtanh.pop %v1833
    %1836 = vrot.lane.b32.xlu0 %v1834, 64
    %v1837 = vpop.permute.xlu0 %1836
    %v1839 = vmul.f32 %v1821, %v1837
    %1841 = vst [vmem:[#allocation1] ss:$4 sm:$0xff] %v1839
    %v1842 = vld.sshfl [vmem:[#allocation1] sm:$0xff pattern:$0x73625140]
    %1843 = vrot.lane.b32.xlu0 %v1842, 32
    %v1844 = vpop.permute.xlu0 %1843
    %v1845 = vsel %vm124, %v1844, 0
    %1847 = vmatpush.msra.mxu0 0.0
    %1848 = vmatpush.msra.mxu0 0.0
    %1849 = vmatpush.msra.mxu0 0.0
    %1850 = vmatpush.msra.mxu0 0.0
    %1851 = vmatpush.msra.mxu0 0.0
    %1852 = vmatpush.msra.mxu0 0.0
    %1853 = vmatpush.msra.mxu0 0.0
    %1854 = vmatpush.msra.mxu0 0.0
    %1855 = vmatpush.msra.mxu0 0.0
    %1856 = vmatpush.msra.mxu0 0.0
    %1857 = vmatpush.msra.mxu0 0.0
    %1858 = vmatpush.msra.mxu0 0.0
    %1859 = vmatpush.msra.mxu0 %v1391
    %1860 = vmatpush.msra.mxu0 %v1390
    %1861 = vmatpush.msra.mxu0 %v1389
    %1862 = vmatpush.msra.mxu0 %v1388
    %1863 = vmatmul.f32.gmra.mxu0 %v1845
    %v1864 = vpop.f32.mrf.mxu0
    %v1865 = vadd.f32 0.0, %v1864
    %1866 = vdwg.mxu0
    %v1867 = vadd.f32 %v1379, %v1865
    %v1868 = vxor.u32 %v1867, 2147483648
    %v1869 = vmul.f32 %v1868, 1.442695
    %v1870 = vpow.pop %v1869
    %v1871 = vadd.f32 %v1870, 1.0
    %v1872 = vrcp.pop %v1871
    %v1873 = vmul.f32 %v1871, %v1872
    %v1874 = vsub.f32 1.0, %v1873
    %v1875 = vmul.f32 %v1872, %v1874
    %v1876 = vadd.f32 %v1872, %v1875
    %vm1877 = vweird.f32 %v1871
    %vm1878 = vweird.f32 %v1872
    %vm1879 = vmor %vm1877, %vm1878
    %v1880 = vsel %vm1879, %v1872, %v1876
    %v1881 = vand.u32 2147483647, %v1871
    %vm1882 = vcmp.eq.f32.partialorder %v1881, 8.507059e+37
    %v1883 = vand.u32 %v1871, 2147483648
    %v1884 = vor.u32 1.1754944e-38, %v1883
    %v1885 = vsel %vm1882, %v1884, %v1880
    %v1886 = vmul.f32 1.0, %v1885
    %v1887 = vtanh.pop %v1867
    %v1888 = vmul.f32 %v1886, %v1833
    %1890 = vrot.lane.b32.xlu0 %v1887, 64
    %v1891 = vpop.permute.xlu0 %1890
    %v1893 = vmul.f32 %v1886, %v1891
    %1895 = vrot.lane.b32.xlu0 %v1893, 32
    %v1896 = vpop.permute.xlu0 %1895
    %v1898 = vadd.f32 %v1888, %v1896
    %v1899 = vtanh.pop %v1898
    %1901 = vrot.lane.b32.xlu0 %v1899, 64
    %v1902 = vpop.permute.xlu0 %1901
    %v1904 = vmul.f32 %v1886, %v1902
    %v1905 = vrot.slane %v1379, 2
    %v1907 = vxor.u32 %v1905, 2147483648
    %v1908 = vmul.f32 %v1907, 1.442695
    %v1909 = vpow.pop %v1908
    %v1910 = vadd.f32 %v1909, 1.0
    %v1911 = vrcp.pop %v1910
    %v1912 = vmul.f32 %v1910, %v1911
    %v1913 = vsub.f32 1.0, %v1912
    %v1914 = vmul.f32 %v1911, %v1913
    %v1915 = vadd.f32 %v1911, %v1914
    %vm1916 = vweird.f32 %v1910
    %vm1917 = vweird.f32 %v1911
    %vm1918 = vmor %vm1916, %vm1917
    %v1919 = vsel %vm1918, %v1911, %v1915
    %v1920 = vand.u32 2147483647, %v1910
    %vm1921 = vcmp.eq.f32.partialorder %v1920, 8.507059e+37
    %v1922 = vand.u32 %v1910, 2147483648
    %v1923 = vor.u32 1.1754944e-38, %v1922
    %v1924 = vsel %vm1921, %v1923, %v1919
    %v1925 = vmul.f32 1.0, %v1924
    %1926 = vrot.lane.b32.xlu0 %v1379, 96
    %v1927 = vpop.permute.xlu0 %1926
    %v1928 = vrot.slane %v1927, 2
    %v1930 = vxor.u32 %v1928, 2147483648
    %v1931 = vmul.f32 %v1930, 1.442695
    %v1932 = vpow.pop %v1931
    %v1933 = vadd.f32 %v1932, 1.0
    %v1934 = vrcp.pop %v1933
    %v1935 = vmul.f32 %v1933, %v1934
    %v1936 = vsub.f32 1.0, %v1935
    %v1937 = vmul.f32 %v1934, %v1936
    %v1938 = vadd.f32 %v1934, %v1937
    %vm1939 = vweird.f32 %v1933
    %vm1940 = vweird.f32 %v1934
    %vm1941 = vmor %vm1939, %vm1940
    %v1942 = vsel %vm1941, %v1934, %v1938
    %v1943 = vand.u32 2147483647, %v1933
    %vm1944 = vcmp.eq.f32.partialorder %v1943, 8.507059e+37
    %v1945 = vand.u32 %v1933, 2147483648
    %v1946 = vor.u32 1.1754944e-38, %v1945
    %v1947 = vsel %vm1944, %v1946, %v1942
    %v1948 = vmul.f32 1.0, %v1947
    %1949 = vrot.lane.b32.xlu0 %v1379, 64
    %v1950 = vpop.permute.xlu0 %1949
    %v1951 = vrot.slane %v1950, 2
    %v1953 = vtanh.pop %v1951
    %1954 = vrot.lane.b32.xlu0 %v1379, 32
    %v1955 = vpop.permute.xlu0 %1954
    %v1956 = vrot.slane %v1955, 2
    %v1958 = vxor.u32 %v1956, 2147483648
    %v1959 = vmul.f32 %v1958, 1.442695
    %v1960 = vpow.pop %v1959
    %v1961 = vadd.f32 %v1960, 1.0
    %v1962 = vrcp.pop %v1961
    %v1963 = vmul.f32 %v1961, %v1962
    %v1964 = vsub.f32 1.0, %v1963
    %v1965 = vmul.f32 %v1962, %v1964
    %v1966 = vadd.f32 %v1962, %v1965
    %vm1967 = vweird.f32 %v1961
    %vm1968 = vweird.f32 %v1962
    %vm1969 = vmor %vm1967, %vm1968
    %v1970 = vsel %vm1969, %v1962, %v1966
    %v1971 = vand.u32 2147483647, %v1961
    %vm1972 = vcmp.eq.f32.partialorder %v1971, 8.507059e+37
    %v1973 = vand.u32 %v1961, 2147483648
    %v1974 = vor.u32 1.1754944e-38, %v1973
    %v1975 = vsel %vm1972, %v1974, %v1970
    %v1976 = vmul.f32 1.0, %v1975
    %v1977 = vmul.f32 %v1948, 0.0
    %v1978 = vmul.f32 %v1925, %v1953
    %v1979 = vadd.f32 %v1977, %v1978
    %v1980 = vtanh.pop %v1979
    %v1981 = vmul.f32 %v1976, %v1980
    %v1982 = vld [vmem:[%s6] sm:$0xff]
    %v1983 = vld [vmem:[%s6 + $0x8] sm:$0xff]
    %v1984 = vld [vmem:[%s6 + $0x10] sm:$0xff]
    %v1985 = vld [vmem:[%s6 + $0x18] sm:$0xff]
    %v1986 = vld [vmem:[%s6 + $0x20] sm:$0xff]
    %v1987 = vld [vmem:[%s6 + $0x28] sm:$0xff]
    %v1988 = vld [vmem:[%s6 + $0x30] sm:$0xff]
    %v1989 = vld [vmem:[%s6 + $0x38] sm:$0xff]
    %v1991 = vsel %vm124, %v1981, 0
    %1993 = vmatpush.msra.mxu0 0.0
    %1994 = vmatpush.msra.mxu0 0.0
    %1995 = vmatpush.msra.mxu0 0.0
    %1996 = vmatpush.msra.mxu0 0.0
    %1997 = vmatpush.msra.mxu0 0.0
    %1998 = vmatpush.msra.mxu0 0.0
    %1999 = vmatpush.msra.mxu0 0.0
    %2000 = vmatpush.msra.mxu0 0.0
    %2001 = vmatpush.msra.mxu0 0.0
    %2002 = vmatpush.msra.mxu0 0.0
    %2003 = vmatpush.msra.mxu0 0.0
    %2004 = vmatpush.msra.mxu0 0.0
    %2005 = vmatpush.msra.mxu0 %v1989
    %2006 = vmatpush.msra.mxu0 %v1988
    %2007 = vmatpush.msra.mxu0 %v1987
    %2008 = vmatpush.msra.mxu0 %v1986
    %2009 = vmatmul.f32.gmra.mxu0 %v1991
    %v2010 = vpop.f32.mrf.mxu0
    %v2011 = vadd.f32 0.0, %v2010
    %2012 = vdwg.mxu0
    %2014 = vst [vmem:[#allocation1] ss:$4 sm:$0xff] %v1904
    %v2015 = vld.sshfl [vmem:[#allocation1] sm:$0xff pattern:$0x73625140]
    %2016 = vrot.lane.b32.xlu0 %v2015, 32
    %v2017 = vpop.permute.xlu0 %2016
    %v2018 = vsel %vm124, %v2017, 0
    %2020 = vmatpush.msra.mxu0 0.0
    %2021 = vmatpush.msra.mxu0 0.0
    %2022 = vmatpush.msra.mxu0 0.0
    %2023 = vmatpush.msra.mxu0 0.0
    %2024 = vmatpush.msra.mxu0 0.0
    %2025 = vmatpush.msra.mxu0 0.0
    %2026 = vmatpush.msra.mxu0 0.0
    %2027 = vmatpush.msra.mxu0 0.0
    %2028 = vmatpush.msra.mxu0 0.0
    %2029 = vmatpush.msra.mxu0 0.0
    %2030 = vmatpush.msra.mxu0 0.0
    %2031 = vmatpush.msra.mxu0 0.0
    %2032 = vmatpush.msra.mxu0 %v1985
    %2033 = vmatpush.msra.mxu0 %v1984
    %2034 = vmatpush.msra.mxu0 %v1983
    %2035 = vmatpush.msra.mxu0 %v1982
    %2036 = vmatmul.f32.gmra.mxu0 %v2018
    %v2037 = vpop.f32.mrf.mxu0
    %v2038 = vadd.f32 %v2011, %v2037
    %2039 = vdwg.mxu0
    %vm2040 = vcmask 254976
    %2041 = vst.msk [vmem:[#allocation2] sm:$0x3] %vm2040, %v2038
    // Predicated region
    $region30: #{doc_forward.1} parent=1 // pred_check
      _
    $region31: #{doc_forward.1} parent=1 // pred_check_branch
      %2043 = sbr.rel (0) target = $region33
    $region32: #{doc_forward.1} parent=1 // pred_region
      %2045 = vsyncadd [#allocation3], 0
      %s2047 = sshll.u32 [#allocation2], 4
      %s2048 = int_to_ptr.vmem [resolvable:$true] %s2047
      %s2049 = sshll.u32 %s7, 4
      %s2050 = int_to_ptr.hbm [resolvable:$true] %s2049
      %2052 = dma.vmem_to_hbm [thread:$0]  %s2048, 32, %s2050, [#allocation3]
    $region33: #{doc_forward.1} parent=1 // pred_fallthru
      _
    // Predicated region
    $region34: #{doc_forward.1} parent=1 // pred_check
      _
    $region35: #{doc_forward.1} parent=1 // pred_check_branch
      %2054 = sbr.rel (0) target = $region37
    $region36: #{doc_forward.1} parent=1 // pred_region
      %2056 = dma.done [#allocation3], 32
    $region37: #{doc_forward.1} parent=1 // pred_fallthru
      _
    %2057 = vsyncpa [#allocation3], 1

</llo_original>
